<compile_context>
chip_gen: v6e
topology: v6e:2x2x1
jax: 0.10.0
libtpu: 0.0.40
codegen_flags: <defaults>
</compile_context>

<pallas_src>
import jax
import jax.numpy as jnp
from jax.experimental import pallas as pl
from jax.experimental.pallas import tpu as pltpu

# ---- small synthetic Llama-ish config (Part1 = embed_tokens + rotary + 14 layers) ----
VOCAB = 256
HIDDEN = 256
NUM_HEADS = 2
HEAD_DIM = HIDDEN // NUM_HEADS        # 128 (lane-aligned)
INTER = 512
NUM_LAYERS = 14
ROPE_THETA = 10000.0
RMS_EPS = 1e-6
NEG_INF = -1e30                       # finite; causal diag is always unmasked (no NaNs)


# ---------------------------------------------------------------------------
# Fused kernel: grid = (layer,).  The (B*S, H) hidden state is the resident output
# block (constant block index across the layer axis); per-layer weights are streamed
# (double-buffered) over that axis, so each weight tile is DMA'd exactly once.
# ---------------------------------------------------------------------------
def fused_layers_kernel(hidden_ref, cos_ref, ssin_ref,
                        ln1_ref, wqkv_ref, wo_ref, ln2_ref, wgu_ref, wd_ref,
                        out_ref):
    l = pl.program_id(0)
    bf = jnp.bfloat16

    BS, _ = out_ref.shape
    S = cos_ref.shape[0]
    B = BS // S

    @pl.when(l == 0)
    def _init():                       # load the hidden state into the resident block once
        out_ref[...] = hidden_ref[...]

    x = out_ref[...]                   # (B*S, H) f32, VMEM-resident across layers
    cos = cos_ref[...]                 # (S, HEAD_DIM) f32
    ssin = ssin_ref[...]               # (S, HEAD_DIM) f32, rotate_half sign folded in

    # ---- in-kernel causal additive mask (no HBM traffic) ----
    row = jax.lax.broadcasted_iota(jnp.int32, (S, S), 0)
    col = jax.lax.broadcasted_iota(jnp.int32, (S, S), 1)
    mask = jnp.where(col > row, jnp.float32(NEG_INF), jnp.float32(0.0))

    # ---- input RMSNorm (f32 on VPU/EUP) ----
    xn = x * jax.lax.rsqrt(jnp.mean(x * x, axis=-1, keepdims=True) + RMS_EPS) * ln1_ref[0]

    # ---- fused Q/K/V projection on all B*S rows: bf16 MXU operands, f32 accumulation ----
    qkv = jnp.dot(xn.astype(bf), wqkv_ref[0],
                  preferred_element_type=jnp.float32)                 # (B*S, 3H)

    attn_rows = []
    for b in range(B):                                                # static unroll (B small)
        r0 = b * S
        qkv_b = qkv[r0:r0 + S, :]                                     # (S, 3H)
        heads = []
        for h in range(NUM_HEADS):                                    # static unroll
            lo = h * HEAD_DIM
            qh = qkv_b[:, lo:lo + HEAD_DIM]
            kh = qkv_b[:, HIDDEN + lo:HIDDEN + lo + HEAD_DIM]
            vh = qkv_b[:, 2 * HIDDEN + lo:2 * HIDDEN + lo + HEAD_DIM]
            # RoPE: rotate_half = roll * (precomputed sign), sign folded into ssin table
            qh = qh * cos + pltpu.roll(qh, shift=HEAD_DIM // 2, axis=1) * ssin
            kh = kh * cos + pltpu.roll(kh, shift=HEAD_DIM // 2, axis=1) * ssin
            # scores = Qh @ Kh^T + mask   (1/sqrt(head_dim) already folded into W_q)
            scores = jax.lax.dot_general(qh.astype(bf), kh.astype(bf),
                                         (((1,), (1,)), ((), ())),
                                         preferred_element_type=jnp.float32) + mask
            m = jnp.max(scores, axis=-1, keepdims=True)
            p = jnp.exp(scores - m)
            p = p / jnp.sum(p, axis=-1, keepdims=True)
            heads.append(jnp.dot(p.astype(bf), vh.astype(bf),
                                 preferred_element_type=jnp.float32))
        attn_rows.append(jnp.concatenate(heads, axis=-1))             # (S, H), stays in vregs
    attn = jnp.concatenate(attn_rows, axis=0)                         # (B*S, H)

    h1 = x + jnp.dot(attn.astype(bf), wo_ref[0],
                     preferred_element_type=jnp.float32)              # residual

    # ---- post-attention RMSNorm ----
    xn2 = h1 * jax.lax.rsqrt(jnp.mean(h1 * h1, axis=-1, keepdims=True) + RMS_EPS) * ln2_ref[0]

    # ---- SwiGLU MLP with fused gate/up projection ----
    gu = jnp.dot(xn2.astype(bf), wgu_ref[0],
                 preferred_element_type=jnp.float32)                  # (B*S, 2*INTER)
    act = jax.nn.silu(gu[:, :INTER]) * gu[:, INTER:]
    down = jnp.dot(act.astype(bf), wd_ref[0],
                   preferred_element_type=jnp.float32)

    out_ref[...] = h1 + down                                          # residual, stays resident


def fused_decoder_stack(hidden, cos, ssin, kp):
    B, S, H = hidden.shape
    L = kp["wqkv"].shape[0]
    hidden_flat = hidden.reshape(B * S, H)                            # fold batch into rows

    const2 = lambda l: (0, 0)
    layer3 = lambda l: (l, 0, 0)

    out = pl.pallas_call(
        fused_layers_kernel,
        out_shape=jax.ShapeDtypeStruct((B * S, H), jnp.float32),
        grid_spec=pltpu.PrefetchScalarGridSpec(
            num_scalar_prefetch=0,
            grid=(L,),
            in_specs=[
                pl.BlockSpec((B * S, H), const2),               # hidden (DMA'd once)
                pl.BlockSpec((S, HEAD_DIM), const2),            # cos (batch-invariant)
                pl.BlockSpec((S, HEAD_DIM), const2),            # signed sin
                pl.BlockSpec((1, 1, H), layer3),                # ln1           (f32)
                pl.BlockSpec((1, H, 3 * H), layer3),            # wqkv          (bf16)
                pl.BlockSpec((1, H, H), layer3),                # wo            (bf16)
                pl.BlockSpec((1, 1, H), layer3),                # ln2           (f32)
                pl.BlockSpec((1, H, 2 * INTER), layer3),        # w_gate_up     (bf16)
                pl.BlockSpec((1, INTER, H), layer3),            # w_down        (bf16)
            ],
            out_specs=pl.BlockSpec((B * S, H), const2),         # resident accumulator
        ),
        compiler_params=pltpu.CompilerParams(
            dimension_semantics=("arbitrary",)),
    )(hidden_flat, cos, ssin,
      kp["ln1"], kp["wqkv"], kp["wo"], kp["ln2"], kp["wgu"], kp["wd"])
    return out.reshape(B, S, H)


# ---------------------------------------------------------------------------
# Glue: RoPE tables, mask, embedding gather (kept in plain XLA), Part1.forward.
# ---------------------------------------------------------------------------
def _rope_tables(S):
    pos = jnp.arange(S, dtype=jnp.float32)                            # position_ids row
    inv_freq = 1.0 / (ROPE_THETA ** (jnp.arange(0, HEAD_DIM, 2, dtype=jnp.float32) / HEAD_DIM))
    freqs = pos[:, None] * inv_freq[None, :]                          # (S, HEAD_DIM/2)
    cos = jnp.cos(jnp.concatenate([freqs, freqs], axis=-1))           # (S, HEAD_DIM)
    sinf = jnp.sin(freqs)
    sin = jnp.concatenate([sinf, sinf], axis=-1)
    signed_sin = jnp.concatenate([-sinf, sinf], axis=-1)              # rotate_half sign folded in
    return cos, sin, signed_sin


@jax.jit
def part1_forward(input_ids, embed, kparams):
    B, S = input_ids.shape
    # embedding gather kept in plain JAX (glue); all layer compute runs in the kernel.
    hidden = jnp.take(embed, input_ids, axis=0)                       # (B, S, H)
    cos, _, ssin = _rope_tables(S)
    # returned mask matches the PyTorch module (-inf above the diagonal)
    mask2d = jnp.triu(jnp.full((S, S), -jnp.inf, dtype=jnp.float32), k=1)
    attention_mask = jnp.broadcast_to(mask2d[None, None], (B, 1, S, S))
    hidden = fused_decoder_stack(hidden, cos, ssin, kparams)
    return hidden, attention_mask


# ---------------------------------------------------------------------------
# Parameters: stacked per-layer f32 weights + the bf16 fused layout fed to the kernel.
# ---------------------------------------------------------------------------
def init_params(key):
    ks = jax.random.split(key, 10)
    w = lambda k, shape: jax.random.normal(k, (NUM_LAYERS,) + shape, jnp.float32) * 0.02
    return dict(
        embed=jax.random.normal(ks[0], (VOCAB, HIDDEN), jnp.float32) * 0.02,
        ln1=1.0 + 0.05 * jax.random.normal(ks[1], (NUM_LAYERS, 1, HIDDEN), jnp.float32),
        ln2=1.0 + 0.05 * jax.random.normal(ks[2], (NUM_LAYERS, 1, HIDDEN), jnp.float32),
        wq=w(ks[3], (HIDDEN, HIDDEN)),
        wk=w(ks[4], (HIDDEN, HIDDEN)),
        wv=w(ks[5], (HIDDEN, HIDDEN)),
        wo=w(ks[6], (HIDDEN, HIDDEN)),
        wg=w(ks[7], (HIDDEN, INTER)),
        wu=w(ks[8], (HIDDEN, INTER)),
        wd=w(ks[9], (INTER, HIDDEN)),
    )


def prep_kernel_params(params):
    scale = 1.0 / (HEAD_DIM ** 0.5)                                   # folded into W_q
    bf = jnp.bfloat16
    return dict(
        ln1=params["ln1"],
        ln2=params["ln2"],
        wqkv=jnp.concatenate([params["wq"] * scale, params["wk"], params["wv"]],
                             axis=-1).astype(bf),                     # (L, H, 3H)
        wo=params["wo"].astype(bf),                                   # (L, H, H)
        wgu=jnp.concatenate([params["wg"], params["wu"]], axis=-1).astype(bf),  # (L, H, 2I)
        wd=params["wd"].astype(bf),                                   # (L, I, H)
    )


# ---------------------------------------------------------------------------
# References:
#   * ref_forward_fp32    — pure f32 PyTorch-semantics reference (precision drift bound)
#   * ref_forward_matched — same bf16 weight/operand casts as the kernel (tight check)
# ---------------------------------------------------------------------------
def _rotate_half_ref(x):
    d = x.shape[-1]
    return jnp.concatenate([-x[..., d // 2:], x[..., :d // 2]], axis=-1)


def ref_forward_fp32(input_ids, params):
    B, S = input_ids.shape
    hidden = params["embed"][input_ids]
    cos, sin, _ = _rope_tables(S)
    mask = jnp.triu(jnp.full((S, S), -jnp.inf, jnp.float32), k=1)
    for l in range(NUM_LAYERS):
        x = hidden
        xn = x * jax.lax.rsqrt(jnp.mean(x * x, -1, keepdims=True) + RMS_EPS) * params["ln1"][l, 0]
        q = (xn @ params["wq"][l]).reshape(B, S, NUM_HEADS, HEAD_DIM).transpose(0, 2, 1, 3)
        k = (xn @ params["wk"][l]).reshape(B, S, NUM_HEADS, HEAD_DIM).transpose(0, 2, 1, 3)
        v = (xn @ params["wv"][l]).reshape(B, S, NUM_HEADS, HEAD_DIM).transpose(0, 2, 1, 3)
        cb, sb = cos[None, None], sin[None, None]
        q = q * cb + _rotate_half_ref(q) * sb
        k = k * cb + _rotate_half_ref(k) * sb
        scores = jnp.einsum("bhqd,bhkd->bhqk", q, k) / (HEAD_DIM ** 0.5) + mask
        p = jax.nn.softmax(scores, axis=-1)
        o = jnp.einsum("bhqk,bhkd->bhqd", p, v).transpose(0, 2, 1, 3).reshape(B, S, HIDDEN)
        h1 = x + o @ params["wo"][l]
        xn2 = h1 * jax.lax.rsqrt(jnp.mean(h1 * h1, -1, keepdims=True) + RMS_EPS) * params["ln2"][l, 0]
        mlp = (jax.nn.silu(xn2 @ params["wg"][l]) * (xn2 @ params["wu"][l])) @ params["wd"][l]
        hidden = h1 + mlp
    return hidden


def ref_forward_matched(input_ids, embed, kp, cos, ssin, mask):
    f32, bf = jnp.float32, jnp.bfloat16
    hidden = embed[input_ids]                                         # (B, S, H) f32
    roll = lambda a: jnp.roll(a, HEAD_DIM // 2, axis=-1)
    for l in range(NUM_LAYERS):
        x = hidden
        xn = x * jax.lax.rsqrt(jnp.mean(x * x, -1, keepdims=True) + RMS_EPS) * kp["ln1"][l, 0]
        qkv = jnp.einsum("bsh,hf->bsf", xn.astype(bf), kp["wqkv"][l], preferred_element_type=f32)
        heads = []
        for h in range(NUM_HEADS):
            lo = h * HEAD_DIM
            qh = qkv[..., lo:lo + HEAD_DIM]
            kh = qkv[..., HIDDEN + lo:HIDDEN + lo + HEAD_DIM]
            vh = qkv[..., 2 * HIDDEN + lo:2 * HIDDEN + lo + HEAD_DIM]
            qh = qh * cos + roll(qh) * ssin
            kh = kh * cos + roll(kh) * ssin
            s = jnp.einsum("bqd,bkd->bqk", qh.astype(bf), kh.astype(bf),
                           preferred_element_type=f32) + mask
            m = jnp.max(s, -1, keepdims=True)
            p = jnp.exp(s - m)
            p = p / jnp.sum(p, -1, keepdims=True)
            heads.append(jnp.einsum("bqk,bkd->bqd", p.astype(bf), vh.astype(bf),
                                    preferred_element_type=f32))
        attn = jnp.concatenate(heads, axis=-1)
        h1 = x + jnp.einsum("bsh,hf->bsf", attn.astype(bf), kp["wo"][l], preferred_element_type=f32)
        xn2 = h1 * jax.lax.rsqrt(jnp.mean(h1 * h1, -1, keepdims=True) + RMS_EPS) * kp["ln2"][l, 0]
        gu = jnp.einsum("bsh,hf->bsf", xn2.astype(bf), kp["wgu"][l], preferred_element_type=f32)
        act = jax.nn.silu(gu[..., :INTER]) * gu[..., INTER:]
        down = jnp.einsum("bsf,fh->bsh", act.astype(bf), kp["wd"][l], preferred_element_type=f32)
        hidden = h1 + down
    return hidden


if __name__ == "__main__":
    key = jax.random.PRNGKey(0)
    kparam_key, kx = jax.random.split(key)
    params = init_params(kparam_key)
    kparams = prep_kernel_params(params)

    B, S = 2, 8
    input_ids = jax.random.randint(kx, (B, S), 0, VOCAB, dtype=jnp.int32)

    hidden, attention_mask = part1_forward(input_ids, params["embed"], kparams)
    jax.block_until_ready((hidden, attention_mask))

    assert hidden.shape == (B, S, HIDDEN) and hidden.dtype == jnp.float32
    assert attention_mask.shape == (B, 1, S, S)

    cos, _, ssin = _rope_tables(S)
    mask2d = jnp.triu(jnp.full((S, S), -jnp.inf, jnp.float32), k=1)

    # Tight structural check vs a reference using the exact same bf16 casts.
    ref_m = ref_forward_matched(input_ids, params["embed"], kparams, cos, ssin, mask2d)
    err_struct = float(jnp.max(jnp.abs(hidden - ref_m)))
    assert err_struct < 2e-2, f"kernel vs matched-precision reference: {err_struct}"

    # Precision-drift bound vs the pure-f32 PyTorch-semantics reference
    # (bf16 weight/operand rounding accumulates over 14 layers).
    ref_f = ref_forward_fp32(input_ids, params)
    err_drift = float(jnp.max(jnp.abs(hidden - ref_f)))
    assert err_drift < 6e-2, f"kernel vs f32 reference: {err_drift}"

    print("KERNEL_OK")
</pallas_src>

<mosaic_0001>
module attributes {stable_mosaic.version = 11 : i64} {
  func.func @fused_layers_kernel(%arg0: i32, %arg1: memref<16x256xf32, #tpu.memory_space<vmem>>, %arg2: memref<8x128xf32, #tpu.memory_space<vmem>>, %arg3: memref<8x128xf32, #tpu.memory_space<vmem>>, %arg4: memref<1x1x256xf32, #tpu.memory_space<vmem>>, %arg5: memref<1x256x768xbf16, #tpu.memory_space<vmem>>, %arg6: memref<1x256x256xbf16, #tpu.memory_space<vmem>>, %arg7: memref<1x1x256xf32, #tpu.memory_space<vmem>>, %arg8: memref<1x256x1024xbf16, #tpu.memory_space<vmem>>, %arg9: memref<1x512x256xbf16, #tpu.memory_space<vmem>>, %arg10: memref<16x256xf32, #tpu.memory_space<vmem>>) attributes {dimension_semantics = [#tpu.dimension_semantics<arbitrary>], iteration_bounds = array<i64: 14>, scalar_prefetch = 0 : i64, scratch_operands = 0 : i64, tpu.core_type = #tpu.core_type<tc>, window_params = [{pipeline_mode = #tpu.pipeline_mode<synchronous>, transform_indices = @transform_0, window_bounds = array<i64: 16, 256>}, {pipeline_mode = #tpu.pipeline_mode<synchronous>, transform_indices = @transform_1, window_bounds = array<i64: 8, 128>}, {pipeline_mode = #tpu.pipeline_mode<synchronous>, transform_indices = @transform_2, window_bounds = array<i64: 8, 128>}, {transform_indices = @transform_3, window_bounds = array<i64: 1, 1, 256>}, {transform_indices = @transform_4, window_bounds = array<i64: 1, 256, 768>}, {transform_indices = @transform_5, window_bounds = array<i64: 1, 256, 256>}, {transform_indices = @transform_6, window_bounds = array<i64: 1, 1, 256>}, {transform_indices = @transform_7, window_bounds = array<i64: 1, 256, 1024>}, {transform_indices = @transform_8, window_bounds = array<i64: 1, 512, 256>}, {pipeline_mode = #tpu.pipeline_mode<synchronous>, transform_indices = @transform_9, window_bounds = array<i64: 16, 256>}]} {
    %c0_i32 = arith.constant 0 : i32
    %0 = arith.cmpi eq, %arg0, %c0_i32 : i32
    %1 = arith.extui %0 : i1 to i32
    %c0_i32_0 = arith.constant 0 : i32
    %2 = arith.cmpi ne, %1, %c0_i32_0 : i32
    scf.if %2 {
      %c0_61 = arith.constant 0 : index
      %c0_62 = arith.constant 0 : index
      %181 = vector.load %arg1[%c0_61, %c0_62] : memref<16x256xf32, #tpu.memory_space<vmem>>, vector<16x256xf32>
      %c0_63 = arith.constant 0 : index
      %c0_64 = arith.constant 0 : index
      %182 = vector.load %arg10[%c0_63, %c0_64] : memref<16x256xf32, #tpu.memory_space<vmem>>, vector<16x256xf32>
      tpu.vector_store %arg10[%c0_63, %c0_64], %181 {strides = array<i32>} : memref<16x256xf32, #tpu.memory_space<vmem>>, vector<16x256xf32>,
    } else {
    }
    %c0 = arith.constant 0 : index
    %c0_1 = arith.constant 0 : index
    %3 = vector.load %arg10[%c0, %c0_1] : memref<16x256xf32, #tpu.memory_space<vmem>>, vector<16x256xf32>
    %c0_2 = arith.constant 0 : index
    %c0_3 = arith.constant 0 : index
    %4 = vector.load %arg2[%c0_2, %c0_3] : memref<8x128xf32, #tpu.memory_space<vmem>>, vector<8x128xf32>
    %c0_4 = arith.constant 0 : index
    %c0_5 = arith.constant 0 : index
    %5 = vector.load %arg3[%c0_4, %c0_5] : memref<8x128xf32, #tpu.memory_space<vmem>>, vector<8x128xf32>
    %6 = tpu.iota {dimensions = array<i32: 0>} : vector<8x8xi32>
    %7 = tpu.iota {dimensions = array<i32: 1>} : vector<8x8xi32>
    %8 = arith.cmpi sgt, %7, %6 : vector<8x8xi32>
    %cst = arith.constant -1.000000e+30 : f32
    %cst_6 = arith.constant 0.000000e+00 : f32
    %9 = vector.broadcast %cst : f32 to vector<8x8xf32>
    %10 = vector.broadcast %cst_6 : f32 to vector<8x8xf32>
    %11 = arith.select %8, %9, %10 : vector<8x8xi1>, vector<8x8xf32>
    %12 = arith.mulf %3, %3 : vector<16x256xf32>
    %cst_7 = arith.constant dense<0.000000e+00> : vector<16xf32>
    %13 = vector.multi_reduction <add>, %12, %cst_7 [1] : vector<16x256xf32> to vector<16xf32>
    %14 = vector.shape_cast %13 : vector<16xf32> to vector<16x1xf32>
    %cst_8 = arith.constant 2.560000e+02 : f32
    %15 = vector.broadcast %cst_8 : f32 to vector<16x1xf32>
    %16 = arith.divf %14, %15 : vector<16x1xf32>
    %cst_9 = arith.constant 9.99999997E-7 : f32
    %17 = vector.broadcast %cst_9 : f32 to vector<16x1xf32>
    %18 = arith.addf %16, %17 : vector<16x1xf32>
    %19 = math.rsqrt %18 : vector<16x1xf32>
    %20 = vector.broadcast %19 : vector<16x1xf32> to vector<16x256xf32>
    %21 = arith.mulf %3, %20 : vector<16x256xf32>
    %c0_10 = arith.constant 0 : index
    %c0_11 = arith.constant 0 : index
    %c0_12 = arith.constant 0 : index
    %22 = vector.load %arg4[%c0_10, %c0_11, %c0_12] : memref<1x1x256xf32, #tpu.memory_space<vmem>>, vector<1x1x256xf32>
    %23 = vector.shape_cast %22 : vector<1x1x256xf32> to vector<1x256xf32>
    %24 = vector.broadcast %23 : vector<1x256xf32> to vector<16x256xf32>
    %25 = arith.mulf %21, %24 : vector<16x256xf32>
    %26 = arith.truncf %25 : vector<16x256xf32> to vector<16x256xbf16>
    %c0_13 = arith.constant 0 : index
    %c0_14 = arith.constant 0 : index
    %c0_15 = arith.constant 0 : index
    %27 = vector.load %arg5[%c0_13, %c0_14, %c0_15] : memref<1x256x768xbf16, #tpu.memory_space<vmem>>, vector<1x256x768xbf16>
    %28 = vector.shape_cast %27 : vector<1x256x768xbf16> to vector<256x768xbf16>
    %cst_16 = arith.constant dense<0.000000e+00> : vector<16x768xf32>
    %29 = tpu.matmul %26, %28, %cst_16 {dimension_numbers = #tpu.dot_dimension_numbers<[1], [0], [0], [1], [0, 0, 1, 1], [], []>} : vector<16x256xbf16>, vector<256x768xbf16>, vector<16x768xf32> -> vector<16x768xf32>
    %30 = vector.extract_strided_slice %29 {offsets = [0, 0], sizes = [8, 768], strides = [1, 1]} : vector<16x768xf32> to vector<8x768xf32>
    %31 = vector.extract_strided_slice %30 {offsets = [0, 0], sizes = [8, 128], strides = [1, 1]} : vector<8x768xf32> to vector<8x128xf32>
    %32 = vector.extract_strided_slice %30 {offsets = [0, 256], sizes = [8, 128], strides = [1, 1]} : vector<8x768xf32> to vector<8x128xf32>
    %33 = vector.extract_strided_slice %30 {offsets = [0, 512], sizes = [8, 128], strides = [1, 1]} : vector<8x768xf32> to vector<8x128xf32>
    %34 = arith.mulf %31, %4 : vector<8x128xf32>
    %c64_i32 = arith.constant 64 : i32
    %35 = tpu.dynamic_rotate %31 by %c64_i32 dim 1 : vector<8x128xf32>, i32 -> vector<8x128xf32>
    %36 = arith.mulf %35, %5 : vector<8x128xf32>
    %37 = arith.addf %34, %36 : vector<8x128xf32>
    %38 = arith.mulf %32, %4 : vector<8x128xf32>
    %c64_i32_17 = arith.constant 64 : i32
    %39 = tpu.dynamic_rotate %32 by %c64_i32_17 dim 1 : vector<8x128xf32>, i32 -> vector<8x128xf32>
    %40 = arith.mulf %39, %5 : vector<8x128xf32>
    %41 = arith.addf %38, %40 : vector<8x128xf32>
    %42 = arith.truncf %37 : vector<8x128xf32> to vector<8x128xbf16>
    %43 = arith.truncf %41 : vector<8x128xf32> to vector<8x128xbf16>
    %cst_18 = arith.constant dense<0.000000e+00> : vector<8x8xf32>
    %44 = tpu.matmul %42, %43, %cst_18 {dimension_numbers = #tpu.dot_dimension_numbers<[1], [1], [0], [0], [0, 0, 1, 0], [], []>} : vector<8x128xbf16>, vector<8x128xbf16>, vector<8x8xf32> -> vector<8x8xf32>
    %45 = arith.addf %44, %11 : vector<8x8xf32>
    %cst_19 = arith.constant dense<0xFF800000> : vector<8xf32>
    %46 = vector.multi_reduction <maximumf>, %45, %cst_19 [1] : vector<8x8xf32> to vector<8xf32>
    %47 = vector.shape_cast %46 : vector<8xf32> to vector<8x1xf32>
    %48 = vector.broadcast %47 : vector<8x1xf32> to vector<8x8xf32>
    %49 = arith.subf %45, %48 : vector<8x8xf32>
    %50 = math.exp %49 : vector<8x8xf32>
    %cst_20 = arith.constant dense<0.000000e+00> : vector<8xf32>
    %51 = vector.multi_reduction <add>, %50, %cst_20 [1] : vector<8x8xf32> to vector<8xf32>
    %52 = vector.shape_cast %51 : vector<8xf32> to vector<8x1xf32>
    %53 = vector.broadcast %52 : vector<8x1xf32> to vector<8x8xf32>
    %54 = arith.divf %50, %53 : vector<8x8xf32>
    %55 = arith.truncf %54 : vector<8x8xf32> to vector<8x8xbf16>
    %56 = arith.truncf %33 : vector<8x128xf32> to vector<8x128xbf16>
    %cst_21 = arith.constant dense<0.000000e+00> : vector<8x128xf32>
    %57 = tpu.matmul %55, %56, %cst_21 {dimension_numbers = #tpu.dot_dimension_numbers<[1], [0], [0], [1], [0, 0, 1, 1], [], []>} : vector<8x8xbf16>, vector<8x128xbf16>, vector<8x128xf32> -> vector<8x128xf32>
    %58 = vector.extract_strided_slice %30 {offsets = [0, 128], sizes = [8, 128], strides = [1, 1]} : vector<8x768xf32> to vector<8x128xf32>
    %59 = vector.extract_strided_slice %30 {offsets = [0, 384], sizes = [8, 128], strides = [1, 1]} : vector<8x768xf32> to vector<8x128xf32>
    %60 = vector.extract_strided_slice %30 {offsets = [0, 640], sizes = [8, 128], strides = [1, 1]} : vector<8x768xf32> to vector<8x128xf32>
    %61 = arith.mulf %58, %4 : vector<8x128xf32>
    %c64_i32_22 = arith.constant 64 : i32
    %62 = tpu.dynamic_rotate %58 by %c64_i32_22 dim 1 : vector<8x128xf32>, i32 -> vector<8x128xf32>
    %63 = arith.mulf %62, %5 : vector<8x128xf32>
    %64 = arith.addf %61, %63 : vector<8x128xf32>
    %65 = arith.mulf %59, %4 : vector<8x128xf32>
    %c64_i32_23 = arith.constant 64 : i32
    %66 = tpu.dynamic_rotate %59 by %c64_i32_23 dim 1 : vector<8x128xf32>, i32 -> vector<8x128xf32>
    %67 = arith.mulf %66, %5 : vector<8x128xf32>
    %68 = arith.addf %65, %67 : vector<8x128xf32>
    %69 = arith.truncf %64 : vector<8x128xf32> to vector<8x128xbf16>
    %70 = arith.truncf %68 : vector<8x128xf32> to vector<8x128xbf16>
    %cst_24 = arith.constant dense<0.000000e+00> : vector<8x8xf32>
    %71 = tpu.matmul %69, %70, %cst_24 {dimension_numbers = #tpu.dot_dimension_numbers<[1], [1], [0], [0], [0, 0, 1, 0], [], []>} : vector<8x128xbf16>, vector<8x128xbf16>, vector<8x8xf32> -> vector<8x8xf32>
    %72 = arith.addf %71, %11 : vector<8x8xf32>
    %cst_25 = arith.constant dense<0xFF800000> : vector<8xf32>
    %73 = vector.multi_reduction <maximumf>, %72, %cst_25 [1] : vector<8x8xf32> to vector<8xf32>
    %74 = vector.shape_cast %73 : vector<8xf32> to vector<8x1xf32>
    %75 = vector.broadcast %74 : vector<8x1xf32> to vector<8x8xf32>
    %76 = arith.subf %72, %75 : vector<8x8xf32>
    %77 = math.exp %76 : vector<8x8xf32>
    %cst_26 = arith.constant dense<0.000000e+00> : vector<8xf32>
    %78 = vector.multi_reduction <add>, %77, %cst_26 [1] : vector<8x8xf32> to vector<8xf32>
    %79 = vector.shape_cast %78 : vector<8xf32> to vector<8x1xf32>
    %80 = vector.broadcast %79 : vector<8x1xf32> to vector<8x8xf32>
    %81 = arith.divf %77, %80 : vector<8x8xf32>
    %82 = arith.truncf %81 : vector<8x8xf32> to vector<8x8xbf16>
    %83 = arith.truncf %60 : vector<8x128xf32> to vector<8x128xbf16>
    %cst_27 = arith.constant dense<0.000000e+00> : vector<8x128xf32>
    %84 = tpu.matmul %82, %83, %cst_27 {dimension_numbers = #tpu.dot_dimension_numbers<[1], [0], [0], [1], [0, 0, 1, 1], [], []>} : vector<8x8xbf16>, vector<8x128xbf16>, vector<8x128xf32> -> vector<8x128xf32>
    %85 = tpu.concatenate %57, %84 in 1 : vector<8x128xf32>, vector<8x128xf32> -> vector<8x256xf32>
    %86 = vector.extract_strided_slice %29 {offsets = [8, 0], sizes = [8, 768], strides = [1, 1]} : vector<16x768xf32> to vector<8x768xf32>
    %87 = vector.extract_strided_slice %86 {offsets = [0, 0], sizes = [8, 128], strides = [1, 1]} : vector<8x768xf32> to vector<8x128xf32>
    %88 = vector.extract_strided_slice %86 {offsets = [0, 256], sizes = [8, 128], strides = [1, 1]} : vector<8x768xf32> to vector<8x128xf32>
    %89 = vector.extract_strided_slice %86 {offsets = [0, 512], sizes = [8, 128], strides = [1, 1]} : vector<8x768xf32> to vector<8x128xf32>
    %90 = arith.mulf %87, %4 : vector<8x128xf32>
    %c64_i32_28 = arith.constant 64 : i32
    %91 = tpu.dynamic_rotate %87 by %c64_i32_28 dim 1 : vector<8x128xf32>, i32 -> vector<8x128xf32>
    %92 = arith.mulf %91, %5 : vector<8x128xf32>
    %93 = arith.addf %90, %92 : vector<8x128xf32>
    %94 = arith.mulf %88, %4 : vector<8x128xf32>
    %c64_i32_29 = arith.constant 64 : i32
    %95 = tpu.dynamic_rotate %88 by %c64_i32_29 dim 1 : vector<8x128xf32>, i32 -> vector<8x128xf32>
    %96 = arith.mulf %95, %5 : vector<8x128xf32>
    %97 = arith.addf %94, %96 : vector<8x128xf32>
    %98 = arith.truncf %93 : vector<8x128xf32> to vector<8x128xbf16>
    %99 = arith.truncf %97 : vector<8x128xf32> to vector<8x128xbf16>
    %cst_30 = arith.constant dense<0.000000e+00> : vector<8x8xf32>
    %100 = tpu.matmul %98, %99, %cst_30 {dimension_numbers = #tpu.dot_dimension_numbers<[1], [1], [0], [0], [0, 0, 1, 0], [], []>} : vector<8x128xbf16>, vector<8x128xbf16>, vector<8x8xf32> -> vector<8x8xf32>
    %101 = arith.addf %100, %11 : vector<8x8xf32>
    %cst_31 = arith.constant dense<0xFF800000> : vector<8xf32>
    %102 = vector.multi_reduction <maximumf>, %101, %cst_31 [1] : vector<8x8xf32> to vector<8xf32>
    %103 = vector.shape_cast %102 : vector<8xf32> to vector<8x1xf32>
    %104 = vector.broadcast %103 : vector<8x1xf32> to vector<8x8xf32>
    %105 = arith.subf %101, %104 : vector<8x8xf32>
    %106 = math.exp %105 : vector<8x8xf32>
    %cst_32 = arith.constant dense<0.000000e+00> : vector<8xf32>
    %107 = vector.multi_reduction <add>, %106, %cst_32 [1] : vector<8x8xf32> to vector<8xf32>
    %108 = vector.shape_cast %107 : vector<8xf32> to vector<8x1xf32>
    %109 = vector.broadcast %108 : vector<8x1xf32> to vector<8x8xf32>
    %110 = arith.divf %106, %109 : vector<8x8xf32>
    %111 = arith.truncf %110 : vector<8x8xf32> to vector<8x8xbf16>
    %112 = arith.truncf %89 : vector<8x128xf32> to vector<8x128xbf16>
    %cst_33 = arith.constant dense<0.000000e+00> : vector<8x128xf32>
    %113 = tpu.matmul %111, %112, %cst_33 {dimension_numbers = #tpu.dot_dimension_numbers<[1], [0], [0], [1], [0, 0, 1, 1], [], []>} : vector<8x8xbf16>, vector<8x128xbf16>, vector<8x128xf32> -> vector<8x128xf32>
    %114 = vector.extract_strided_slice %86 {offsets = [0, 128], sizes = [8, 128], strides = [1, 1]} : vector<8x768xf32> to vector<8x128xf32>
    %115 = vector.extract_strided_slice %86 {offsets = [0, 384], sizes = [8, 128], strides = [1, 1]} : vector<8x768xf32> to vector<8x128xf32>
    %116 = vector.extract_strided_slice %86 {offsets = [0, 640], sizes = [8, 128], strides = [1, 1]} : vector<8x768xf32> to vector<8x128xf32>
    %117 = arith.mulf %114, %4 : vector<8x128xf32>
    %c64_i32_34 = arith.constant 64 : i32
    %118 = tpu.dynamic_rotate %114 by %c64_i32_34 dim 1 : vector<8x128xf32>, i32 -> vector<8x128xf32>
    %119 = arith.mulf %118, %5 : vector<8x128xf32>
    %120 = arith.addf %117, %119 : vector<8x128xf32>
    %121 = arith.mulf %115, %4 : vector<8x128xf32>
    %c64_i32_35 = arith.constant 64 : i32
    %122 = tpu.dynamic_rotate %115 by %c64_i32_35 dim 1 : vector<8x128xf32>, i32 -> vector<8x128xf32>
    %123 = arith.mulf %122, %5 : vector<8x128xf32>
    %124 = arith.addf %121, %123 : vector<8x128xf32>
    %125 = arith.truncf %120 : vector<8x128xf32> to vector<8x128xbf16>
    %126 = arith.truncf %124 : vector<8x128xf32> to vector<8x128xbf16>
    %cst_36 = arith.constant dense<0.000000e+00> : vector<8x8xf32>
    %127 = tpu.matmul %125, %126, %cst_36 {dimension_numbers = #tpu.dot_dimension_numbers<[1], [1], [0], [0], [0, 0, 1, 0], [], []>} : vector<8x128xbf16>, vector<8x128xbf16>, vector<8x8xf32> -> vector<8x8xf32>
    %128 = arith.addf %127, %11 : vector<8x8xf32>
    %cst_37 = arith.constant dense<0xFF800000> : vector<8xf32>
    %129 = vector.multi_reduction <maximumf>, %128, %cst_37 [1] : vector<8x8xf32> to vector<8xf32>
    %130 = vector.shape_cast %129 : vector<8xf32> to vector<8x1xf32>
    %131 = vector.broadcast %130 : vector<8x1xf32> to vector<8x8xf32>
    %132 = arith.subf %128, %131 : vector<8x8xf32>
    %133 = math.exp %132 : vector<8x8xf32>
    %cst_38 = arith.constant dense<0.000000e+00> : vector<8xf32>
    %134 = vector.multi_reduction <add>, %133, %cst_38 [1] : vector<8x8xf32> to vector<8xf32>
    %135 = vector.shape_cast %134 : vector<8xf32> to vector<8x1xf32>
    %136 = vector.broadcast %135 : vector<8x1xf32> to vector<8x8xf32>
    %137 = arith.divf %133, %136 : vector<8x8xf32>
    %138 = arith.truncf %137 : vector<8x8xf32> to vector<8x8xbf16>
    %139 = arith.truncf %116 : vector<8x128xf32> to vector<8x128xbf16>
    %cst_39 = arith.constant dense<0.000000e+00> : vector<8x128xf32>
    %140 = tpu.matmul %138, %139, %cst_39 {dimension_numbers = #tpu.dot_dimension_numbers<[1], [0], [0], [1], [0, 0, 1, 1], [], []>} : vector<8x8xbf16>, vector<8x128xbf16>, vector<8x128xf32> -> vector<8x128xf32>
    %141 = tpu.concatenate %113, %140 in 1 : vector<8x128xf32>, vector<8x128xf32> -> vector<8x256xf32>
    %142 = tpu.concatenate %85, %141 in 0 : vector<8x256xf32>, vector<8x256xf32> -> vector<16x256xf32>
    %143 = arith.truncf %142 : vector<16x256xf32> to vector<16x256xbf16>
    %c0_40 = arith.constant 0 : index
    %c0_41 = arith.constant 0 : index
    %c0_42 = arith.constant 0 : index
    %144 = vector.load %arg6[%c0_40, %c0_41, %c0_42] : memref<1x256x256xbf16, #tpu.memory_space<vmem>>, vector<1x256x256xbf16>
    %145 = vector.shape_cast %144 : vector<1x256x256xbf16> to vector<256x256xbf16>
    %cst_43 = arith.constant dense<0.000000e+00> : vector<16x256xf32>
    %146 = tpu.matmul %143, %145, %cst_43 {dimension_numbers = #tpu.dot_dimension_numbers<[1], [0], [0], [1], [0, 0, 1, 1], [], []>} : vector<16x256xbf16>, vector<256x256xbf16>, vector<16x256xf32> -> vector<16x256xf32>
    %147 = arith.addf %3, %146 : vector<16x256xf32>
    %148 = arith.mulf %147, %147 : vector<16x256xf32>
    %cst_44 = arith.constant dense<0.000000e+00> : vector<16xf32>
    %149 = vector.multi_reduction <add>, %148, %cst_44 [1] : vector<16x256xf32> to vector<16xf32>
    %150 = vector.shape_cast %149 : vector<16xf32> to vector<16x1xf32>
    %cst_45 = arith.constant 2.560000e+02 : f32
    %151 = vector.broadcast %cst_45 : f32 to vector<16x1xf32>
    %152 = arith.divf %150, %151 : vector<16x1xf32>
    %cst_46 = arith.constant 9.99999997E-7 : f32
    %153 = vector.broadcast %cst_46 : f32 to vector<16x1xf32>
    %154 = arith.addf %152, %153 : vector<16x1xf32>
    %155 = math.rsqrt %154 : vector<16x1xf32>
    %156 = vector.broadcast %155 : vector<16x1xf32> to vector<16x256xf32>
    %157 = arith.mulf %147, %156 : vector<16x256xf32>
    %c0_47 = arith.constant 0 : index
    %c0_48 = arith.constant 0 : index
    %c0_49 = arith.constant 0 : index
    %158 = vector.load %arg7[%c0_47, %c0_48, %c0_49] : memref<1x1x256xf32, #tpu.memory_space<vmem>>, vector<1x1x256xf32>
    %159 = vector.shape_cast %158 : vector<1x1x256xf32> to vector<1x256xf32>
    %160 = vector.broadcast %159 : vector<1x256xf32> to vector<16x256xf32>
    %161 = arith.mulf %157, %160 : vector<16x256xf32>
    %162 = arith.truncf %161 : vector<16x256xf32> to vector<16x256xbf16>
    %c0_50 = arith.constant 0 : index
    %c0_51 = arith.constant 0 : index
    %c0_52 = arith.constant 0 : index
    %163 = vector.load %arg8[%c0_50, %c0_51, %c0_52] : memref<1x256x1024xbf16, #tpu.memory_space<vmem>>, vector<1x256x1024xbf16>
    %164 = vector.shape_cast %163 : vector<1x256x1024xbf16> to vector<256x1024xbf16>
    %cst_53 = arith.constant dense<0.000000e+00> : vector<16x1024xf32>
    %165 = tpu.matmul %162, %164, %cst_53 {dimension_numbers = #tpu.dot_dimension_numbers<[1], [0], [0], [1], [0, 0, 1, 1], [], []>} : vector<16x256xbf16>, vector<256x1024xbf16>, vector<16x1024xf32> -> vector<16x1024xf32>
    %166 = vector.extract_strided_slice %165 {offsets = [0, 0], sizes = [16, 512], strides = [1, 1]} : vector<16x1024xf32> to vector<16x512xf32>
    %167 = arith.negf %166 : vector<16x512xf32>
    %168 = math.exp %167 : vector<16x512xf32>
    %cst_54 = arith.constant 1.000000e+00 : f32
    %169 = vector.broadcast %cst_54 : f32 to vector<16x512xf32>
    %170 = arith.addf %169, %168 : vector<16x512xf32>
    %171 = arith.divf %169, %170 : vector<16x512xf32>
    %172 = arith.mulf %166, %171 : vector<16x512xf32>
    %173 = vector.extract_strided_slice %165 {offsets = [0, 512], sizes = [16, 512], strides = [1, 1]} : vector<16x1024xf32> to vector<16x512xf32>
    %174 = arith.mulf %172, %173 : vector<16x512xf32>
    %175 = arith.truncf %174 : vector<16x512xf32> to vector<16x512xbf16>
    %c0_55 = arith.constant 0 : index
    %c0_56 = arith.constant 0 : index
    %c0_57 = arith.constant 0 : index
    %176 = vector.load %arg9[%c0_55, %c0_56, %c0_57] : memref<1x512x256xbf16, #tpu.memory_space<vmem>>, vector<1x512x256xbf16>
    %177 = vector.shape_cast %176 : vector<1x512x256xbf16> to vector<512x256xbf16>
    %cst_58 = arith.constant dense<0.000000e+00> : vector<16x256xf32>
    %178 = tpu.matmul %175, %177, %cst_58 {dimension_numbers = #tpu.dot_dimension_numbers<[1], [0], [0], [1], [0, 0, 1, 1], [], []>} : vector<16x512xbf16>, vector<512x256xbf16>, vector<16x256xf32> -> vector<16x256xf32>
    %179 = arith.addf %147, %178 : vector<16x256xf32>
    %c0_59 = arith.constant 0 : index
    %c0_60 = arith.constant 0 : index
    %180 = vector.load %arg10[%c0_59, %c0_60] : memref<16x256xf32, #tpu.memory_space<vmem>>, vector<16x256xf32>
    tpu.vector_store %arg10[%c0_59, %c0_60], %179 {strides = array<i32>} : memref<16x256xf32, #tpu.memory_space<vmem>>, vector<16x256xf32>,
    return
  }
  func.func @transform_0(%arg0: i32) -> (i32, i32) {
    %c0_i32 = arith.constant 0 : i32
    %c0_i32_0 = arith.constant 0 : i32
    %c0_i32_1 = arith.constant 0 : i32
    return %c0_i32, %c0_i32_0 : i32, i32
  }
  func.func @transform_1(%arg0: i32) -> (i32, i32) {
    %c0_i32 = arith.constant 0 : i32
    %c0_i32_0 = arith.constant 0 : i32
    %c0_i32_1 = arith.constant 0 : i32
    return %c0_i32, %c0_i32_0 : i32, i32
  }
  func.func @transform_2(%arg0: i32) -> (i32, i32) {
    %c0_i32 = arith.constant 0 : i32
    %c0_i32_0 = arith.constant 0 : i32
    %c0_i32_1 = arith.constant 0 : i32
    return %c0_i32, %c0_i32_0 : i32, i32
  }
  func.func @transform_3(%arg0: i32) -> (i32, i32, i32) {
    %c0_i32 = arith.constant 0 : i32
    %c0_i32_0 = arith.constant 0 : i32
    %c0_i32_1 = arith.constant 0 : i32
    return %arg0, %c0_i32, %c0_i32_0 : i32, i32, i32
  }
  func.func @transform_4(%arg0: i32) -> (i32, i32, i32) {
    %c0_i32 = arith.constant 0 : i32
    %c0_i32_0 = arith.constant 0 : i32
    %c0_i32_1 = arith.constant 0 : i32
    return %arg0, %c0_i32, %c0_i32_0 : i32, i32, i32
  }
  func.func @transform_5(%arg0: i32) -> (i32, i32, i32) {
    %c0_i32 = arith.constant 0 : i32
    %c0_i32_0 = arith.constant 0 : i32
    %c0_i32_1 = arith.constant 0 : i32
    return %arg0, %c0_i32, %c0_i32_0 : i32, i32, i32
  }
  func.func @transform_6(%arg0: i32) -> (i32, i32, i32) {
    %c0_i32 = arith.constant 0 : i32
    %c0_i32_0 = arith.constant 0 : i32
    %c0_i32_1 = arith.constant 0 : i32
    return %arg0, %c0_i32, %c0_i32_0 : i32, i32, i32
  }
  func.func @transform_7(%arg0: i32) -> (i32, i32, i32) {
    %c0_i32 = arith.constant 0 : i32
    %c0_i32_0 = arith.constant 0 : i32
    %c0_i32_1 = arith.constant 0 : i32
    return %arg0, %c0_i32, %c0_i32_0 : i32, i32, i32
  }
  func.func @transform_8(%arg0: i32) -> (i32, i32, i32) {
    %c0_i32 = arith.constant 0 : i32
    %c0_i32_0 = arith.constant 0 : i32
    %c0_i32_1 = arith.constant 0 : i32
    return %arg0, %c0_i32, %c0_i32_0 : i32, i32, i32
  }
  func.func @transform_9(%arg0: i32) -> (i32, i32) {
    %c0_i32 = arith.constant 0 : i32
    %c0_i32_0 = arith.constant 0 : i32
    %c0_i32_1 = arith.constant 0 : i32
    return %c0_i32, %c0_i32_0 : i32, i32
  }
}

</mosaic_0001>

<llo_original>
// kernel: part1_forward.1
$region0: #{part1_forward.1}
  #allocation0 [shape = 'u32[]', space=smem, size = 0x4, offset = 0x4, fixed_abs, tag = 'smem constant byte address 0x4 - core index']
  #allocation1 [shape = 'u32[144,128]{1,0:T(1,128)}', space=vmem, size = 0x12000, scoped, tag = 'internal scratch']
  %s0 = inlined_call_operand.vmem [shape: f32[16,256], index: 0, kind: input, shape index: {}]
  %s1 = inlined_call_operand.vmem [shape: f32[8,128], index: 1, kind: input, shape index: {}]
  %s2 = inlined_call_operand.vmem [shape: f32[8,128], index: 2, kind: input, shape index: {}]
  %s3 = inlined_call_operand.hbm [shape: f32[14,1,256], index: 3, kind: input, shape index: {}]
  %s4 = inlined_call_operand.hbm [shape: bf16[14,256,768], index: 4, kind: input, shape index: {}]
  %s5 = inlined_call_operand.hbm [shape: bf16[14,256,256], index: 5, kind: input, shape index: {}]
  %s6 = inlined_call_operand.hbm [shape: f32[14,1,256], index: 6, kind: input, shape index: {}]
  %s7 = inlined_call_operand.hbm [shape: bf16[14,256,1024], index: 7, kind: input, shape index: {}]
  %s8 = inlined_call_operand.hbm [shape: bf16[14,512,256], index: 8, kind: input, shape index: {}]
  %s9 = inlined_call_operand.hbm [shape: f32[16,256], index: 9, kind: output, shape index: {}]
  %s10 = sld [smem:[#allocation0]]
  $region97: #{part1_forward.1} parent=0
    _
  %s12 = ssub.s32 1, %s10
  %s13 = scalar_select 0, %s12, %s10
  $region1: #{part1_forward.1} parent=0
    #allocation2 [shape = 'u8[2048]{0}', space=vmem, size = 0x800, scoped, tag = 'input window, operand 3']
    #allocation3 [shape = 's32[2]{0}', space=sflag, size = 0x8, scoped, tag = 'scoped memory for part1_forward.1']
    #allocation4 [shape = 's32[2]{0}', space=sflag, size = 0x8, scoped, tag = 'scoped memory for part1_forward.1']
    #allocation5 [shape = 'u8[786432]{0}', space=vmem, size = 0xc0000, scoped, tag = 'input window, operand 4']
    #allocation6 [shape = 's32[2]{0}', space=sflag, size = 0x8, scoped, tag = 'scoped memory for part1_forward.1']
    #allocation7 [shape = 'u8[262144]{0}', space=vmem, size = 0x40000, scoped, tag = 'input window, operand 5']
    #allocation8 [shape = 'u8[2048]{0}', space=vmem, size = 0x800, scoped, tag = 'input window, operand 6']
    #allocation9 [shape = 's32[2]{0}', space=sflag, size = 0x8, scoped, tag = 'scoped memory for part1_forward.1']
    #allocation10 [shape = 'u8[1048576]{0}', space=vmem, size = 0x100000, scoped, tag = 'input window, operand 7']
    #allocation11 [shape = 'u8[524288]{0}', space=vmem, size = 0x80000, scoped, tag = 'input window, operand 8']
    #allocation12 [shape = 's32[2]{0}', space=sflag, size = 0x8, scoped, tag = 'scoped memory for part1_forward.1']
    #allocation13 [shape = 'u8[16384]{0}', space=vmem, size = 0x4000, scoped, tag = 'output window, operand 0, single buffered']
    %14 = vsyncpa [#allocation3], 0
    %s15 = scalar_lea.sflag [#allocation3], 1
    %16 = vsyncpa %s15, 0
    %17 = vsyncpa [#allocation6], 0
    %s18 = scalar_lea.sflag [#allocation6], 1
    %19 = vsyncpa %s18, 0
    %20 = vsyncpa [#allocation9], 0
    %s21 = scalar_lea.sflag [#allocation9], 1
    %22 = vsyncpa %s21, 0
    %23 = vsyncpa [#allocation12], 0
    %s24 = scalar_lea.sflag [#allocation12], 1
    %25 = vsyncpa %s24, 0
    %26 = vsyncpa [#allocation4], 0
    loop: start=0, step=1, limit=16
    $region2: #{part1_forward.1} parent=1 // loop_pre_header
      _
    $region3: #{part1_forward.1} parent=1 // loop_header
      %s28 = sphi 0, %s32
      %p29 = scmp.ge.s32.totalorder %s28, 16
      %s36 = sphi 0, %s36
      %s38 = sphi 0, %s36
      %s39 = sphi 0, %s38
      %s53 = sphi 0, %s39
      %s57 = sphi 0, %s57
      %s59 = sphi 0, %s57
      %s60 = sphi 0, %s59
      %s74 = sphi 0, %s60
      %s78 = sphi 0, %s78
      %s80 = sphi 0, %s78
      %s81 = sphi 0, %s80
      %s95 = sphi 0, %s81
      %s101 = sphi 0, %s103
      %s104 = sphi 0, %s101
      %s105 = sphi 0, %s104
      %s121 = sphi 0, %s105
      %s127 = sphi 0, %s129
      %s130 = sphi 0, %s127
      %s131 = sphi 0, %s130
      %s147 = sphi 0, %s131
      %s153 = sphi 0, %s155
      %s156 = sphi 0, %s153
      %s157 = sphi 0, %s156
      %s173 = sphi 0, %s157
      %s179 = sphi 0, %s181
      %s182 = sphi 0, %s179
      %s183 = sphi 0, %s182
      %s199 = sphi 0, %s183
      %s205 = sphi 0, %s207
      %s208 = sphi 0, %s205
      %s209 = sphi 0, %s208
      %s225 = sphi 0, %s209
      %s231 = sphi 0, %s233
      %s234 = sphi 0, %s231
      %s235 = sphi 0, %s234
      %s251 = sphi 0, %s235
      %s255 = sphi 0, %s255
      %s257 = sphi 0, %s255
      %s258 = sphi 0, %s257
      %s272 = sphi 0, %s258
    $region4: #{part1_forward.1} parent=1 // loop_header_branch
      %31 = sbr.rel (%p29) target = $region8
    $region5: #{part1_forward.1} parent=1 // loop_body
      %s33 = ssub.s32 %s28, 1
      %s34 = ssub.s32 %s28, 2
      %s35 = sadd.s32 %s28, 1
      %s37 = sadd.s32 %s36, 1
      %p40 = scmp.eq.s32.totalorder %s28, 13
      %p41 = scmp.ne.s32.totalorder %s36, %s38
      %p42 = scmp.eq.s32.totalorder %s28, 0
      %p43 = por %p41, %p42
      %p44 = scmp.ne.s32.totalorder %s36, %s38
      %p45 = scmp.eq.s32.totalorder %s33, 13
      %p46 = por %p44, %p45
      %p47 = scmp.ne.s32.totalorder %s38, %s39
      %p48 = scmp.eq.s32.totalorder %s33, 0
      %p49 = por %p47, %p48
      %p50 = scmp.ne.s32.totalorder %s38, %s39
      %p51 = scmp.eq.s32.totalorder %s34, 13
      %p52 = por %p50, %p51
      %p54 = scmp.ne.s32.totalorder %s39, %s53
      %p55 = scmp.eq.s32.totalorder %s34, 0
      %p56 = por %p54, %p55
      %s58 = sadd.s32 %s57, 1
      %p61 = scmp.eq.s32.totalorder %s28, 13
      %p62 = scmp.ne.s32.totalorder %s57, %s59
      %p63 = scmp.eq.s32.totalorder %s28, 0
      %p64 = por %p62, %p63
      %p65 = scmp.ne.s32.totalorder %s57, %s59
      %p66 = scmp.eq.s32.totalorder %s33, 13
      %p67 = por %p65, %p66
      %p68 = scmp.ne.s32.totalorder %s59, %s60
      %p69 = scmp.eq.s32.totalorder %s33, 0
      %p70 = por %p68, %p69
      %p71 = scmp.ne.s32.totalorder %s59, %s60
      %p72 = scmp.eq.s32.totalorder %s34, 13
      %p73 = por %p71, %p72
      %p75 = scmp.ne.s32.totalorder %s60, %s74
      %p76 = scmp.eq.s32.totalorder %s34, 0
      %p77 = por %p75, %p76
      %s79 = sadd.s32 %s78, 1
      %p82 = scmp.eq.s32.totalorder %s28, 13
      %p83 = scmp.ne.s32.totalorder %s78, %s80
      %p84 = scmp.eq.s32.totalorder %s28, 0
      %p85 = por %p83, %p84
      %p86 = scmp.ne.s32.totalorder %s78, %s80
      %p87 = scmp.eq.s32.totalorder %s33, 13
      %p88 = por %p86, %p87
      %p89 = scmp.ne.s32.totalorder %s80, %s81
      %p90 = scmp.eq.s32.totalorder %s33, 0
      %p91 = por %p89, %p90
      %p92 = scmp.ne.s32.totalorder %s80, %s81
      %p93 = scmp.eq.s32.totalorder %s34, 13
      %p94 = por %p92, %p93
      %p96 = scmp.ne.s32.totalorder %s81, %s95
      %p97 = scmp.eq.s32.totalorder %s34, 0
      %p98 = por %p96, %p97
      %s99 = ssub.s32 %s28, %s35
      %p100 = scmp.eq.s32.totalorder %s99, 0
      %s102 = sadd.s32 %s101, 1
      %s103 = scalar_select %p100, %s101, %s102
      %p106 = pneg %p100
      %p107 = scmp.eq.s32.totalorder %s28, 13
      %p108 = por %p106, %p107
      %p109 = scmp.ne.s32.totalorder %s101, %s104
      %p110 = scmp.eq.s32.totalorder %s28, 0
      %p111 = por %p109, %p110
      %p112 = scmp.ne.s32.totalorder %s101, %s104
      %p113 = scmp.eq.s32.totalorder %s33, 13
      %p114 = por %p112, %p113
      %p115 = scmp.ne.s32.totalorder %s104, %s105
      %p116 = scmp.eq.s32.totalorder %s33, 0
      %p117 = por %p115, %p116
      %p118 = scmp.ne.s32.totalorder %s104, %s105
      %p119 = scmp.eq.s32.totalorder %s34, 13
      %p120 = por %p118, %p119
      %p122 = scmp.ne.s32.totalorder %s105, %s121
      %p123 = scmp.eq.s32.totalorder %s34, 0
      %p124 = por %p122, %p123
      %s125 = ssub.s32 %s28, %s35
      %p126 = scmp.eq.s32.totalorder %s125, 0
      %s128 = sadd.s32 %s127, 1
      %s129 = scalar_select %p126, %s127, %s128
      %p132 = pneg %p126
      %p133 = scmp.eq.s32.totalorder %s28, 13
      %p134 = por %p132, %p133
      %p135 = scmp.ne.s32.totalorder %s127, %s130
      %p136 = scmp.eq.s32.totalorder %s28, 0
      %p137 = por %p135, %p136
      %p138 = scmp.ne.s32.totalorder %s127, %s130
      %p139 = scmp.eq.s32.totalorder %s33, 13
      %p140 = por %p138, %p139
      %p141 = scmp.ne.s32.totalorder %s130, %s131
      %p142 = scmp.eq.s32.totalorder %s33, 0
      %p143 = por %p141, %p142
      %p144 = scmp.ne.s32.totalorder %s130, %s131
      %p145 = scmp.eq.s32.totalorder %s34, 13
      %p146 = por %p144, %p145
      %p148 = scmp.ne.s32.totalorder %s131, %s147
      %p149 = scmp.eq.s32.totalorder %s34, 0
      %p150 = por %p148, %p149
      %s151 = ssub.s32 %s28, %s35
      %p152 = scmp.eq.s32.totalorder %s151, 0
      %s154 = sadd.s32 %s153, 1
      %s155 = scalar_select %p152, %s153, %s154
      %p158 = pneg %p152
      %p159 = scmp.eq.s32.totalorder %s28, 13
      %p160 = por %p158, %p159
      %p161 = scmp.ne.s32.totalorder %s153, %s156
      %p162 = scmp.eq.s32.totalorder %s28, 0
      %p163 = por %p161, %p162
      %p164 = scmp.ne.s32.totalorder %s153, %s156
      %p165 = scmp.eq.s32.totalorder %s33, 13
      %p166 = por %p164, %p165
      %p167 = scmp.ne.s32.totalorder %s156, %s157
      %p168 = scmp.eq.s32.totalorder %s33, 0
      %p169 = por %p167, %p168
      %p170 = scmp.ne.s32.totalorder %s156, %s157
      %p171 = scmp.eq.s32.totalorder %s34, 13
      %p172 = por %p170, %p171
      %p174 = scmp.ne.s32.totalorder %s157, %s173
      %p175 = scmp.eq.s32.totalorder %s34, 0
      %p176 = por %p174, %p175
      %s177 = ssub.s32 %s28, %s35
      %p178 = scmp.eq.s32.totalorder %s177, 0
      %s180 = sadd.s32 %s179, 1
      %s181 = scalar_select %p178, %s179, %s180
      %p184 = pneg %p178
      %p185 = scmp.eq.s32.totalorder %s28, 13
      %p186 = por %p184, %p185
      %p187 = scmp.ne.s32.totalorder %s179, %s182
      %p188 = scmp.eq.s32.totalorder %s28, 0
      %p189 = por %p187, %p188
      %p190 = scmp.ne.s32.totalorder %s179, %s182
      %p191 = scmp.eq.s32.totalorder %s33, 13
      %p192 = por %p190, %p191
      %p193 = scmp.ne.s32.totalorder %s182, %s183
      %p194 = scmp.eq.s32.totalorder %s33, 0
      %p195 = por %p193, %p194
      %p196 = scmp.ne.s32.totalorder %s182, %s183
      %p197 = scmp.eq.s32.totalorder %s34, 13
      %p198 = por %p196, %p197
      %p200 = scmp.ne.s32.totalorder %s183, %s199
      %p201 = scmp.eq.s32.totalorder %s34, 0
      %p202 = por %p200, %p201
      %s203 = ssub.s32 %s28, %s35
      %p204 = scmp.eq.s32.totalorder %s203, 0
      %s206 = sadd.s32 %s205, 1
      %s207 = scalar_select %p204, %s205, %s206
      %p210 = pneg %p204
      %p211 = scmp.eq.s32.totalorder %s28, 13
      %p212 = por %p210, %p211
      %p213 = scmp.ne.s32.totalorder %s205, %s208
      %p214 = scmp.eq.s32.totalorder %s28, 0
      %p215 = por %p213, %p214
      %p216 = scmp.ne.s32.totalorder %s205, %s208
      %p217 = scmp.eq.s32.totalorder %s33, 13
      %p218 = por %p216, %p217
      %p219 = scmp.ne.s32.totalorder %s208, %s209
      %p220 = scmp.eq.s32.totalorder %s33, 0
      %p221 = por %p219, %p220
      %p222 = scmp.ne.s32.totalorder %s208, %s209
      %p223 = scmp.eq.s32.totalorder %s34, 13
      %p224 = por %p222, %p223
      %p226 = scmp.ne.s32.totalorder %s209, %s225
      %p227 = scmp.eq.s32.totalorder %s34, 0
      %p228 = por %p226, %p227
      %s229 = ssub.s32 %s28, %s35
      %p230 = scmp.eq.s32.totalorder %s229, 0
      %s232 = sadd.s32 %s231, 1
      %s233 = scalar_select %p230, %s231, %s232
      %p236 = pneg %p230
      %p237 = scmp.eq.s32.totalorder %s28, 13
      %p238 = por %p236, %p237
      %p239 = scmp.ne.s32.totalorder %s231, %s234
      %p240 = scmp.eq.s32.totalorder %s28, 0
      %p241 = por %p239, %p240
      %p242 = scmp.ne.s32.totalorder %s231, %s234
      %p243 = scmp.eq.s32.totalorder %s33, 13
      %p244 = por %p242, %p243
      %p245 = scmp.ne.s32.totalorder %s234, %s235
      %p246 = scmp.eq.s32.totalorder %s33, 0
      %p247 = por %p245, %p246
      %p248 = scmp.ne.s32.totalorder %s234, %s235
      %p249 = scmp.eq.s32.totalorder %s34, 13
      %p250 = por %p248, %p249
      %p252 = scmp.ne.s32.totalorder %s235, %s251
      %p253 = scmp.eq.s32.totalorder %s34, 0
      %p254 = por %p252, %p253
      %s256 = sadd.s32 %s255, 1
      %p259 = scmp.eq.s32.totalorder %s28, 13
      %p260 = scmp.ne.s32.totalorder %s255, %s257
      %p261 = scmp.eq.s32.totalorder %s28, 0
      %p262 = por %p260, %p261
      %p263 = scmp.ne.s32.totalorder %s255, %s257
      %p264 = scmp.eq.s32.totalorder %s33, 13
      %p265 = por %p263, %p264
      %p266 = scmp.ne.s32.totalorder %s257, %s258
      %p267 = scmp.eq.s32.totalorder %s33, 0
      %p268 = por %p266, %p267
      %p269 = scmp.ne.s32.totalorder %s257, %s258
      %p270 = scmp.eq.s32.totalorder %s34, 13
      %p271 = por %p269, %p270
      %p273 = scmp.ne.s32.totalorder %s258, %s272
      %p274 = scmp.eq.s32.totalorder %s34, 0
      %p275 = por %p273, %p274
      %p276 = scmp.le.s32.totalorder 1, %s28
      %p277 = scmp.lt.s32.totalorder %s28, 15
      %p278 = pnand %p276, %p277
      %p279 = pneg %p278
      // Predicated region
      $region9: #{part1_forward.1} parent=5 // pred_check
        _
      $region10: #{part1_forward.1} parent=5 // pred_check_branch
        %281 = sbr.rel (%p278) target = $region12
      $region11: #{part1_forward.1} parent=5 // pred_region
        %s282 = ssub.s32 %s28, 1
        // Predicated region
        $region13: #{part1_forward.1} parent=11 // pred_check
          %p283 = pneg %p49
        $region14: #{part1_forward.1} parent=11 // pred_check_branch
          %285 = sbr.rel (%p283) target = $region16
        $region15: #{part1_forward.1} parent=11 // pred_region
          _
        $region16: #{part1_forward.1} parent=11 // pred_fallthru
          _
        // Predicated region
        $region17: #{part1_forward.1} parent=11 // pred_check
          %p286 = pneg %p70
        $region18: #{part1_forward.1} parent=11 // pred_check_branch
          %288 = sbr.rel (%p286) target = $region20
        $region19: #{part1_forward.1} parent=11 // pred_region
          _
        $region20: #{part1_forward.1} parent=11 // pred_fallthru
          _
        // Predicated region
        $region21: #{part1_forward.1} parent=11 // pred_check
          %p289 = pneg %p91
        $region22: #{part1_forward.1} parent=11 // pred_check_branch
          %291 = sbr.rel (%p289) target = $region24
        $region23: #{part1_forward.1} parent=11 // pred_region
          _
        $region24: #{part1_forward.1} parent=11 // pred_fallthru
          _
      $region12: #{part1_forward.1} parent=5 // pred_fallthru
        _
      %p292 = scmp.lt.s32.totalorder %s28, 14
      // Predicated region
      $region25: #{part1_forward.1} parent=5 // pred_check
        %p293 = pneg %p292
      $region26: #{part1_forward.1} parent=5 // pred_check_branch
        %295 = sbr.rel (%p293) target = $region28
      $region27: #{part1_forward.1} parent=5 // pred_region
        // Predicated region
        $region29: #{part1_forward.1} parent=27 // pred_check
          %p296 = pneg %p111
        $region30: #{part1_forward.1} parent=27 // pred_check_branch
          %298 = sbr.rel (%p296) target = $region32
        $region31: #{part1_forward.1} parent=27 // pred_region
          %s299 = sand.u32 %s101, 1
          %s300 = scalar_lea.sflag [#allocation3], %s299
          %s301 = sand.u32 %s101, 1
          %s302 = smul.addr %s301, 2
          %s303 = scalar_lea.vmem [#allocation2], %s302
          %s305 = ssub.s32 32, 32
          %306 = vsyncadd %s300, %s305
          %s307 = smul.addr %s28, 2
          %s308 = smul.addr %s307, 16
          %s309 = scalar_lea.hbm %s3, %s308
          %s311 = sshll.u32 %s303, 4
          %s312 = int_to_ptr.vmem [resolvable:$true] %s311
          %314 = dma.hbm_to_vmem [thread:$0]  %s309, 32, %s312, %s300
        $region32: #{part1_forward.1} parent=27 // pred_fallthru
          _
        // Predicated region
        $region33: #{part1_forward.1} parent=27 // pred_check
          %p315 = pneg %p137
        $region34: #{part1_forward.1} parent=27 // pred_check_branch
          %317 = sbr.rel (%p315) target = $region36
        $region35: #{part1_forward.1} parent=27 // pred_region
          %s318 = sand.u32 %s28, 1
          %s319 = scalar_lea.sflag [#allocation6], %s318
          %s320 = sand.u32 %s127, 1
          %s321 = smul.addr %s320, 768
          %s322 = scalar_lea.vmem [#allocation5], %s321
          %s324 = ssub.s32 12288, 12288
          %325 = vsyncadd %s319, %s324
          %s326 = smul.addr %s28, 192
          %s327 = smul.addr %s326, 64
          %s328 = scalar_lea.hbm %s4, %s327
          %s329 = sshll.u32 %s322, 4
          %s330 = int_to_ptr.vmem [resolvable:$true] %s329
          %335 = dma.hbm_to_vmem [thread:$0]  %s328, 12288, %s330, %s319, 384, 384, 24
        $region36: #{part1_forward.1} parent=27 // pred_fallthru
          _
        // Predicated region
        $region37: #{part1_forward.1} parent=27 // pred_check
          %p336 = pneg %p163
        $region38: #{part1_forward.1} parent=27 // pred_check_branch
          %338 = sbr.rel (%p336) target = $region40
        $region39: #{part1_forward.1} parent=27 // pred_region
          %s339 = sand.u32 %s28, 1
          %s340 = scalar_lea.sflag [#allocation6], %s339
          %s341 = sand.u32 %s153, 1
          %s342 = smul.addr %s341, 256
          %s343 = scalar_lea.vmem [#allocation7], %s342
          %s345 = ssub.s32 4096, 4096
          %346 = vsyncadd %s340, %s345
          %s347 = smul.addr %s28, 64
          %s348 = smul.addr %s347, 64
          %s349 = scalar_lea.hbm %s5, %s348
          %s350 = sshll.u32 %s343, 4
          %s351 = int_to_ptr.vmem [resolvable:$true] %s350
          %356 = dma.hbm_to_vmem [thread:$0]  %s349, 4096, %s351, %s340, 128, 128, 8
        $region40: #{part1_forward.1} parent=27 // pred_fallthru
          _
        // Predicated region
        $region41: #{part1_forward.1} parent=27 // pred_check
          %p357 = pneg %p189
        $region42: #{part1_forward.1} parent=27 // pred_check_branch
          %359 = sbr.rel (%p357) target = $region44
        $region43: #{part1_forward.1} parent=27 // pred_region
          %s360 = sand.u32 %s28, 1
          %s361 = scalar_lea.sflag [#allocation9], %s360
          %s362 = sand.u32 %s179, 1
          %s363 = smul.addr %s362, 2
          %s364 = scalar_lea.vmem [#allocation8], %s363
          %s366 = ssub.s32 32, 32
          %367 = vsyncadd %s361, %s366
          %s368 = smul.addr %s28, 2
          %s369 = smul.addr %s368, 16
          %s370 = scalar_lea.hbm %s6, %s369
          %s372 = sshll.u32 %s364, 4
          %s373 = int_to_ptr.vmem [resolvable:$true] %s372
          %375 = dma.hbm_to_vmem [thread:$0]  %s370, 32, %s373, %s361
        $region44: #{part1_forward.1} parent=27 // pred_fallthru
          _
        // Predicated region
        $region45: #{part1_forward.1} parent=27 // pred_check
          %p376 = pneg %p215
        $region46: #{part1_forward.1} parent=27 // pred_check_branch
          %378 = sbr.rel (%p376) target = $region48
        $region47: #{part1_forward.1} parent=27 // pred_region
          %s379 = sand.u32 %s28, 1
          %s380 = scalar_lea.sflag [#allocation9], %s379
          %s381 = sand.u32 %s205, 1
          %s382 = smul.addr %s381, 1024
          %s383 = scalar_lea.vmem [#allocation10], %s382
          %s385 = ssub.s32 16384, 16384
          %386 = vsyncadd %s380, %s385
          %s387 = smul.addr %s28, 256
          %s388 = smul.addr %s387, 64
          %s389 = scalar_lea.hbm %s7, %s388
          %s390 = sshll.u32 %s383, 4
          %s391 = int_to_ptr.vmem [resolvable:$true] %s390
          %396 = dma.hbm_to_vmem [thread:$0]  %s389, 16384, %s391, %s380, 512, 512, 32
        $region48: #{part1_forward.1} parent=27 // pred_fallthru
          _
        // Predicated region
        $region49: #{part1_forward.1} parent=27 // pred_check
          %p397 = pneg %p241
        $region50: #{part1_forward.1} parent=27 // pred_check_branch
          %399 = sbr.rel (%p397) target = $region52
        $region51: #{part1_forward.1} parent=27 // pred_region
          %s400 = sand.u32 %s231, 1
          %s401 = scalar_lea.sflag [#allocation12], %s400
          %s402 = sand.u32 %s231, 1
          %s403 = smul.addr %s402, 512
          %s404 = scalar_lea.vmem [#allocation11], %s403
          %s406 = ssub.s32 8192, 8192
          %407 = vsyncadd %s401, %s406
          %s408 = smul.addr %s28, 128
          %s409 = smul.addr %s408, 64
          %s410 = scalar_lea.hbm %s8, %s409
          %s411 = sshll.u32 %s404, 4
          %s412 = int_to_ptr.vmem [resolvable:$true] %s411
          %417 = dma.hbm_to_vmem [thread:$0]  %s410, 8192, %s412, %s401, 128, 128, 8
        $region52: #{part1_forward.1} parent=27 // pred_fallthru
          _
      $region28: #{part1_forward.1} parent=5 // pred_fallthru
        _
      %p418 = scmp.le.s32.totalorder 1, %s28
      %p419 = scmp.lt.s32.totalorder %s28, 15
      %p420 = pnand %p418, %p419
      %p421 = pneg %p420
      // Predicated region
      $region53: #{part1_forward.1} parent=5 // pred_check
        _
      $region54: #{part1_forward.1} parent=5 // pred_check_branch
        %423 = sbr.rel (%p420) target = $region56
      $region55: #{part1_forward.1} parent=5 // pred_region
        %s424 = ssub.s32 %s28, 1
        %s425 = sand.u32 %s104, 1
        %s426 = scalar_lea.sflag [#allocation3], %s425
        %s427 = sand.u32 %s104, 1
        %s428 = smul.addr %s427, 2
        %s429 = scalar_lea.vmem [#allocation2], %s428
        // Predicated region
        $region57: #{part1_forward.1} parent=55 // pred_check
          %p430 = pneg %p117
        $region58: #{part1_forward.1} parent=55 // pred_check_branch
          %432 = sbr.rel (%p430) target = $region60
        $region59: #{part1_forward.1} parent=55 // pred_region
          %433 = dma.done %s426, 32
        $region60: #{part1_forward.1} parent=55 // pred_fallthru
          _
        %s434 = sand.u32 %s33, 1
        %s435 = scalar_lea.sflag [#allocation6], %s434
        %s436 = sand.u32 %s130, 1
        %s437 = smul.addr %s436, 768
        %s438 = scalar_lea.vmem [#allocation5], %s437
        // Predicated region
        $region61: #{part1_forward.1} parent=55 // pred_check
          %p439 = pneg %p143
        $region62: #{part1_forward.1} parent=55 // pred_check_branch
          %441 = sbr.rel (%p439) target = $region64
        $region63: #{part1_forward.1} parent=55 // pred_region
          %442 = dma.done %s435, 12288
        $region64: #{part1_forward.1} parent=55 // pred_fallthru
          _
        %s443 = sand.u32 %s33, 1
        %s444 = scalar_lea.sflag [#allocation6], %s443
        %s445 = sand.u32 %s156, 1
        %s446 = smul.addr %s445, 256
        %s447 = scalar_lea.vmem [#allocation7], %s446
        // Predicated region
        $region65: #{part1_forward.1} parent=55 // pred_check
          %p448 = pneg %p169
        $region66: #{part1_forward.1} parent=55 // pred_check_branch
          %450 = sbr.rel (%p448) target = $region68
        $region67: #{part1_forward.1} parent=55 // pred_region
          %451 = dma.done %s444, 4096
        $region68: #{part1_forward.1} parent=55 // pred_fallthru
          _
        %s452 = sand.u32 %s33, 1
        %s453 = scalar_lea.sflag [#allocation9], %s452
        %s454 = sand.u32 %s182, 1
        %s455 = smul.addr %s454, 2
        %s456 = scalar_lea.vmem [#allocation8], %s455
        // Predicated region
        $region69: #{part1_forward.1} parent=55 // pred_check
          %p457 = pneg %p195
        $region70: #{part1_forward.1} parent=55 // pred_check_branch
          %459 = sbr.rel (%p457) target = $region72
        $region71: #{part1_forward.1} parent=55 // pred_region
          %460 = dma.done %s453, 32
        $region72: #{part1_forward.1} parent=55 // pred_fallthru
          _
        %s461 = sand.u32 %s33, 1
        %s462 = scalar_lea.sflag [#allocation9], %s461
        %s463 = sand.u32 %s208, 1
        %s464 = smul.addr %s463, 1024
        %s465 = scalar_lea.vmem [#allocation10], %s464
        // Predicated region
        $region73: #{part1_forward.1} parent=55 // pred_check
          %p466 = pneg %p221
        $region74: #{part1_forward.1} parent=55 // pred_check_branch
          %468 = sbr.rel (%p466) target = $region76
        $region75: #{part1_forward.1} parent=55 // pred_region
          %469 = dma.done %s462, 16384
        $region76: #{part1_forward.1} parent=55 // pred_fallthru
          _
        %s470 = sand.u32 %s234, 1
        %s471 = scalar_lea.sflag [#allocation12], %s470
        %s472 = sand.u32 %s234, 1
        %s473 = smul.addr %s472, 512
        %s474 = scalar_lea.vmem [#allocation11], %s473
        // Predicated region
        $region77: #{part1_forward.1} parent=55 // pred_check
          %p475 = pneg %p247
        $region78: #{part1_forward.1} parent=55 // pred_check_branch
          %477 = sbr.rel (%p475) target = $region80
        $region79: #{part1_forward.1} parent=55 // pred_region
          %478 = dma.done %s471, 8192
        $region80: #{part1_forward.1} parent=55 // pred_fallthru
          _
        %p479 = pneg %p49
        %p480 = pneg %p46
        %p481 = pneg %p70
        %p482 = pneg %p67
        %p483 = pneg %p91
        %p484 = pneg %p88
        %s485 = sand.u32 %s104, 1
        %s486 = scalar_lea.sflag [#allocation3], %s485
        %s487 = sand.u32 %s104, 1
        %s488 = smul.addr %s487, 2
        %s489 = scalar_lea.vmem [#allocation2], %s488
        %p490 = pneg %p117
        %p491 = pneg %p114
        %s492 = sand.u32 %s33, 1
        %s493 = scalar_lea.sflag [#allocation6], %s492
        %s494 = sand.u32 %s130, 1
        %s495 = smul.addr %s494, 768
        %s496 = scalar_lea.vmem [#allocation5], %s495
        %p497 = pneg %p143
        %p498 = pneg %p140
        %s499 = sand.u32 %s33, 1
        %s500 = scalar_lea.sflag [#allocation6], %s499
        %s501 = sand.u32 %s156, 1
        %s502 = smul.addr %s501, 256
        %s503 = scalar_lea.vmem [#allocation7], %s502
        %p504 = pneg %p169
        %p505 = pneg %p166
        %s506 = sand.u32 %s33, 1
        %s507 = scalar_lea.sflag [#allocation9], %s506
        %s508 = sand.u32 %s182, 1
        %s509 = smul.addr %s508, 2
        %s510 = scalar_lea.vmem [#allocation8], %s509
        %p511 = pneg %p195
        %p512 = pneg %p192
        %s513 = sand.u32 %s33, 1
        %s514 = scalar_lea.sflag [#allocation9], %s513
        %s515 = sand.u32 %s208, 1
        %s516 = smul.addr %s515, 1024
        %s517 = scalar_lea.vmem [#allocation10], %s516
        %p518 = pneg %p221
        %p519 = pneg %p218
        %s520 = sand.u32 %s234, 1
        %s521 = scalar_lea.sflag [#allocation12], %s520
        %s522 = sand.u32 %s234, 1
        %s523 = smul.addr %s522, 512
        %s524 = scalar_lea.vmem [#allocation11], %s523
        %p525 = pneg %p247
        %p526 = pneg %p244
        %p527 = pneg %p268
        %p528 = pneg %p265
        %p530 = scmp.eq.s32.totalorder %s33, 0
        // Predicated region
        $region81: #{part1_forward.1} parent=55 // pred_check
          %p531 = pneg %p530
        $region82: #{part1_forward.1} parent=55 // pred_check_branch
          %533 = sbr.rel (%p531) target = $region84
        $region83: #{part1_forward.1} parent=55 // pred_region
          %v534 = vld [vmem:[%s0] sm:$0xff]
          %v535 = vld [vmem:[%s0 + $0x8] sm:$0xff]
          %v536 = vld [vmem:[%s0 + $0x10] sm:$0xff]
          %v537 = vld [vmem:[%s0 + $0x18] sm:$0xff]
          %538 = vst [vmem:[#allocation13] sm:$0xff] %v534
          %539 = vst [vmem:[#allocation13 + $0x8] sm:$0xff] %v535
          %540 = vst [vmem:[#allocation13 + $0x10] sm:$0xff] %v536
          %541 = vst [vmem:[#allocation13 + $0x18] sm:$0xff] %v537
        $region84: #{part1_forward.1} parent=55 // pred_fallthru
          _
        %v542 = vld [vmem:[#allocation13] sm:$0xff]
        %v543 = vld [vmem:[#allocation13 + $0x8] sm:$0xff]
        %v544 = vld [vmem:[#allocation13 + $0x10] sm:$0xff]
        %v545 = vld [vmem:[#allocation13 + $0x18] sm:$0xff]
        %v546 = vld [vmem:[%s1] sm:$0xff]
        %v547 = vld [vmem:[%s2] sm:$0xff]
        %v548 = vlaneseq
        %v549 = vshrl.u32 %v548, 7
        %v550 = vlaneseq
        %v551 = vand.u32 %v550, 127
        %vm552 = vcmp.gt.s32.totalorder %v551, %v549
        %v553 = vsel %vm552, -1e+30, 0.0
        %v554 = vmul.f32 %v542, %v542
        %v555 = vmul.f32 %v543, %v543
        %v556 = vmul.f32 %v544, %v544
        %v557 = vmul.f32 %v545, %v545
        %v558 = vadd.f32 %v554, %v555
        %559 = vadd.xlane.f32.xlu0 %v558
        %v560 = vpop.xlane.xlu0 %559
        %v561 = vadd.f32 %v556, %v557
        %562 = vadd.xlane.f32.xlu0 %v561
        %v563 = vpop.xlane.xlu0 %562
        %v564 = vrcp.pop 256.0
        %v565 = vmul.f32 %v560, %v564
        %v566 = vmul.f32 %v563, %v564
        %v567 = vadd.f32 %v565, 1e-06
        %v568 = vadd.f32 %v566, 1e-06
        %v569 = vrsqrt.pop %v567
        %v570 = vrsqrt.pop %v568
        %v571 = vmul.f32 %v542, %v569
        %v572 = vmul.f32 %v543, %v569
        %v573 = vmul.f32 %v544, %v570
        %v574 = vmul.f32 %v545, %v570
        %v575 = vld [vmem:[%s429] sm:$0x3]
        %v577 = vlaneseq
        %v578 = vshrl.u32 %v577, 7
        %v579 = vsub.s32 0, %v578
        %v580 = vrot.slane %v575, %v579
        %v581 = vlaneseq
        %v582 = vshrl.u32 %v581, 7
        %v583 = vsub.s32 1, %v582
        %v584 = vrot.slane %v575, %v583
        %v587 = vmul.f32 %v571, %v580
        %v588 = vmul.f32 %v572, %v584
        %v589 = vmul.f32 %v573, %v580
        %v590 = vmul.f32 %v574, %v584
        %v591 = vpack.c.bf16 %v589, %v587
        %v592 = vpack.c.bf16 %v590, %v588
        %v593 = vld [vmem:[%s438] sm:$0xff]
        %v594 = vld [vmem:[%s438 + $0x8] sm:$0xff]
        %v595 = vld [vmem:[%s438 + $0x10] sm:$0xff]
        %v596 = vld [vmem:[%s438 + $0x18] sm:$0xff]
        %v597 = vld [vmem:[%s438 + $0x20] sm:$0xff]
        %v598 = vld [vmem:[%s438 + $0x28] sm:$0xff]
        %v599 = vld [vmem:[%s438 + $0x30] sm:$0xff]
        %v600 = vld [vmem:[%s438 + $0x38] sm:$0xff]
        %v601 = vld [vmem:[%s438 + $0x40] sm:$0xff]
        %v602 = vld [vmem:[%s438 + $0x48] sm:$0xff]
        %v603 = vld [vmem:[%s438 + $0x50] sm:$0xff]
        %v604 = vld [vmem:[%s438 + $0x58] sm:$0xff]
        %v605 = vld [vmem:[%s438 + $0x60] sm:$0xff]
        %v606 = vld [vmem:[%s438 + $0x68] sm:$0xff]
        %v607 = vld [vmem:[%s438 + $0x70] sm:$0xff]
        %v608 = vld [vmem:[%s438 + $0x78] sm:$0xff]
        %v609 = vld [vmem:[%s438 + $0x80] sm:$0xff]
        %v610 = vld [vmem:[%s438 + $0x88] sm:$0xff]
        %v611 = vld [vmem:[%s438 + $0x90] sm:$0xff]
        %v612 = vld [vmem:[%s438 + $0x98] sm:$0xff]
        %v613 = vld [vmem:[%s438 + $0xa0] sm:$0xff]
        %v614 = vld [vmem:[%s438 + $0xa8] sm:$0xff]
        %v615 = vld [vmem:[%s438 + $0xb0] sm:$0xff]
        %v616 = vld [vmem:[%s438 + $0xb8] sm:$0xff]
        %v617 = vld [vmem:[%s438 + $0xc0] sm:$0xff]
        %v618 = vld [vmem:[%s438 + $0xc8] sm:$0xff]
        %v619 = vld [vmem:[%s438 + $0xd0] sm:$0xff]
        %v620 = vld [vmem:[%s438 + $0xd8] sm:$0xff]
        %v621 = vld [vmem:[%s438 + $0xe0] sm:$0xff]
        %v622 = vld [vmem:[%s438 + $0xe8] sm:$0xff]
        %v623 = vld [vmem:[%s438 + $0xf0] sm:$0xff]
        %v624 = vld [vmem:[%s438 + $0xf8] sm:$0xff]
        %v625 = vld [vmem:[%s438 + $0x100] sm:$0xff]
        %v626 = vld [vmem:[%s438 + $0x108] sm:$0xff]
        %v627 = vld [vmem:[%s438 + $0x110] sm:$0xff]
        %v628 = vld [vmem:[%s438 + $0x118] sm:$0xff]
        %v629 = vld [vmem:[%s438 + $0x120] sm:$0xff]
        %v630 = vld [vmem:[%s438 + $0x128] sm:$0xff]
        %v631 = vld [vmem:[%s438 + $0x130] sm:$0xff]
        %v632 = vld [vmem:[%s438 + $0x138] sm:$0xff]
        %v633 = vld [vmem:[%s438 + $0x140] sm:$0xff]
        %v634 = vld [vmem:[%s438 + $0x148] sm:$0xff]
        %v635 = vld [vmem:[%s438 + $0x150] sm:$0xff]
        %v636 = vld [vmem:[%s438 + $0x158] sm:$0xff]
        %v637 = vld [vmem:[%s438 + $0x160] sm:$0xff]
        %v638 = vld [vmem:[%s438 + $0x168] sm:$0xff]
        %v639 = vld [vmem:[%s438 + $0x170] sm:$0xff]
        %v640 = vld [vmem:[%s438 + $0x178] sm:$0xff]
        %v641 = vld [vmem:[%s438 + $0x180] sm:$0xff]
        %v642 = vld [vmem:[%s438 + $0x188] sm:$0xff]
        %v643 = vld [vmem:[%s438 + $0x190] sm:$0xff]
        %v644 = vld [vmem:[%s438 + $0x198] sm:$0xff]
        %v645 = vld [vmem:[%s438 + $0x1a0] sm:$0xff]
        %v646 = vld [vmem:[%s438 + $0x1a8] sm:$0xff]
        %v647 = vld [vmem:[%s438 + $0x1b0] sm:$0xff]
        %v648 = vld [vmem:[%s438 + $0x1b8] sm:$0xff]
        %v649 = vld [vmem:[%s438 + $0x1c0] sm:$0xff]
        %v650 = vld [vmem:[%s438 + $0x1c8] sm:$0xff]
        %v651 = vld [vmem:[%s438 + $0x1d0] sm:$0xff]
        %v652 = vld [vmem:[%s438 + $0x1d8] sm:$0xff]
        %v653 = vld [vmem:[%s438 + $0x1e0] sm:$0xff]
        %v654 = vld [vmem:[%s438 + $0x1e8] sm:$0xff]
        %v655 = vld [vmem:[%s438 + $0x1f0] sm:$0xff]
        %v656 = vld [vmem:[%s438 + $0x1f8] sm:$0xff]
        %v657 = vld [vmem:[%s438 + $0x200] sm:$0xff]
        %v658 = vld [vmem:[%s438 + $0x208] sm:$0xff]
        %v659 = vld [vmem:[%s438 + $0x210] sm:$0xff]
        %v660 = vld [vmem:[%s438 + $0x218] sm:$0xff]
        %v661 = vld [vmem:[%s438 + $0x220] sm:$0xff]
        %v662 = vld [vmem:[%s438 + $0x228] sm:$0xff]
        %v663 = vld [vmem:[%s438 + $0x230] sm:$0xff]
        %v664 = vld [vmem:[%s438 + $0x238] sm:$0xff]
        %v665 = vld [vmem:[%s438 + $0x240] sm:$0xff]
        %v666 = vld [vmem:[%s438 + $0x248] sm:$0xff]
        %v667 = vld [vmem:[%s438 + $0x250] sm:$0xff]
        %v668 = vld [vmem:[%s438 + $0x258] sm:$0xff]
        %v669 = vld [vmem:[%s438 + $0x260] sm:$0xff]
        %v670 = vld [vmem:[%s438 + $0x268] sm:$0xff]
        %v671 = vld [vmem:[%s438 + $0x270] sm:$0xff]
        %v672 = vld [vmem:[%s438 + $0x278] sm:$0xff]
        %v673 = vld [vmem:[%s438 + $0x280] sm:$0xff]
        %v674 = vld [vmem:[%s438 + $0x288] sm:$0xff]
        %v675 = vld [vmem:[%s438 + $0x290] sm:$0xff]
        %v676 = vld [vmem:[%s438 + $0x298] sm:$0xff]
        %v677 = vld [vmem:[%s438 + $0x2a0] sm:$0xff]
        %v678 = vld [vmem:[%s438 + $0x2a8] sm:$0xff]
        %v679 = vld [vmem:[%s438 + $0x2b0] sm:$0xff]
        %v680 = vld [vmem:[%s438 + $0x2b8] sm:$0xff]
        %v681 = vld [vmem:[%s438 + $0x2c0] sm:$0xff]
        %v682 = vld [vmem:[%s438 + $0x2c8] sm:$0xff]
        %v683 = vld [vmem:[%s438 + $0x2d0] sm:$0xff]
        %v684 = vld [vmem:[%s438 + $0x2d8] sm:$0xff]
        %v685 = vld [vmem:[%s438 + $0x2e0] sm:$0xff]
        %v686 = vld [vmem:[%s438 + $0x2e8] sm:$0xff]
        %v687 = vld [vmem:[%s438 + $0x2f0] sm:$0xff]
        %v688 = vld [vmem:[%s438 + $0x2f8] sm:$0xff]
        %v785 = vunpack.c.l.b16 %v593
        %v786 = vunpack.c.h.b16 %v593
        %v787 = vunpack.c.l.b16 %v594
        %v788 = vunpack.c.h.b16 %v594
        %v789 = vunpack.c.l.b16 %v595
        %v790 = vunpack.c.h.b16 %v595
        %v791 = vunpack.c.l.b16 %v596
        %v792 = vunpack.c.h.b16 %v596
        %v793 = vunpack.c.l.b16 %v597
        %v794 = vunpack.c.h.b16 %v597
        %v795 = vunpack.c.l.b16 %v598
        %v796 = vunpack.c.h.b16 %v598
        %v797 = vunpack.c.l.b16 %v599
        %v798 = vunpack.c.h.b16 %v599
        %v799 = vunpack.c.l.b16 %v600
        %v800 = vunpack.c.h.b16 %v600
        %v801 = vunpack.c.l.b16 %v601
        %v802 = vunpack.c.h.b16 %v601
        %v803 = vunpack.c.l.b16 %v602
        %v804 = vunpack.c.h.b16 %v602
        %v805 = vunpack.c.l.b16 %v603
        %v806 = vunpack.c.h.b16 %v603
        %v807 = vunpack.c.l.b16 %v604
        %v808 = vunpack.c.h.b16 %v604
        %v809 = vunpack.c.l.b16 %v605
        %v810 = vunpack.c.h.b16 %v605
        %v811 = vunpack.c.l.b16 %v606
        %v812 = vunpack.c.h.b16 %v606
        %v813 = vunpack.c.l.b16 %v607
        %v814 = vunpack.c.h.b16 %v607
        %v815 = vunpack.c.l.b16 %v608
        %v816 = vunpack.c.h.b16 %v608
        %v817 = vunpack.c.l.b16 %v609
        %v818 = vunpack.c.h.b16 %v609
        %v819 = vunpack.c.l.b16 %v610
        %v820 = vunpack.c.h.b16 %v610
        %v821 = vunpack.c.l.b16 %v611
        %v822 = vunpack.c.h.b16 %v611
        %v823 = vunpack.c.l.b16 %v612
        %v824 = vunpack.c.h.b16 %v612
        %v825 = vunpack.c.l.b16 %v613
        %v826 = vunpack.c.h.b16 %v613
        %v827 = vunpack.c.l.b16 %v614
        %v828 = vunpack.c.h.b16 %v614
        %v829 = vunpack.c.l.b16 %v615
        %v830 = vunpack.c.h.b16 %v615
        %v831 = vunpack.c.l.b16 %v616
        %v832 = vunpack.c.h.b16 %v616
        %v833 = vunpack.c.l.b16 %v617
        %v834 = vunpack.c.h.b16 %v617
        %v835 = vunpack.c.l.b16 %v618
        %v836 = vunpack.c.h.b16 %v618
        %v837 = vunpack.c.l.b16 %v619
        %v838 = vunpack.c.h.b16 %v619
        %v839 = vunpack.c.l.b16 %v620
        %v840 = vunpack.c.h.b16 %v620
        %v841 = vunpack.c.l.b16 %v621
        %v842 = vunpack.c.h.b16 %v621
        %v843 = vunpack.c.l.b16 %v622
        %v844 = vunpack.c.h.b16 %v622
        %v845 = vunpack.c.l.b16 %v623
        %v846 = vunpack.c.h.b16 %v623
        %v847 = vunpack.c.l.b16 %v624
        %v848 = vunpack.c.h.b16 %v624
        %v849 = vunpack.c.l.b16 %v625
        %v850 = vunpack.c.h.b16 %v625
        %v851 = vunpack.c.l.b16 %v626
        %v852 = vunpack.c.h.b16 %v626
        %v853 = vunpack.c.l.b16 %v627
        %v854 = vunpack.c.h.b16 %v627
        %v855 = vunpack.c.l.b16 %v628
        %v856 = vunpack.c.h.b16 %v628
        %v857 = vunpack.c.l.b16 %v629
        %v858 = vunpack.c.h.b16 %v629
        %v859 = vunpack.c.l.b16 %v630
        %v860 = vunpack.c.h.b16 %v630
        %v861 = vunpack.c.l.b16 %v631
        %v862 = vunpack.c.h.b16 %v631
        %v863 = vunpack.c.l.b16 %v632
        %v864 = vunpack.c.h.b16 %v632
        %v865 = vunpack.c.l.b16 %v633
        %v866 = vunpack.c.h.b16 %v633
        %v867 = vunpack.c.l.b16 %v634
        %v868 = vunpack.c.h.b16 %v634
        %v869 = vunpack.c.l.b16 %v635
        %v870 = vunpack.c.h.b16 %v635
        %v871 = vunpack.c.l.b16 %v636
        %v872 = vunpack.c.h.b16 %v636
        %v873 = vunpack.c.l.b16 %v637
        %v874 = vunpack.c.h.b16 %v637
        %v875 = vunpack.c.l.b16 %v638
        %v876 = vunpack.c.h.b16 %v638
        %v877 = vunpack.c.l.b16 %v639
        %v878 = vunpack.c.h.b16 %v639
        %v879 = vunpack.c.l.b16 %v640
        %v880 = vunpack.c.h.b16 %v640
        %v881 = vunpack.c.l.b16 %v641
        %v882 = vunpack.c.h.b16 %v641
        %v883 = vunpack.c.l.b16 %v642
        %v884 = vunpack.c.h.b16 %v642
        %v885 = vunpack.c.l.b16 %v643
        %v886 = vunpack.c.h.b16 %v643
        %v887 = vunpack.c.l.b16 %v644
        %v888 = vunpack.c.h.b16 %v644
        %v889 = vunpack.c.l.b16 %v645
        %v890 = vunpack.c.h.b16 %v645
        %v891 = vunpack.c.l.b16 %v646
        %v892 = vunpack.c.h.b16 %v646
        %v893 = vunpack.c.l.b16 %v647
        %v894 = vunpack.c.h.b16 %v647
        %v895 = vunpack.c.l.b16 %v648
        %v896 = vunpack.c.h.b16 %v648
        %v897 = vunpack.c.l.b16 %v649
        %v898 = vunpack.c.h.b16 %v649
        %v899 = vunpack.c.l.b16 %v650
        %v900 = vunpack.c.h.b16 %v650
        %v901 = vunpack.c.l.b16 %v651
        %v902 = vunpack.c.h.b16 %v651
        %v903 = vunpack.c.l.b16 %v652
        %v904 = vunpack.c.h.b16 %v652
        %v905 = vunpack.c.l.b16 %v653
        %v906 = vunpack.c.h.b16 %v653
        %v907 = vunpack.c.l.b16 %v654
        %v908 = vunpack.c.h.b16 %v654
        %v909 = vunpack.c.l.b16 %v655
        %v910 = vunpack.c.h.b16 %v655
        %v911 = vunpack.c.l.b16 %v656
        %v912 = vunpack.c.h.b16 %v656
        %v913 = vunpack.c.l.b16 %v657
        %v914 = vunpack.c.h.b16 %v657
        %v915 = vunpack.c.l.b16 %v658
        %v916 = vunpack.c.h.b16 %v658
        %v917 = vunpack.c.l.b16 %v659
        %v918 = vunpack.c.h.b16 %v659
        %v919 = vunpack.c.l.b16 %v660
        %v920 = vunpack.c.h.b16 %v660
        %v921 = vunpack.c.l.b16 %v661
        %v922 = vunpack.c.h.b16 %v661
        %v923 = vunpack.c.l.b16 %v662
        %v924 = vunpack.c.h.b16 %v662
        %v925 = vunpack.c.l.b16 %v663
        %v926 = vunpack.c.h.b16 %v663
        %v927 = vunpack.c.l.b16 %v664
        %v928 = vunpack.c.h.b16 %v664
        %v929 = vunpack.c.l.b16 %v665
        %v930 = vunpack.c.h.b16 %v665
        %v931 = vunpack.c.l.b16 %v666
        %v932 = vunpack.c.h.b16 %v666
        %v933 = vunpack.c.l.b16 %v667
        %v934 = vunpack.c.h.b16 %v667
        %v935 = vunpack.c.l.b16 %v668
        %v936 = vunpack.c.h.b16 %v668
        %v937 = vunpack.c.l.b16 %v669
        %v938 = vunpack.c.h.b16 %v669
        %v939 = vunpack.c.l.b16 %v670
        %v940 = vunpack.c.h.b16 %v670
        %v941 = vunpack.c.l.b16 %v671
        %v942 = vunpack.c.h.b16 %v671
        %v943 = vunpack.c.l.b16 %v672
        %v944 = vunpack.c.h.b16 %v672
        %v945 = vunpack.c.l.b16 %v673
        %v946 = vunpack.c.h.b16 %v673
        %v947 = vunpack.c.l.b16 %v674
        %v948 = vunpack.c.h.b16 %v674
        %v949 = vunpack.c.l.b16 %v675
        %v950 = vunpack.c.h.b16 %v675
        %v951 = vunpack.c.l.b16 %v676
        %v952 = vunpack.c.h.b16 %v676
        %v953 = vunpack.c.l.b16 %v677
        %v954 = vunpack.c.h.b16 %v677
        %v955 = vunpack.c.l.b16 %v678
        %v956 = vunpack.c.h.b16 %v678
        %v957 = vunpack.c.l.b16 %v679
        %v958 = vunpack.c.h.b16 %v679
        %v959 = vunpack.c.l.b16 %v680
        %v960 = vunpack.c.h.b16 %v680
        %v961 = vunpack.c.l.b16 %v681
        %v962 = vunpack.c.h.b16 %v681
        %v963 = vunpack.c.l.b16 %v682
        %v964 = vunpack.c.h.b16 %v682
        %v965 = vunpack.c.l.b16 %v683
        %v966 = vunpack.c.h.b16 %v683
        %v967 = vunpack.c.l.b16 %v684
        %v968 = vunpack.c.h.b16 %v684
        %v969 = vunpack.c.l.b16 %v685
        %v970 = vunpack.c.h.b16 %v685
        %v971 = vunpack.c.l.b16 %v686
        %v972 = vunpack.c.h.b16 %v686
        %v973 = vunpack.c.l.b16 %v687
        %v974 = vunpack.c.h.b16 %v687
        %v975 = vunpack.c.l.b16 %v688
        %v976 = vunpack.c.h.b16 %v688
        %v977 = vpack.c.b16 %v791, %v785
        %v978 = vpack.c.b16 %v792, %v786
        %v979 = vpack.c.b16 %v793, %v787
        %v980 = vpack.c.b16 %v794, %v788
        %v981 = vpack.c.b16 %v795, %v789
        %v982 = vpack.c.b16 %v796, %v790
        %v983 = vpack.c.b16 %v803, %v797
        %v984 = vpack.c.b16 %v804, %v798
        %v985 = vpack.c.b16 %v805, %v799
        %v986 = vpack.c.b16 %v806, %v800
        %v987 = vpack.c.b16 %v807, %v801
        %v988 = vpack.c.b16 %v808, %v802
        %v989 = vpack.c.b16 %v815, %v809
        %v990 = vpack.c.b16 %v816, %v810
        %v991 = vpack.c.b16 %v817, %v811
        %v992 = vpack.c.b16 %v818, %v812
        %v993 = vpack.c.b16 %v819, %v813
        %v994 = vpack.c.b16 %v820, %v814
        %v995 = vpack.c.b16 %v827, %v821
        %v996 = vpack.c.b16 %v828, %v822
        %v997 = vpack.c.b16 %v829, %v823
        %v998 = vpack.c.b16 %v830, %v824
        %v999 = vpack.c.b16 %v831, %v825
        %v1000 = vpack.c.b16 %v832, %v826
        %v1001 = vpack.c.b16 %v839, %v833
        %v1002 = vpack.c.b16 %v840, %v834
        %v1003 = vpack.c.b16 %v841, %v835
        %v1004 = vpack.c.b16 %v842, %v836
        %v1005 = vpack.c.b16 %v843, %v837
        %v1006 = vpack.c.b16 %v844, %v838
        %v1007 = vpack.c.b16 %v851, %v845
        %v1008 = vpack.c.b16 %v852, %v846
        %v1009 = vpack.c.b16 %v853, %v847
        %v1010 = vpack.c.b16 %v854, %v848
        %v1011 = vpack.c.b16 %v855, %v849
        %v1012 = vpack.c.b16 %v856, %v850
        %v1013 = vpack.c.b16 %v863, %v857
        %v1014 = vpack.c.b16 %v864, %v858
        %v1015 = vpack.c.b16 %v865, %v859
        %v1016 = vpack.c.b16 %v866, %v860
        %v1017 = vpack.c.b16 %v867, %v861
        %v1018 = vpack.c.b16 %v868, %v862
        %v1019 = vpack.c.b16 %v875, %v869
        %v1020 = vpack.c.b16 %v876, %v870
        %v1021 = vpack.c.b16 %v877, %v871
        %v1022 = vpack.c.b16 %v878, %v872
        %v1023 = vpack.c.b16 %v879, %v873
        %v1024 = vpack.c.b16 %v880, %v874
        %v1025 = vpack.c.b16 %v887, %v881
        %v1026 = vpack.c.b16 %v888, %v882
        %v1027 = vpack.c.b16 %v889, %v883
        %v1028 = vpack.c.b16 %v890, %v884
        %v1029 = vpack.c.b16 %v891, %v885
        %v1030 = vpack.c.b16 %v892, %v886
        %v1031 = vpack.c.b16 %v899, %v893
        %v1032 = vpack.c.b16 %v900, %v894
        %v1033 = vpack.c.b16 %v901, %v895
        %v1034 = vpack.c.b16 %v902, %v896
        %v1035 = vpack.c.b16 %v903, %v897
        %v1036 = vpack.c.b16 %v904, %v898
        %v1037 = vpack.c.b16 %v911, %v905
        %v1038 = vpack.c.b16 %v912, %v906
        %v1039 = vpack.c.b16 %v913, %v907
        %v1040 = vpack.c.b16 %v914, %v908
        %v1041 = vpack.c.b16 %v915, %v909
        %v1042 = vpack.c.b16 %v916, %v910
        %v1043 = vpack.c.b16 %v923, %v917
        %v1044 = vpack.c.b16 %v924, %v918
        %v1045 = vpack.c.b16 %v925, %v919
        %v1046 = vpack.c.b16 %v926, %v920
        %v1047 = vpack.c.b16 %v927, %v921
        %v1048 = vpack.c.b16 %v928, %v922
        %v1049 = vpack.c.b16 %v935, %v929
        %v1050 = vpack.c.b16 %v936, %v930
        %v1051 = vpack.c.b16 %v937, %v931
        %v1052 = vpack.c.b16 %v938, %v932
        %v1053 = vpack.c.b16 %v939, %v933
        %v1054 = vpack.c.b16 %v940, %v934
        %v1055 = vpack.c.b16 %v947, %v941
        %v1056 = vpack.c.b16 %v948, %v942
        %v1057 = vpack.c.b16 %v949, %v943
        %v1058 = vpack.c.b16 %v950, %v944
        %v1059 = vpack.c.b16 %v951, %v945
        %v1060 = vpack.c.b16 %v952, %v946
        %v1061 = vpack.c.b16 %v959, %v953
        %v1062 = vpack.c.b16 %v960, %v954
        %v1063 = vpack.c.b16 %v961, %v955
        %v1064 = vpack.c.b16 %v962, %v956
        %v1065 = vpack.c.b16 %v963, %v957
        %v1066 = vpack.c.b16 %v964, %v958
        %v1067 = vpack.c.b16 %v971, %v965
        %v1068 = vpack.c.b16 %v972, %v966
        %v1069 = vpack.c.b16 %v973, %v967
        %v1070 = vpack.c.b16 %v974, %v968
        %v1071 = vpack.c.b16 %v975, %v969
        %v1072 = vpack.c.b16 %v976, %v970
        %1169 = vmatprep.subr.bf16.mxu0 %v1020
        %1170 = vmatpush1.bf16.msra.mxu0 %v1019
        %1171 = vmatprep.subr.bf16.mxu0 %v1014
        %1172 = vmatpush1.bf16.msra.mxu0 %v1013
        %1173 = vmatprep.subr.bf16.mxu0 %v1008
        %1174 = vmatpush1.bf16.msra.mxu0 %v1007
        %1175 = vmatprep.subr.bf16.mxu0 %v1002
        %1176 = vmatpush1.bf16.msra.mxu0 %v1001
        %1177 = vmatprep.subr.bf16.mxu0 %v996
        %1178 = vmatpush1.bf16.msra.mxu0 %v995
        %1179 = vmatprep.subr.bf16.mxu0 %v990
        %1180 = vmatpush1.bf16.msra.mxu0 %v989
        %1181 = vmatprep.subr.bf16.mxu0 %v984
        %1182 = vmatpush1.bf16.msra.mxu0 %v983
        %1183 = vmatprep.subr.bf16.mxu0 %v978
        %1184 = vmatpush1.bf16.msra.mxu0 %v977
        %1185 = vmatprep.subr.bf16.mxu0 %v1068
        %1186 = vmatpush2.bf16.msra.mxu0 %v1067
        %1187 = vmatprep.subr.bf16.mxu0 %v1062
        %1188 = vmatpush2.bf16.msra.mxu0 %v1061
        %1189 = vmatprep.subr.bf16.mxu0 %v1056
        %1190 = vmatpush2.bf16.msra.mxu0 %v1055
        %1191 = vmatprep.subr.bf16.mxu0 %v1050
        %1192 = vmatpush2.bf16.msra.mxu0 %v1049
        %1193 = vmatprep.subr.bf16.mxu0 %v1044
        %1194 = vmatpush2.bf16.msra.mxu0 %v1043
        %1195 = vmatprep.subr.bf16.mxu0 %v1038
        %1196 = vmatpush2.bf16.msra.mxu0 %v1037
        %1197 = vmatprep.subr.bf16.mxu0 %v1032
        %1198 = vmatpush2.bf16.msra.mxu0 %v1031
        %1199 = vmatprep.subr.bf16.mxu0 %v1026
        %1200 = vmatpush2.bf16.msra.mxu0 %v1025
        %1201 = vmatprep.mubr.bf16.mxu0 %v592
        %1202 = vmatmul.mubr.bf16.gmra.mxu0 %v591
        %v1203 = vpop.f32.mrf.mxu0
        %v1204 = vadd.f32 0.0, %v1203
        %v1205 = vpop.f32.mrf.mxu0
        %v1206 = vadd.f32 0.0, %v1205
        %v1207 = vpop.f32.mrf.mxu0
        %v1208 = vadd.f32 0.0, %v1207
        %v1209 = vpop.f32.mrf.mxu0
        %v1210 = vadd.f32 0.0, %v1209
        %1211 = vdwg.mxu0
        %1212 = vmatprep.subr.bf16.mxu0 %v1022
        %1213 = vmatpush1.bf16.msra.mxu0 %v1021
        %1214 = vmatprep.subr.bf16.mxu0 %v1016
        %1215 = vmatpush1.bf16.msra.mxu0 %v1015
        %1216 = vmatprep.subr.bf16.mxu0 %v1010
        %1217 = vmatpush1.bf16.msra.mxu0 %v1009
        %1218 = vmatprep.subr.bf16.mxu0 %v1004
        %1219 = vmatpush1.bf16.msra.mxu0 %v1003
        %1220 = vmatprep.subr.bf16.mxu0 %v998
        %1221 = vmatpush1.bf16.msra.mxu0 %v997
        %1222 = vmatprep.subr.bf16.mxu0 %v992
        %1223 = vmatpush1.bf16.msra.mxu0 %v991
        %1224 = vmatprep.subr.bf16.mxu0 %v986
        %1225 = vmatpush1.bf16.msra.mxu0 %v985
        %1226 = vmatprep.subr.bf16.mxu0 %v980
        %1227 = vmatpush1.bf16.msra.mxu0 %v979
        %1228 = vmatprep.subr.bf16.mxu0 %v1070
        %1229 = vmatpush2.bf16.msra.mxu0 %v1069
        %1230 = vmatprep.subr.bf16.mxu0 %v1064
        %1231 = vmatpush2.bf16.msra.mxu0 %v1063
        %1232 = vmatprep.subr.bf16.mxu0 %v1058
        %1233 = vmatpush2.bf16.msra.mxu0 %v1057
        %1234 = vmatprep.subr.bf16.mxu0 %v1052
        %1235 = vmatpush2.bf16.msra.mxu0 %v1051
        %1236 = vmatprep.subr.bf16.mxu0 %v1046
        %1237 = vmatpush2.bf16.msra.mxu0 %v1045
        %1238 = vmatprep.subr.bf16.mxu0 %v1040
        %1239 = vmatpush2.bf16.msra.mxu0 %v1039
        %1240 = vmatprep.subr.bf16.mxu0 %v1034
        %1241 = vmatpush2.bf16.msra.mxu0 %v1033
        %1242 = vmatprep.subr.bf16.mxu0 %v1028
        %1243 = vmatpush2.bf16.msra.mxu0 %v1027
        %1244 = vmatprep.mubr.bf16.mxu0 %v592
        %1245 = vmatmul.mubr.bf16.gmra.mxu0 %v591
        %v1246 = vpop.f32.mrf.mxu0
        %v1247 = vadd.f32 0.0, %v1246
        %v1248 = vpop.f32.mrf.mxu0
        %v1249 = vadd.f32 0.0, %v1248
        %v1250 = vpop.f32.mrf.mxu0
        %v1251 = vadd.f32 0.0, %v1250
        %v1252 = vpop.f32.mrf.mxu0
        %v1253 = vadd.f32 0.0, %v1252
        %1254 = vdwg.mxu0
        %1255 = vmatprep.subr.bf16.mxu0 %v1024
        %1256 = vmatpush1.bf16.msra.mxu0 %v1023
        %1257 = vmatprep.subr.bf16.mxu0 %v1018
        %1258 = vmatpush1.bf16.msra.mxu0 %v1017
        %1259 = vmatprep.subr.bf16.mxu0 %v1012
        %1260 = vmatpush1.bf16.msra.mxu0 %v1011
        %1261 = vmatprep.subr.bf16.mxu0 %v1006
        %1262 = vmatpush1.bf16.msra.mxu0 %v1005
        %1263 = vmatprep.subr.bf16.mxu0 %v1000
        %1264 = vmatpush1.bf16.msra.mxu0 %v999
        %1265 = vmatprep.subr.bf16.mxu0 %v994
        %1266 = vmatpush1.bf16.msra.mxu0 %v993
        %1267 = vmatprep.subr.bf16.mxu0 %v988
        %1268 = vmatpush1.bf16.msra.mxu0 %v987
        %1269 = vmatprep.subr.bf16.mxu0 %v982
        %1270 = vmatpush1.bf16.msra.mxu0 %v981
        %1271 = vmatprep.subr.bf16.mxu0 %v1072
        %1272 = vmatpush2.bf16.msra.mxu0 %v1071
        %1273 = vmatprep.subr.bf16.mxu0 %v1066
        %1274 = vmatpush2.bf16.msra.mxu0 %v1065
        %1275 = vmatprep.subr.bf16.mxu0 %v1060
        %1276 = vmatpush2.bf16.msra.mxu0 %v1059
        %1277 = vmatprep.subr.bf16.mxu0 %v1054
        %1278 = vmatpush2.bf16.msra.mxu0 %v1053
        %1279 = vmatprep.subr.bf16.mxu0 %v1048
        %1280 = vmatpush2.bf16.msra.mxu0 %v1047
        %1281 = vmatprep.subr.bf16.mxu0 %v1042
        %1282 = vmatpush2.bf16.msra.mxu0 %v1041
        %1283 = vmatprep.subr.bf16.mxu0 %v1036
        %1284 = vmatpush2.bf16.msra.mxu0 %v1035
        %1285 = vmatprep.subr.bf16.mxu0 %v1030
        %1286 = vmatpush2.bf16.msra.mxu0 %v1029
        %1287 = vmatprep.mubr.bf16.mxu0 %v592
        %1288 = vmatmul.mubr.bf16.gmra.mxu0 %v591
        %v1289 = vpop.f32.mrf.mxu0
        %v1290 = vadd.f32 0.0, %v1289
        %v1291 = vpop.f32.mrf.mxu0
        %v1292 = vadd.f32 0.0, %v1291
        %v1293 = vpop.f32.mrf.mxu0
        %v1294 = vadd.f32 0.0, %v1293
        %v1295 = vpop.f32.mrf.mxu0
        %v1296 = vadd.f32 0.0, %v1295
        %1297 = vdwg.mxu0
        %v1298 = vmul.f32 %v1204, %v546
        %1299 = vrot.lane.b32.xlu0 %v1204, 64
        %v1300 = vpop.permute.xlu0 %1299
        %v1301 = vmul.f32 %v1300, %v547
        %v1302 = vadd.f32 %v1298, %v1301
        %v1303 = vmul.f32 %v1247, %v546
        %1304 = vrot.lane.b32.xlu0 %v1247, 64
        %v1305 = vpop.permute.xlu0 %1304
        %v1306 = vmul.f32 %v1305, %v547
        %v1307 = vadd.f32 %v1303, %v1306
        %v1308 = vpack.c.bf16 %v1302, %v1302
        %v1309 = vpack.c.bf16 %v1307, %v1307
        %1310 = vmatprep.subr.bf16.mxu0 0
        %1311 = vmatpush1.bf16.xpose.msra.mxu0 0
        %1312 = vmatprep.subr.bf16.mxu0 0
        %1313 = vmatpush1.bf16.xpose.msra.mxu0 0
        %1314 = vmatprep.subr.bf16.mxu0 0
        %1315 = vmatpush1.bf16.xpose.msra.mxu0 0
        %1316 = vmatprep.subr.bf16.mxu0 0
        %1317 = vmatpush1.bf16.xpose.msra.mxu0 0
        %1318 = vmatprep.subr.bf16.mxu0 0
        %1319 = vmatpush1.bf16.xpose.msra.mxu0 0
        %1320 = vmatprep.subr.bf16.mxu0 0
        %1321 = vmatpush1.bf16.xpose.msra.mxu0 0
        %1322 = vmatprep.subr.bf16.mxu0 0
        %1323 = vmatpush1.bf16.xpose.msra.mxu0 0
        %1324 = vmatprep.subr.bf16.mxu0 0
        %1325 = vmatpush1.bf16.xpose.msra.mxu0 %v1309
        %1326 = vmatprep.subr.bf16.mxu0 0
        %1327 = vmatpush2.bf16.xpose.msra.mxu0 0
        %1328 = vmatprep.subr.bf16.mxu0 0
        %1329 = vmatpush2.bf16.xpose.msra.mxu0 0
        %1330 = vmatprep.subr.bf16.mxu0 0
        %1331 = vmatpush2.bf16.xpose.msra.mxu0 0
        %1332 = vmatprep.subr.bf16.mxu0 0
        %1333 = vmatpush2.bf16.xpose.msra.mxu0 0
        %1334 = vmatprep.subr.bf16.mxu0 0
        %1335 = vmatpush2.bf16.xpose.msra.mxu0 0
        %1336 = vmatprep.subr.bf16.mxu0 0
        %1337 = vmatpush2.bf16.xpose.msra.mxu0 0
        %1338 = vmatprep.subr.bf16.mxu0 0
        %1339 = vmatpush2.bf16.xpose.msra.mxu0 0
        %1340 = vmatprep.subr.bf16.mxu0 0
        %1341 = vmatpush2.bf16.xpose.msra.mxu0 0
        %1342 = vmatprep.mubr.bf16.mxu0 0
        %1343 = vmatmul.mubr.bf16.gmra.mxu0 %v1308
        %v1344 = vpop.f32.mrf.mxu0
        %v1345 = vadd.f32 %v553, %v1344
        %v1346 = vpop.f32.mrf.mxu0
        %v1347 = vpop.f32.mrf.mxu0
        %v1348 = vpop.f32.mrf.mxu0
        %1349 = vdwg.mxu0
        %vm1350 = vcmask 64512
        %v1351 = vsel %vm1350, %v1345, -inf
        %1352 = vmax.xlane.f32.xlu0 %v1351
        %v1353 = vpop.xlane.xlu0 %1352
        %v1354 = vsub.f32 %v1345, %v1353
        %v1355 = vmul.f32 %v1354, 1.442695
        %v1356 = vpow.pop %v1355
        %v1357 = vsel %vm1350, %v1356, 0.0
        %1358 = vadd.xlane.f32.xlu0 %v1357
        %v1359 = vpop.xlane.xlu0 %1358
        %v1360 = vrcp.pop %v1359
        %v1361 = vmul.f32 %v1356, %v1360
        %v1362 = vpack.c.bf16 %v1361, %v1361
        %v1363 = vpack.c.bf16 %v1290, %v1290
        %v1365 = vsel %vm1350, %v1362, 0
        %vm1367 = vcmask 1043456
        %v1369 = vsel %vm1367, %v1363, 0
        %1371 = vmatprep.subr.bf16.mxu0 0
        %1372 = vmatpush1.bf16.msra.mxu0 0
        %1373 = vmatprep.subr.bf16.mxu0 0
        %1374 = vmatpush1.bf16.msra.mxu0 0
        %1375 = vmatprep.subr.bf16.mxu0 0
        %1376 = vmatpush1.bf16.msra.mxu0 0
        %1377 = vmatprep.subr.bf16.mxu0 0
        %1378 = vmatpush1.bf16.msra.mxu0 0
        %1379 = vmatprep.subr.bf16.mxu0 0
        %1380 = vmatpush1.bf16.msra.mxu0 0
        %1381 = vmatprep.subr.bf16.mxu0 0
        %1382 = vmatpush1.bf16.msra.mxu0 0
        %1383 = vmatprep.subr.bf16.mxu0 0
        %1384 = vmatpush1.bf16.msra.mxu0 0
        %1385 = vmatprep.subr.bf16.mxu0 0
        %1386 = vmatpush1.bf16.msra.mxu0 %v1369
        %1387 = vmatprep.subr.bf16.mxu0 0
        %1388 = vmatpush2.bf16.msra.mxu0 0
        %1389 = vmatprep.subr.bf16.mxu0 0
        %1390 = vmatpush2.bf16.msra.mxu0 0
        %1391 = vmatprep.subr.bf16.mxu0 0
        %1392 = vmatpush2.bf16.msra.mxu0 0
        %1393 = vmatprep.subr.bf16.mxu0 0
        %1394 = vmatpush2.bf16.msra.mxu0 0
        %1395 = vmatprep.subr.bf16.mxu0 0
        %1396 = vmatpush2.bf16.msra.mxu0 0
        %1397 = vmatprep.subr.bf16.mxu0 0
        %1398 = vmatpush2.bf16.msra.mxu0 0
        %1399 = vmatprep.subr.bf16.mxu0 0
        %1400 = vmatpush2.bf16.msra.mxu0 0
        %1401 = vmatprep.subr.bf16.mxu0 0
        %1402 = vmatpush2.bf16.msra.mxu0 0
        %1403 = vmatprep.mubr.bf16.mxu0 0
        %1404 = vmatmul.mubr.bf16.gmra.mxu0 %v1365
        %v1405 = vpop.f32.mrf.mxu0
        %v1406 = vadd.f32 0.0, %v1405
        %v1407 = vpop.f32.mrf.mxu0
        %v1408 = vpop.f32.mrf.mxu0
        %v1409 = vpop.f32.mrf.mxu0
        %1410 = vdwg.mxu0
        %v1411 = vmul.f32 %v1206, %v546
        %1412 = vrot.lane.b32.xlu0 %v1206, 64
        %v1413 = vpop.permute.xlu0 %1412
        %v1414 = vmul.f32 %v1413, %v547
        %v1415 = vadd.f32 %v1411, %v1414
        %v1416 = vmul.f32 %v1249, %v546
        %1417 = vrot.lane.b32.xlu0 %v1249, 64
        %v1418 = vpop.permute.xlu0 %1417
        %v1419 = vmul.f32 %v1418, %v547
        %v1420 = vadd.f32 %v1416, %v1419
        %v1421 = vpack.c.bf16 %v1415, %v1415
        %v1422 = vpack.c.bf16 %v1420, %v1420
        %1423 = vmatprep.subr.bf16.mxu0 0
        %1424 = vmatpush1.bf16.xpose.msra.mxu0 0
        %1425 = vmatprep.subr.bf16.mxu0 0
        %1426 = vmatpush1.bf16.xpose.msra.mxu0 0
        %1427 = vmatprep.subr.bf16.mxu0 0
        %1428 = vmatpush1.bf16.xpose.msra.mxu0 0
        %1429 = vmatprep.subr.bf16.mxu0 0
        %1430 = vmatpush1.bf16.xpose.msra.mxu0 0
        %1431 = vmatprep.subr.bf16.mxu0 0
        %1432 = vmatpush1.bf16.xpose.msra.mxu0 0
        %1433 = vmatprep.subr.bf16.mxu0 0
        %1434 = vmatpush1.bf16.xpose.msra.mxu0 0
        %1435 = vmatprep.subr.bf16.mxu0 0
        %1436 = vmatpush1.bf16.xpose.msra.mxu0 0
        %1437 = vmatprep.subr.bf16.mxu0 0
        %1438 = vmatpush1.bf16.xpose.msra.mxu0 %v1422
        %1439 = vmatprep.subr.bf16.mxu0 0
        %1440 = vmatpush2.bf16.xpose.msra.mxu0 0
        %1441 = vmatprep.subr.bf16.mxu0 0
        %1442 = vmatpush2.bf16.xpose.msra.mxu0 0
        %1443 = vmatprep.subr.bf16.mxu0 0
        %1444 = vmatpush2.bf16.xpose.msra.mxu0 0
        %1445 = vmatprep.subr.bf16.mxu0 0
        %1446 = vmatpush2.bf16.xpose.msra.mxu0 0
        %1447 = vmatprep.subr.bf16.mxu0 0
        %1448 = vmatpush2.bf16.xpose.msra.mxu0 0
        %1449 = vmatprep.subr.bf16.mxu0 0
        %1450 = vmatpush2.bf16.xpose.msra.mxu0 0
        %1451 = vmatprep.subr.bf16.mxu0 0
        %1452 = vmatpush2.bf16.xpose.msra.mxu0 0
        %1453 = vmatprep.subr.bf16.mxu0 0
        %1454 = vmatpush2.bf16.xpose.msra.mxu0 0
        %1455 = vmatprep.mubr.bf16.mxu0 0
        %1456 = vmatmul.mubr.bf16.gmra.mxu0 %v1421
        %v1457 = vpop.f32.mrf.mxu0
        %v1458 = vadd.f32 %v553, %v1457
        %v1459 = vpop.f32.mrf.mxu0
        %v1460 = vpop.f32.mrf.mxu0
        %v1461 = vpop.f32.mrf.mxu0
        %1462 = vdwg.mxu0
        %v1463 = vsel %vm1350, %v1458, -inf
        %1464 = vmax.xlane.f32.xlu0 %v1463
        %v1465 = vpop.xlane.xlu0 %1464
        %v1466 = vsub.f32 %v1458, %v1465
        %v1467 = vmul.f32 %v1466, 1.442695
        %v1468 = vpow.pop %v1467
        %v1469 = vsel %vm1350, %v1468, 0.0
        %1470 = vadd.xlane.f32.xlu0 %v1469
        %v1471 = vpop.xlane.xlu0 %1470
        %v1472 = vrcp.pop %v1471
        %v1473 = vmul.f32 %v1468, %v1472
        %v1474 = vpack.c.bf16 %v1473, %v1473
        %v1475 = vpack.c.bf16 %v1292, %v1292
        %v1477 = vsel %vm1350, %v1474, 0
        %v1480 = vsel %vm1367, %v1475, 0
        %1482 = vmatprep.subr.bf16.mxu0 0
        %1483 = vmatpush1.bf16.msra.mxu0 0
        %1484 = vmatprep.subr.bf16.mxu0 0
        %1485 = vmatpush1.bf16.msra.mxu0 0
        %1486 = vmatprep.subr.bf16.mxu0 0
        %1487 = vmatpush1.bf16.msra.mxu0 0
        %1488 = vmatprep.subr.bf16.mxu0 0
        %1489 = vmatpush1.bf16.msra.mxu0 0
        %1490 = vmatprep.subr.bf16.mxu0 0
        %1491 = vmatpush1.bf16.msra.mxu0 0
        %1492 = vmatprep.subr.bf16.mxu0 0
        %1493 = vmatpush1.bf16.msra.mxu0 0
        %1494 = vmatprep.subr.bf16.mxu0 0
        %1495 = vmatpush1.bf16.msra.mxu0 0
        %1496 = vmatprep.subr.bf16.mxu0 0
        %1497 = vmatpush1.bf16.msra.mxu0 %v1480
        %1498 = vmatprep.subr.bf16.mxu0 0
        %1499 = vmatpush2.bf16.msra.mxu0 0
        %1500 = vmatprep.subr.bf16.mxu0 0
        %1501 = vmatpush2.bf16.msra.mxu0 0
        %1502 = vmatprep.subr.bf16.mxu0 0
        %1503 = vmatpush2.bf16.msra.mxu0 0
        %1504 = vmatprep.subr.bf16.mxu0 0
        %1505 = vmatpush2.bf16.msra.mxu0 0
        %1506 = vmatprep.subr.bf16.mxu0 0
        %1507 = vmatpush2.bf16.msra.mxu0 0
        %1508 = vmatprep.subr.bf16.mxu0 0
        %1509 = vmatpush2.bf16.msra.mxu0 0
        %1510 = vmatprep.subr.bf16.mxu0 0
        %1511 = vmatpush2.bf16.msra.mxu0 0
        %1512 = vmatprep.subr.bf16.mxu0 0
        %1513 = vmatpush2.bf16.msra.mxu0 0
        %1514 = vmatprep.mubr.bf16.mxu0 0
        %1515 = vmatmul.mubr.bf16.gmra.mxu0 %v1477
        %v1516 = vpop.f32.mrf.mxu0
        %v1517 = vadd.f32 0.0, %v1516
        %v1518 = vpop.f32.mrf.mxu0
        %v1519 = vpop.f32.mrf.mxu0
        %v1520 = vpop.f32.mrf.mxu0
        %1521 = vdwg.mxu0
        %v1522 = vmul.f32 %v1208, %v546
        %1523 = vrot.lane.b32.xlu0 %v1208, 64
        %v1524 = vpop.permute.xlu0 %1523
        %v1525 = vmul.f32 %v1524, %v547
        %v1526 = vadd.f32 %v1522, %v1525
        %v1527 = vmul.f32 %v1251, %v546
        %1528 = vrot.lane.b32.xlu0 %v1251, 64
        %v1529 = vpop.permute.xlu0 %1528
        %v1530 = vmul.f32 %v1529, %v547
        %v1531 = vadd.f32 %v1527, %v1530
        %v1532 = vpack.c.bf16 %v1526, %v1526
        %v1533 = vpack.c.bf16 %v1531, %v1531
        %1534 = vmatprep.subr.bf16.mxu0 0
        %1535 = vmatpush1.bf16.xpose.msra.mxu0 0
        %1536 = vmatprep.subr.bf16.mxu0 0
        %1537 = vmatpush1.bf16.xpose.msra.mxu0 0
        %1538 = vmatprep.subr.bf16.mxu0 0
        %1539 = vmatpush1.bf16.xpose.msra.mxu0 0
        %1540 = vmatprep.subr.bf16.mxu0 0
        %1541 = vmatpush1.bf16.xpose.msra.mxu0 0
        %1542 = vmatprep.subr.bf16.mxu0 0
        %1543 = vmatpush1.bf16.xpose.msra.mxu0 0
        %1544 = vmatprep.subr.bf16.mxu0 0
        %1545 = vmatpush1.bf16.xpose.msra.mxu0 0
        %1546 = vmatprep.subr.bf16.mxu0 0
        %1547 = vmatpush1.bf16.xpose.msra.mxu0 0
        %1548 = vmatprep.subr.bf16.mxu0 0
        %1549 = vmatpush1.bf16.xpose.msra.mxu0 %v1533
        %1550 = vmatprep.subr.bf16.mxu0 0
        %1551 = vmatpush2.bf16.xpose.msra.mxu0 0
        %1552 = vmatprep.subr.bf16.mxu0 0
        %1553 = vmatpush2.bf16.xpose.msra.mxu0 0
        %1554 = vmatprep.subr.bf16.mxu0 0
        %1555 = vmatpush2.bf16.xpose.msra.mxu0 0
        %1556 = vmatprep.subr.bf16.mxu0 0
        %1557 = vmatpush2.bf16.xpose.msra.mxu0 0
        %1558 = vmatprep.subr.bf16.mxu0 0
        %1559 = vmatpush2.bf16.xpose.msra.mxu0 0
        %1560 = vmatprep.subr.bf16.mxu0 0
        %1561 = vmatpush2.bf16.xpose.msra.mxu0 0
        %1562 = vmatprep.subr.bf16.mxu0 0
        %1563 = vmatpush2.bf16.xpose.msra.mxu0 0
        %1564 = vmatprep.subr.bf16.mxu0 0
        %1565 = vmatpush2.bf16.xpose.msra.mxu0 0
        %1566 = vmatprep.mubr.bf16.mxu0 0
        %1567 = vmatmul.mubr.bf16.gmra.mxu0 %v1532
        %v1568 = vpop.f32.mrf.mxu0
        %v1569 = vadd.f32 %v553, %v1568
        %v1570 = vpop.f32.mrf.mxu0
        %v1571 = vpop.f32.mrf.mxu0
        %v1572 = vpop.f32.mrf.mxu0
        %1573 = vdwg.mxu0
        %v1574 = vsel %vm1350, %v1569, -inf
        %1575 = vmax.xlane.f32.xlu0 %v1574
        %v1576 = vpop.xlane.xlu0 %1575
        %v1577 = vsub.f32 %v1569, %v1576
        %v1578 = vmul.f32 %v1577, 1.442695
        %v1579 = vpow.pop %v1578
        %v1580 = vsel %vm1350, %v1579, 0.0
        %1581 = vadd.xlane.f32.xlu0 %v1580
        %v1582 = vpop.xlane.xlu0 %1581
        %v1583 = vrcp.pop %v1582
        %v1584 = vmul.f32 %v1579, %v1583
        %v1585 = vpack.c.bf16 %v1584, %v1584
        %v1586 = vpack.c.bf16 %v1294, %v1294
        %v1588 = vsel %vm1350, %v1585, 0
        %v1591 = vsel %vm1367, %v1586, 0
        %1593 = vmatprep.subr.bf16.mxu0 0
        %1594 = vmatpush1.bf16.msra.mxu0 0
        %1595 = vmatprep.subr.bf16.mxu0 0
        %1596 = vmatpush1.bf16.msra.mxu0 0
        %1597 = vmatprep.subr.bf16.mxu0 0
        %1598 = vmatpush1.bf16.msra.mxu0 0
        %1599 = vmatprep.subr.bf16.mxu0 0
        %1600 = vmatpush1.bf16.msra.mxu0 0
        %1601 = vmatprep.subr.bf16.mxu0 0
        %1602 = vmatpush1.bf16.msra.mxu0 0
        %1603 = vmatprep.subr.bf16.mxu0 0
        %1604 = vmatpush1.bf16.msra.mxu0 0
        %1605 = vmatprep.subr.bf16.mxu0 0
        %1606 = vmatpush1.bf16.msra.mxu0 0
        %1607 = vmatprep.subr.bf16.mxu0 0
        %1608 = vmatpush1.bf16.msra.mxu0 %v1591
        %1609 = vmatprep.subr.bf16.mxu0 0
        %1610 = vmatpush2.bf16.msra.mxu0 0
        %1611 = vmatprep.subr.bf16.mxu0 0
        %1612 = vmatpush2.bf16.msra.mxu0 0
        %1613 = vmatprep.subr.bf16.mxu0 0
        %1614 = vmatpush2.bf16.msra.mxu0 0
        %1615 = vmatprep.subr.bf16.mxu0 0
        %1616 = vmatpush2.bf16.msra.mxu0 0
        %1617 = vmatprep.subr.bf16.mxu0 0
        %1618 = vmatpush2.bf16.msra.mxu0 0
        %1619 = vmatprep.subr.bf16.mxu0 0
        %1620 = vmatpush2.bf16.msra.mxu0 0
        %1621 = vmatprep.subr.bf16.mxu0 0
        %1622 = vmatpush2.bf16.msra.mxu0 0
        %1623 = vmatprep.subr.bf16.mxu0 0
        %1624 = vmatpush2.bf16.msra.mxu0 0
        %1625 = vmatprep.mubr.bf16.mxu0 0
        %1626 = vmatmul.mubr.bf16.gmra.mxu0 %v1588
        %v1627 = vpop.f32.mrf.mxu0
        %v1628 = vadd.f32 0.0, %v1627
        %v1629 = vpop.f32.mrf.mxu0
        %v1630 = vpop.f32.mrf.mxu0
        %v1631 = vpop.f32.mrf.mxu0
        %1632 = vdwg.mxu0
        %v1633 = vmul.f32 %v1210, %v546
        %1634 = vrot.lane.b32.xlu0 %v1210, 64
        %v1635 = vpop.permute.xlu0 %1634
        %v1636 = vmul.f32 %v1635, %v547
        %v1637 = vadd.f32 %v1633, %v1636
        %v1638 = vmul.f32 %v1253, %v546
        %1639 = vrot.lane.b32.xlu0 %v1253, 64
        %v1640 = vpop.permute.xlu0 %1639
        %v1641 = vmul.f32 %v1640, %v547
        %v1642 = vadd.f32 %v1638, %v1641
        %v1643 = vpack.c.bf16 %v1637, %v1637
        %v1644 = vpack.c.bf16 %v1642, %v1642
        %1645 = vmatprep.subr.bf16.mxu0 0
        %1646 = vmatpush1.bf16.xpose.msra.mxu0 0
        %1647 = vmatprep.subr.bf16.mxu0 0
        %1648 = vmatpush1.bf16.xpose.msra.mxu0 0
        %1649 = vmatprep.subr.bf16.mxu0 0
        %1650 = vmatpush1.bf16.xpose.msra.mxu0 0
        %1651 = vmatprep.subr.bf16.mxu0 0
        %1652 = vmatpush1.bf16.xpose.msra.mxu0 0
        %1653 = vmatprep.subr.bf16.mxu0 0
        %1654 = vmatpush1.bf16.xpose.msra.mxu0 0
        %1655 = vmatprep.subr.bf16.mxu0 0
        %1656 = vmatpush1.bf16.xpose.msra.mxu0 0
        %1657 = vmatprep.subr.bf16.mxu0 0
        %1658 = vmatpush1.bf16.xpose.msra.mxu0 0
        %1659 = vmatprep.subr.bf16.mxu0 0
        %1660 = vmatpush1.bf16.xpose.msra.mxu0 %v1644
        %1661 = vmatprep.subr.bf16.mxu0 0
        %1662 = vmatpush2.bf16.xpose.msra.mxu0 0
        %1663 = vmatprep.subr.bf16.mxu0 0
        %1664 = vmatpush2.bf16.xpose.msra.mxu0 0
        %1665 = vmatprep.subr.bf16.mxu0 0
        %1666 = vmatpush2.bf16.xpose.msra.mxu0 0
        %1667 = vmatprep.subr.bf16.mxu0 0
        %1668 = vmatpush2.bf16.xpose.msra.mxu0 0
        %1669 = vmatprep.subr.bf16.mxu0 0
        %1670 = vmatpush2.bf16.xpose.msra.mxu0 0
        %1671 = vmatprep.subr.bf16.mxu0 0
        %1672 = vmatpush2.bf16.xpose.msra.mxu0 0
        %1673 = vmatprep.subr.bf16.mxu0 0
        %1674 = vmatpush2.bf16.xpose.msra.mxu0 0
        %1675 = vmatprep.subr.bf16.mxu0 0
        %1676 = vmatpush2.bf16.xpose.msra.mxu0 0
        %1677 = vmatprep.mubr.bf16.mxu0 0
        %1678 = vmatmul.mubr.bf16.gmra.mxu0 %v1643
        %v1679 = vpop.f32.mrf.mxu0
        %v1680 = vadd.f32 %v553, %v1679
        %v1681 = vpop.f32.mrf.mxu0
        %v1682 = vpop.f32.mrf.mxu0
        %v1683 = vpop.f32.mrf.mxu0
        %1684 = vdwg.mxu0
        %v1685 = vsel %vm1350, %v1680, -inf
        %1686 = vmax.xlane.f32.xlu0 %v1685
        %v1687 = vpop.xlane.xlu0 %1686
        %v1688 = vsub.f32 %v1680, %v1687
        %v1689 = vmul.f32 %v1688, 1.442695
        %v1690 = vpow.pop %v1689
        %v1691 = vsel %vm1350, %v1690, 0.0
        %1692 = vadd.xlane.f32.xlu0 %v1691
        %v1693 = vpop.xlane.xlu0 %1692
        %v1694 = vrcp.pop %v1693
        %v1695 = vmul.f32 %v1690, %v1694
        %v1696 = vpack.c.bf16 %v1695, %v1695
        %v1697 = vpack.c.bf16 %v1296, %v1296
        %v1699 = vsel %vm1350, %v1696, 0
        %v1702 = vsel %vm1367, %v1697, 0
        %1704 = vmatprep.subr.bf16.mxu0 0
        %1705 = vmatpush1.bf16.msra.mxu0 0
        %1706 = vmatprep.subr.bf16.mxu0 0
        %1707 = vmatpush1.bf16.msra.mxu0 0
        %1708 = vmatprep.subr.bf16.mxu0 0
        %1709 = vmatpush1.bf16.msra.mxu0 0
        %1710 = vmatprep.subr.bf16.mxu0 0
        %1711 = vmatpush1.bf16.msra.mxu0 0
        %1712 = vmatprep.subr.bf16.mxu0 0
        %1713 = vmatpush1.bf16.msra.mxu0 0
        %1714 = vmatprep.subr.bf16.mxu0 0
        %1715 = vmatpush1.bf16.msra.mxu0 0
        %1716 = vmatprep.subr.bf16.mxu0 0
        %1717 = vmatpush1.bf16.msra.mxu0 0
        %1718 = vmatprep.subr.bf16.mxu0 0
        %1719 = vmatpush1.bf16.msra.mxu0 %v1702
        %1720 = vmatprep.subr.bf16.mxu0 0
        %1721 = vmatpush2.bf16.msra.mxu0 0
        %1722 = vmatprep.subr.bf16.mxu0 0
        %1723 = vmatpush2.bf16.msra.mxu0 0
        %1724 = vmatprep.subr.bf16.mxu0 0
        %1725 = vmatpush2.bf16.msra.mxu0 0
        %1726 = vmatprep.subr.bf16.mxu0 0
        %1727 = vmatpush2.bf16.msra.mxu0 0
        %1728 = vmatprep.subr.bf16.mxu0 0
        %1729 = vmatpush2.bf16.msra.mxu0 0
        %1730 = vmatprep.subr.bf16.mxu0 0
        %1731 = vmatpush2.bf16.msra.mxu0 0
        %1732 = vmatprep.subr.bf16.mxu0 0
        %1733 = vmatpush2.bf16.msra.mxu0 0
        %1734 = vmatprep.subr.bf16.mxu0 0
        %1735 = vmatpush2.bf16.msra.mxu0 0
        %1736 = vmatprep.mubr.bf16.mxu0 0
        %1737 = vmatmul.mubr.bf16.gmra.mxu0 %v1699
        %v1738 = vpop.f32.mrf.mxu0
        %v1739 = vadd.f32 0.0, %v1738
        %v1740 = vpop.f32.mrf.mxu0
        %v1741 = vpop.f32.mrf.mxu0
        %v1742 = vpop.f32.mrf.mxu0
        %1743 = vdwg.mxu0
        %v1744 = vpack.c.bf16 %v1628, %v1406
        %v1745 = vpack.c.bf16 %v1739, %v1517
        %v1746 = vld [vmem:[%s447] sm:$0xff]
        %v1747 = vld [vmem:[%s447 + $0x8] sm:$0xff]
        %v1748 = vld [vmem:[%s447 + $0x10] sm:$0xff]
        %v1749 = vld [vmem:[%s447 + $0x18] sm:$0xff]
        %v1750 = vld [vmem:[%s447 + $0x20] sm:$0xff]
        %v1751 = vld [vmem:[%s447 + $0x28] sm:$0xff]
        %v1752 = vld [vmem:[%s447 + $0x30] sm:$0xff]
        %v1753 = vld [vmem:[%s447 + $0x38] sm:$0xff]
        %v1754 = vld [vmem:[%s447 + $0x40] sm:$0xff]
        %v1755 = vld [vmem:[%s447 + $0x48] sm:$0xff]
        %v1756 = vld [vmem:[%s447 + $0x50] sm:$0xff]
        %v1757 = vld [vmem:[%s447 + $0x58] sm:$0xff]
        %v1758 = vld [vmem:[%s447 + $0x60] sm:$0xff]
        %v1759 = vld [vmem:[%s447 + $0x68] sm:$0xff]
        %v1760 = vld [vmem:[%s447 + $0x70] sm:$0xff]
        %v1761 = vld [vmem:[%s447 + $0x78] sm:$0xff]
        %v1762 = vld [vmem:[%s447 + $0x80] sm:$0xff]
        %v1763 = vld [vmem:[%s447 + $0x88] sm:$0xff]
        %v1764 = vld [vmem:[%s447 + $0x90] sm:$0xff]
        %v1765 = vld [vmem:[%s447 + $0x98] sm:$0xff]
        %v1766 = vld [vmem:[%s447 + $0xa0] sm:$0xff]
        %v1767 = vld [vmem:[%s447 + $0xa8] sm:$0xff]
        %v1768 = vld [vmem:[%s447 + $0xb0] sm:$0xff]
        %v1769 = vld [vmem:[%s447 + $0xb8] sm:$0xff]
        %v1770 = vld [vmem:[%s447 + $0xc0] sm:$0xff]
        %v1771 = vld [vmem:[%s447 + $0xc8] sm:$0xff]
        %v1772 = vld [vmem:[%s447 + $0xd0] sm:$0xff]
        %v1773 = vld [vmem:[%s447 + $0xd8] sm:$0xff]
        %v1774 = vld [vmem:[%s447 + $0xe0] sm:$0xff]
        %v1775 = vld [vmem:[%s447 + $0xe8] sm:$0xff]
        %v1776 = vld [vmem:[%s447 + $0xf0] sm:$0xff]
        %v1777 = vld [vmem:[%s447 + $0xf8] sm:$0xff]
        %v1810 = vunpack.c.l.b16 %v1746
        %v1811 = vunpack.c.h.b16 %v1746
        %v1812 = vunpack.c.l.b16 %v1747
        %v1813 = vunpack.c.h.b16 %v1747
        %v1814 = vunpack.c.l.b16 %v1748
        %v1815 = vunpack.c.h.b16 %v1748
        %v1816 = vunpack.c.l.b16 %v1749
        %v1817 = vunpack.c.h.b16 %v1749
        %v1818 = vunpack.c.l.b16 %v1750
        %v1819 = vunpack.c.h.b16 %v1750
        %v1820 = vunpack.c.l.b16 %v1751
        %v1821 = vunpack.c.h.b16 %v1751
        %v1822 = vunpack.c.l.b16 %v1752
        %v1823 = vunpack.c.h.b16 %v1752
        %v1824 = vunpack.c.l.b16 %v1753
        %v1825 = vunpack.c.h.b16 %v1753
        %v1826 = vunpack.c.l.b16 %v1754
        %v1827 = vunpack.c.h.b16 %v1754
        %v1828 = vunpack.c.l.b16 %v1755
        %v1829 = vunpack.c.h.b16 %v1755
        %v1830 = vunpack.c.l.b16 %v1756
        %v1831 = vunpack.c.h.b16 %v1756
        %v1832 = vunpack.c.l.b16 %v1757
        %v1833 = vunpack.c.h.b16 %v1757
        %v1834 = vunpack.c.l.b16 %v1758
        %v1835 = vunpack.c.h.b16 %v1758
        %v1836 = vunpack.c.l.b16 %v1759
        %v1837 = vunpack.c.h.b16 %v1759
        %v1838 = vunpack.c.l.b16 %v1760
        %v1839 = vunpack.c.h.b16 %v1760
        %v1840 = vunpack.c.l.b16 %v1761
        %v1841 = vunpack.c.h.b16 %v1761
        %v1842 = vunpack.c.l.b16 %v1762
        %v1843 = vunpack.c.h.b16 %v1762
        %v1844 = vunpack.c.l.b16 %v1763
        %v1845 = vunpack.c.h.b16 %v1763
        %v1846 = vunpack.c.l.b16 %v1764
        %v1847 = vunpack.c.h.b16 %v1764
        %v1848 = vunpack.c.l.b16 %v1765
        %v1849 = vunpack.c.h.b16 %v1765
        %v1850 = vunpack.c.l.b16 %v1766
        %v1851 = vunpack.c.h.b16 %v1766
        %v1852 = vunpack.c.l.b16 %v1767
        %v1853 = vunpack.c.h.b16 %v1767
        %v1854 = vunpack.c.l.b16 %v1768
        %v1855 = vunpack.c.h.b16 %v1768
        %v1856 = vunpack.c.l.b16 %v1769
        %v1857 = vunpack.c.h.b16 %v1769
        %v1858 = vunpack.c.l.b16 %v1770
        %v1859 = vunpack.c.h.b16 %v1770
        %v1860 = vunpack.c.l.b16 %v1771
        %v1861 = vunpack.c.h.b16 %v1771
        %v1862 = vunpack.c.l.b16 %v1772
        %v1863 = vunpack.c.h.b16 %v1772
        %v1864 = vunpack.c.l.b16 %v1773
        %v1865 = vunpack.c.h.b16 %v1773
        %v1866 = vunpack.c.l.b16 %v1774
        %v1867 = vunpack.c.h.b16 %v1774
        %v1868 = vunpack.c.l.b16 %v1775
        %v1869 = vunpack.c.h.b16 %v1775
        %v1870 = vunpack.c.l.b16 %v1776
        %v1871 = vunpack.c.h.b16 %v1776
        %v1872 = vunpack.c.l.b16 %v1777
        %v1873 = vunpack.c.h.b16 %v1777
        %v1874 = vpack.c.b16 %v1812, %v1810
        %v1875 = vpack.c.b16 %v1813, %v1811
        %v1876 = vpack.c.b16 %v1816, %v1814
        %v1877 = vpack.c.b16 %v1817, %v1815
        %v1878 = vpack.c.b16 %v1820, %v1818
        %v1879 = vpack.c.b16 %v1821, %v1819
        %v1880 = vpack.c.b16 %v1824, %v1822
        %v1881 = vpack.c.b16 %v1825, %v1823
        %v1882 = vpack.c.b16 %v1828, %v1826
        %v1883 = vpack.c.b16 %v1829, %v1827
        %v1884 = vpack.c.b16 %v1832, %v1830
        %v1885 = vpack.c.b16 %v1833, %v1831
        %v1886 = vpack.c.b16 %v1836, %v1834
        %v1887 = vpack.c.b16 %v1837, %v1835
        %v1888 = vpack.c.b16 %v1840, %v1838
        %v1889 = vpack.c.b16 %v1841, %v1839
        %v1890 = vpack.c.b16 %v1844, %v1842
        %v1891 = vpack.c.b16 %v1845, %v1843
        %v1892 = vpack.c.b16 %v1848, %v1846
        %v1893 = vpack.c.b16 %v1849, %v1847
        %v1894 = vpack.c.b16 %v1852, %v1850
        %v1895 = vpack.c.b16 %v1853, %v1851
        %v1896 = vpack.c.b16 %v1856, %v1854
        %v1897 = vpack.c.b16 %v1857, %v1855
        %v1898 = vpack.c.b16 %v1860, %v1858
        %v1899 = vpack.c.b16 %v1861, %v1859
        %v1900 = vpack.c.b16 %v1864, %v1862
        %v1901 = vpack.c.b16 %v1865, %v1863
        %v1902 = vpack.c.b16 %v1868, %v1866
        %v1903 = vpack.c.b16 %v1869, %v1867
        %v1904 = vpack.c.b16 %v1872, %v1870
        %v1905 = vpack.c.b16 %v1873, %v1871
        %1938 = vmatprep.subr.bf16.mxu0 %v1889
        %1939 = vmatpush1.bf16.msra.mxu0 %v1888
        %1940 = vmatprep.subr.bf16.mxu0 %v1887
        %1941 = vmatpush1.bf16.msra.mxu0 %v1886
        %1942 = vmatprep.subr.bf16.mxu0 %v1885
        %1943 = vmatpush1.bf16.msra.mxu0 %v1884
        %1944 = vmatprep.subr.bf16.mxu0 %v1883
        %1945 = vmatpush1.bf16.msra.mxu0 %v1882
        %1946 = vmatprep.subr.bf16.mxu0 %v1881
        %1947 = vmatpush1.bf16.msra.mxu0 %v1880
        %1948 = vmatprep.subr.bf16.mxu0 %v1879
        %1949 = vmatpush1.bf16.msra.mxu0 %v1878
        %1950 = vmatprep.subr.bf16.mxu0 %v1877
        %1951 = vmatpush1.bf16.msra.mxu0 %v1876
        %1952 = vmatprep.subr.bf16.mxu0 %v1875
        %1953 = vmatpush1.bf16.msra.mxu0 %v1874
        %1954 = vmatprep.subr.bf16.mxu0 %v1905
        %1955 = vmatpush2.bf16.msra.mxu0 %v1904
        %1956 = vmatprep.subr.bf16.mxu0 %v1903
        %1957 = vmatpush2.bf16.msra.mxu0 %v1902
        %1958 = vmatprep.subr.bf16.mxu0 %v1901
        %1959 = vmatpush2.bf16.msra.mxu0 %v1900
        %1960 = vmatprep.subr.bf16.mxu0 %v1899
        %1961 = vmatpush2.bf16.msra.mxu0 %v1898
        %1962 = vmatprep.subr.bf16.mxu0 %v1897
        %1963 = vmatpush2.bf16.msra.mxu0 %v1896
        %1964 = vmatprep.subr.bf16.mxu0 %v1895
        %1965 = vmatpush2.bf16.msra.mxu0 %v1894
        %1966 = vmatprep.subr.bf16.mxu0 %v1893
        %1967 = vmatpush2.bf16.msra.mxu0 %v1892
        %1968 = vmatprep.subr.bf16.mxu0 %v1891
        %1969 = vmatpush2.bf16.msra.mxu0 %v1890
        %1970 = vmatprep.mubr.bf16.mxu0 %v1745
        %1971 = vmatmul.mubr.bf16.gmra.mxu0 %v1744
        %v1972 = vpop.f32.mrf.mxu0
        %v1973 = vadd.f32 0.0, %v1972
        %v1974 = vpop.f32.mrf.mxu0
        %v1975 = vadd.f32 0.0, %v1974
        %v1976 = vpop.f32.mrf.mxu0
        %v1977 = vadd.f32 0.0, %v1976
        %v1978 = vpop.f32.mrf.mxu0
        %v1979 = vadd.f32 0.0, %v1978
        %1980 = vdwg.mxu0
        %v1981 = vadd.f32 %v542, %v1973
        %v1982 = vadd.f32 %v543, %v1975
        %v1983 = vadd.f32 %v544, %v1977
        %v1984 = vadd.f32 %v545, %v1979
        %v1985 = vmul.f32 %v1981, %v1981
        %v1986 = vmul.f32 %v1982, %v1982
        %v1987 = vmul.f32 %v1983, %v1983
        %v1988 = vmul.f32 %v1984, %v1984
        %v1989 = vadd.f32 %v1985, %v1986
        %1990 = vadd.xlane.f32.xlu0 %v1989
        %v1991 = vpop.xlane.xlu0 %1990
        %v1992 = vadd.f32 %v1987, %v1988
        %1993 = vadd.xlane.f32.xlu0 %v1992
        %v1994 = vpop.xlane.xlu0 %1993
        %v1995 = vmul.f32 %v1991, %v564
        %v1996 = vmul.f32 %v1994, %v564
        %v1997 = vadd.f32 %v1995, 1e-06
        %v1998 = vadd.f32 %v1996, 1e-06
        %v1999 = vrsqrt.pop %v1997
        %v2000 = vrsqrt.pop %v1998
        %v2001 = vmul.f32 %v1981, %v1999
        %v2002 = vmul.f32 %v1982, %v1999
        %v2003 = vmul.f32 %v1983, %v2000
        %v2004 = vmul.f32 %v1984, %v2000
        %v2005 = vld [vmem:[%s456] sm:$0x3]
        %v2007 = vlaneseq
        %v2008 = vshrl.u32 %v2007, 7
        %v2009 = vsub.s32 0, %v2008
        %v2010 = vrot.slane %v2005, %v2009
        %v2011 = vlaneseq
        %v2012 = vshrl.u32 %v2011, 7
        %v2013 = vsub.s32 1, %v2012
        %v2014 = vrot.slane %v2005, %v2013
        %v2017 = vmul.f32 %v2001, %v2010
        %v2018 = vmul.f32 %v2002, %v2014
        %v2019 = vmul.f32 %v2003, %v2010
        %v2020 = vmul.f32 %v2004, %v2014
        %v2021 = vpack.c.bf16 %v2019, %v2017
        %v2022 = vpack.c.bf16 %v2020, %v2018
        %v2023 = vld [vmem:[%s465] sm:$0xff]
        %v2024 = vld [vmem:[%s465 + $0x8] sm:$0xff]
        %v2025 = vld [vmem:[%s465 + $0x10] sm:$0xff]
        %v2026 = vld [vmem:[%s465 + $0x18] sm:$0xff]
        %v2027 = vld [vmem:[%s465 + $0x20] sm:$0xff]
        %v2028 = vld [vmem:[%s465 + $0x28] sm:$0xff]
        %v2029 = vld [vmem:[%s465 + $0x30] sm:$0xff]
        %v2030 = vld [vmem:[%s465 + $0x38] sm:$0xff]
        %v2031 = vld [vmem:[%s465 + $0x40] sm:$0xff]
        %v2032 = vld [vmem:[%s465 + $0x48] sm:$0xff]
        %v2033 = vld [vmem:[%s465 + $0x50] sm:$0xff]
        %v2034 = vld [vmem:[%s465 + $0x58] sm:$0xff]
        %v2035 = vld [vmem:[%s465 + $0x60] sm:$0xff]
        %v2036 = vld [vmem:[%s465 + $0x68] sm:$0xff]
        %v2037 = vld [vmem:[%s465 + $0x70] sm:$0xff]
        %v2038 = vld [vmem:[%s465 + $0x78] sm:$0xff]
        %v2039 = vld [vmem:[%s465 + $0x80] sm:$0xff]
        %v2040 = vld [vmem:[%s465 + $0x88] sm:$0xff]
        %v2041 = vld [vmem:[%s465 + $0x90] sm:$0xff]
        %v2042 = vld [vmem:[%s465 + $0x98] sm:$0xff]
        %v2043 = vld [vmem:[%s465 + $0xa0] sm:$0xff]
        %v2044 = vld [vmem:[%s465 + $0xa8] sm:$0xff]
        %v2045 = vld [vmem:[%s465 + $0xb0] sm:$0xff]
        %v2046 = vld [vmem:[%s465 + $0xb8] sm:$0xff]
        %v2047 = vld [vmem:[%s465 + $0xc0] sm:$0xff]
        %v2048 = vld [vmem:[%s465 + $0xc8] sm:$0xff]
        %v2049 = vld [vmem:[%s465 + $0xd0] sm:$0xff]
        %v2050 = vld [vmem:[%s465 + $0xd8] sm:$0xff]
        %v2051 = vld [vmem:[%s465 + $0xe0] sm:$0xff]
        %v2052 = vld [vmem:[%s465 + $0xe8] sm:$0xff]
        %v2053 = vld [vmem:[%s465 + $0xf0] sm:$0xff]
        %v2054 = vld [vmem:[%s465 + $0xf8] sm:$0xff]
        %v2055 = vld [vmem:[%s465 + $0x100] sm:$0xff]
        %v2056 = vld [vmem:[%s465 + $0x108] sm:$0xff]
        %v2057 = vld [vmem:[%s465 + $0x110] sm:$0xff]
        %v2058 = vld [vmem:[%s465 + $0x118] sm:$0xff]
        %v2059 = vld [vmem:[%s465 + $0x120] sm:$0xff]
        %v2060 = vld [vmem:[%s465 + $0x128] sm:$0xff]
        %v2061 = vld [vmem:[%s465 + $0x130] sm:$0xff]
        %v2062 = vld [vmem:[%s465 + $0x138] sm:$0xff]
        %v2063 = vld [vmem:[%s465 + $0x140] sm:$0xff]
        %v2064 = vld [vmem:[%s465 + $0x148] sm:$0xff]
        %v2065 = vld [vmem:[%s465 + $0x150] sm:$0xff]
        %v2066 = vld [vmem:[%s465 + $0x158] sm:$0xff]
        %v2067 = vld [vmem:[%s465 + $0x160] sm:$0xff]
        %v2068 = vld [vmem:[%s465 + $0x168] sm:$0xff]
        %v2069 = vld [vmem:[%s465 + $0x170] sm:$0xff]
        %v2070 = vld [vmem:[%s465 + $0x178] sm:$0xff]
        %v2071 = vld [vmem:[%s465 + $0x180] sm:$0xff]
        %v2072 = vld [vmem:[%s465 + $0x188] sm:$0xff]
        %v2073 = vld [vmem:[%s465 + $0x190] sm:$0xff]
        %v2074 = vld [vmem:[%s465 + $0x198] sm:$0xff]
        %v2075 = vld [vmem:[%s465 + $0x1a0] sm:$0xff]
        %v2076 = vld [vmem:[%s465 + $0x1a8] sm:$0xff]
        %v2077 = vld [vmem:[%s465 + $0x1b0] sm:$0xff]
        %v2078 = vld [vmem:[%s465 + $0x1b8] sm:$0xff]
        %v2079 = vld [vmem:[%s465 + $0x1c0] sm:$0xff]
        %v2080 = vld [vmem:[%s465 + $0x1c8] sm:$0xff]
        %v2081 = vld [vmem:[%s465 + $0x1d0] sm:$0xff]
        %v2082 = vld [vmem:[%s465 + $0x1d8] sm:$0xff]
        %v2083 = vld [vmem:[%s465 + $0x1e0] sm:$0xff]
        %v2084 = vld [vmem:[%s465 + $0x1e8] sm:$0xff]
        %v2085 = vld [vmem:[%s465 + $0x1f0] sm:$0xff]
        %v2086 = vld [vmem:[%s465 + $0x1f8] sm:$0xff]
        %v2087 = vld [vmem:[%s465 + $0x200] sm:$0xff]
        %v2088 = vld [vmem:[%s465 + $0x208] sm:$0xff]
        %v2089 = vld [vmem:[%s465 + $0x210] sm:$0xff]
        %v2090 = vld [vmem:[%s465 + $0x218] sm:$0xff]
        %v2091 = vld [vmem:[%s465 + $0x220] sm:$0xff]
        %v2092 = vld [vmem:[%s465 + $0x228] sm:$0xff]
        %v2093 = vld [vmem:[%s465 + $0x230] sm:$0xff]
        %v2094 = vld [vmem:[%s465 + $0x238] sm:$0xff]
        %v2095 = vld [vmem:[%s465 + $0x240] sm:$0xff]
        %v2096 = vld [vmem:[%s465 + $0x248] sm:$0xff]
        %v2097 = vld [vmem:[%s465 + $0x250] sm:$0xff]
        %v2098 = vld [vmem:[%s465 + $0x258] sm:$0xff]
        %v2099 = vld [vmem:[%s465 + $0x260] sm:$0xff]
        %v2100 = vld [vmem:[%s465 + $0x268] sm:$0xff]
        %v2101 = vld [vmem:[%s465 + $0x270] sm:$0xff]
        %v2102 = vld [vmem:[%s465 + $0x278] sm:$0xff]
        %v2103 = vld [vmem:[%s465 + $0x280] sm:$0xff]
        %v2104 = vld [vmem:[%s465 + $0x288] sm:$0xff]
        %v2105 = vld [vmem:[%s465 + $0x290] sm:$0xff]
        %v2106 = vld [vmem:[%s465 + $0x298] sm:$0xff]
        %v2107 = vld [vmem:[%s465 + $0x2a0] sm:$0xff]
        %v2108 = vld [vmem:[%s465 + $0x2a8] sm:$0xff]
        %v2109 = vld [vmem:[%s465 + $0x2b0] sm:$0xff]
        %v2110 = vld [vmem:[%s465 + $0x2b8] sm:$0xff]
        %v2111 = vld [vmem:[%s465 + $0x2c0] sm:$0xff]
        %v2112 = vld [vmem:[%s465 + $0x2c8] sm:$0xff]
        %v2113 = vld [vmem:[%s465 + $0x2d0] sm:$0xff]
        %v2114 = vld [vmem:[%s465 + $0x2d8] sm:$0xff]
        %v2115 = vld [vmem:[%s465 + $0x2e0] sm:$0xff]
        %v2116 = vld [vmem:[%s465 + $0x2e8] sm:$0xff]
        %v2117 = vld [vmem:[%s465 + $0x2f0] sm:$0xff]
        %v2118 = vld [vmem:[%s465 + $0x2f8] sm:$0xff]
        %v2119 = vld [vmem:[%s465 + $0x300] sm:$0xff]
        %v2120 = vld [vmem:[%s465 + $0x308] sm:$0xff]
        %v2121 = vld [vmem:[%s465 + $0x310] sm:$0xff]
        %v2122 = vld [vmem:[%s465 + $0x318] sm:$0xff]
        %v2123 = vld [vmem:[%s465 + $0x320] sm:$0xff]
        %v2124 = vld [vmem:[%s465 + $0x328] sm:$0xff]
        %v2125 = vld [vmem:[%s465 + $0x330] sm:$0xff]
        %v2126 = vld [vmem:[%s465 + $0x338] sm:$0xff]
        %v2127 = vld [vmem:[%s465 + $0x340] sm:$0xff]
        %v2128 = vld [vmem:[%s465 + $0x348] sm:$0xff]
        %v2129 = vld [vmem:[%s465 + $0x350] sm:$0xff]
        %v2130 = vld [vmem:[%s465 + $0x358] sm:$0xff]
        %v2131 = vld [vmem:[%s465 + $0x360] sm:$0xff]
        %v2132 = vld [vmem:[%s465 + $0x368] sm:$0xff]
        %v2133 = vld [vmem:[%s465 + $0x370] sm:$0xff]
        %v2134 = vld [vmem:[%s465 + $0x378] sm:$0xff]
        %v2135 = vld [vmem:[%s465 + $0x380] sm:$0xff]
        %v2136 = vld [vmem:[%s465 + $0x388] sm:$0xff]
        %v2137 = vld [vmem:[%s465 + $0x390] sm:$0xff]
        %v2138 = vld [vmem:[%s465 + $0x398] sm:$0xff]
        %v2139 = vld [vmem:[%s465 + $0x3a0] sm:$0xff]
        %v2140 = vld [vmem:[%s465 + $0x3a8] sm:$0xff]
        %v2141 = vld [vmem:[%s465 + $0x3b0] sm:$0xff]
        %v2142 = vld [vmem:[%s465 + $0x3b8] sm:$0xff]
        %v2143 = vld [vmem:[%s465 + $0x3c0] sm:$0xff]
        %v2144 = vld [vmem:[%s465 + $0x3c8] sm:$0xff]
        %v2145 = vld [vmem:[%s465 + $0x3d0] sm:$0xff]
        %v2146 = vld [vmem:[%s465 + $0x3d8] sm:$0xff]
        %v2147 = vld [vmem:[%s465 + $0x3e0] sm:$0xff]
        %v2148 = vld [vmem:[%s465 + $0x3e8] sm:$0xff]
        %v2149 = vld [vmem:[%s465 + $0x3f0] sm:$0xff]
        %v2150 = vld [vmem:[%s465 + $0x3f8] sm:$0xff]
        %v2279 = vunpack.c.l.b16 %v2023
        %v2280 = vunpack.c.h.b16 %v2023
        %v2281 = vunpack.c.l.b16 %v2024
        %v2282 = vunpack.c.h.b16 %v2024
        %v2283 = vunpack.c.l.b16 %v2025
        %v2284 = vunpack.c.h.b16 %v2025
        %v2285 = vunpack.c.l.b16 %v2026
        %v2286 = vunpack.c.h.b16 %v2026
        %v2287 = vunpack.c.l.b16 %v2027
        %v2288 = vunpack.c.h.b16 %v2027
        %v2289 = vunpack.c.l.b16 %v2028
        %v2290 = vunpack.c.h.b16 %v2028
        %v2291 = vunpack.c.l.b16 %v2029
        %v2292 = vunpack.c.h.b16 %v2029
        %v2293 = vunpack.c.l.b16 %v2030
        %v2294 = vunpack.c.h.b16 %v2030
        %v2295 = vunpack.c.l.b16 %v2031
        %v2296 = vunpack.c.h.b16 %v2031
        %v2297 = vunpack.c.l.b16 %v2032
        %v2298 = vunpack.c.h.b16 %v2032
        %v2299 = vunpack.c.l.b16 %v2033
        %v2300 = vunpack.c.h.b16 %v2033
        %v2301 = vunpack.c.l.b16 %v2034
        %v2302 = vunpack.c.h.b16 %v2034
        %v2303 = vunpack.c.l.b16 %v2035
        %v2304 = vunpack.c.h.b16 %v2035
        %v2305 = vunpack.c.l.b16 %v2036
        %v2306 = vunpack.c.h.b16 %v2036
        %v2307 = vunpack.c.l.b16 %v2037
        %v2308 = vunpack.c.h.b16 %v2037
        %v2309 = vunpack.c.l.b16 %v2038
        %v2310 = vunpack.c.h.b16 %v2038
        %v2311 = vunpack.c.l.b16 %v2039
        %v2312 = vunpack.c.h.b16 %v2039
        %v2313 = vunpack.c.l.b16 %v2040
        %v2314 = vunpack.c.h.b16 %v2040
        %v2315 = vunpack.c.l.b16 %v2041
        %v2316 = vunpack.c.h.b16 %v2041
        %v2317 = vunpack.c.l.b16 %v2042
        %v2318 = vunpack.c.h.b16 %v2042
        %v2319 = vunpack.c.l.b16 %v2043
        %v2320 = vunpack.c.h.b16 %v2043
        %v2321 = vunpack.c.l.b16 %v2044
        %v2322 = vunpack.c.h.b16 %v2044
        %v2323 = vunpack.c.l.b16 %v2045
        %v2324 = vunpack.c.h.b16 %v2045
        %v2325 = vunpack.c.l.b16 %v2046
        %v2326 = vunpack.c.h.b16 %v2046
        %v2327 = vunpack.c.l.b16 %v2047
        %v2328 = vunpack.c.h.b16 %v2047
        %v2329 = vunpack.c.l.b16 %v2048
        %v2330 = vunpack.c.h.b16 %v2048
        %v2331 = vunpack.c.l.b16 %v2049
        %v2332 = vunpack.c.h.b16 %v2049
        %v2333 = vunpack.c.l.b16 %v2050
        %v2334 = vunpack.c.h.b16 %v2050
        %v2335 = vunpack.c.l.b16 %v2051
        %v2336 = vunpack.c.h.b16 %v2051
        %v2337 = vunpack.c.l.b16 %v2052
        %v2338 = vunpack.c.h.b16 %v2052
        %v2339 = vunpack.c.l.b16 %v2053
        %v2340 = vunpack.c.h.b16 %v2053
        %v2341 = vunpack.c.l.b16 %v2054
        %v2342 = vunpack.c.h.b16 %v2054
        %v2343 = vunpack.c.l.b16 %v2055
        %v2344 = vunpack.c.h.b16 %v2055
        %v2345 = vunpack.c.l.b16 %v2056
        %v2346 = vunpack.c.h.b16 %v2056
        %v2347 = vunpack.c.l.b16 %v2057
        %v2348 = vunpack.c.h.b16 %v2057
        %v2349 = vunpack.c.l.b16 %v2058
        %v2350 = vunpack.c.h.b16 %v2058
        %v2351 = vunpack.c.l.b16 %v2059
        %v2352 = vunpack.c.h.b16 %v2059
        %v2353 = vunpack.c.l.b16 %v2060
        %v2354 = vunpack.c.h.b16 %v2060
        %v2355 = vunpack.c.l.b16 %v2061
        %v2356 = vunpack.c.h.b16 %v2061
        %v2357 = vunpack.c.l.b16 %v2062
        %v2358 = vunpack.c.h.b16 %v2062
        %v2359 = vunpack.c.l.b16 %v2063
        %v2360 = vunpack.c.h.b16 %v2063
        %v2361 = vunpack.c.l.b16 %v2064
        %v2362 = vunpack.c.h.b16 %v2064
        %v2363 = vunpack.c.l.b16 %v2065
        %v2364 = vunpack.c.h.b16 %v2065
        %v2365 = vunpack.c.l.b16 %v2066
        %v2366 = vunpack.c.h.b16 %v2066
        %v2367 = vunpack.c.l.b16 %v2067
        %v2368 = vunpack.c.h.b16 %v2067
        %v2369 = vunpack.c.l.b16 %v2068
        %v2370 = vunpack.c.h.b16 %v2068
        %v2371 = vunpack.c.l.b16 %v2069
        %v2372 = vunpack.c.h.b16 %v2069
        %v2373 = vunpack.c.l.b16 %v2070
        %v2374 = vunpack.c.h.b16 %v2070
        %v2375 = vunpack.c.l.b16 %v2071
        %v2376 = vunpack.c.h.b16 %v2071
        %v2377 = vunpack.c.l.b16 %v2072
        %v2378 = vunpack.c.h.b16 %v2072
        %v2379 = vunpack.c.l.b16 %v2073
        %v2380 = vunpack.c.h.b16 %v2073
        %v2381 = vunpack.c.l.b16 %v2074
        %v2382 = vunpack.c.h.b16 %v2074
        %v2383 = vunpack.c.l.b16 %v2075
        %v2384 = vunpack.c.h.b16 %v2075
        %v2385 = vunpack.c.l.b16 %v2076
        %v2386 = vunpack.c.h.b16 %v2076
        %v2387 = vunpack.c.l.b16 %v2077
        %v2388 = vunpack.c.h.b16 %v2077
        %v2389 = vunpack.c.l.b16 %v2078
        %v2390 = vunpack.c.h.b16 %v2078
        %v2391 = vunpack.c.l.b16 %v2079
        %v2392 = vunpack.c.h.b16 %v2079
        %v2393 = vunpack.c.l.b16 %v2080
        %v2394 = vunpack.c.h.b16 %v2080
        %v2395 = vunpack.c.l.b16 %v2081
        %v2396 = vunpack.c.h.b16 %v2081
        %v2397 = vunpack.c.l.b16 %v2082
        %v2398 = vunpack.c.h.b16 %v2082
        %v2399 = vunpack.c.l.b16 %v2083
        %v2400 = vunpack.c.h.b16 %v2083
        %v2401 = vunpack.c.l.b16 %v2084
        %v2402 = vunpack.c.h.b16 %v2084
        %v2403 = vunpack.c.l.b16 %v2085
        %v2404 = vunpack.c.h.b16 %v2085
        %v2405 = vunpack.c.l.b16 %v2086
        %v2406 = vunpack.c.h.b16 %v2086
        %v2407 = vunpack.c.l.b16 %v2087
        %v2408 = vunpack.c.h.b16 %v2087
        %v2409 = vunpack.c.l.b16 %v2088
        %v2410 = vunpack.c.h.b16 %v2088
        %v2411 = vunpack.c.l.b16 %v2089
        %v2412 = vunpack.c.h.b16 %v2089
        %v2413 = vunpack.c.l.b16 %v2090
        %v2414 = vunpack.c.h.b16 %v2090
        %v2415 = vunpack.c.l.b16 %v2091
        %v2416 = vunpack.c.h.b16 %v2091
        %v2417 = vunpack.c.l.b16 %v2092
        %v2418 = vunpack.c.h.b16 %v2092
        %v2419 = vunpack.c.l.b16 %v2093
        %v2420 = vunpack.c.h.b16 %v2093
        %v2421 = vunpack.c.l.b16 %v2094
        %v2422 = vunpack.c.h.b16 %v2094
        %v2423 = vunpack.c.l.b16 %v2095
        %v2424 = vunpack.c.h.b16 %v2095
        %v2425 = vunpack.c.l.b16 %v2096
        %v2426 = vunpack.c.h.b16 %v2096
        %v2427 = vunpack.c.l.b16 %v2097
        %v2428 = vunpack.c.h.b16 %v2097
        %v2429 = vunpack.c.l.b16 %v2098
        %v2430 = vunpack.c.h.b16 %v2098
        %v2431 = vunpack.c.l.b16 %v2099
        %v2432 = vunpack.c.h.b16 %v2099
        %v2433 = vunpack.c.l.b16 %v2100
        %v2434 = vunpack.c.h.b16 %v2100
        %v2435 = vunpack.c.l.b16 %v2101
        %v2436 = vunpack.c.h.b16 %v2101
        %v2437 = vunpack.c.l.b16 %v2102
        %v2438 = vunpack.c.h.b16 %v2102
        %v2439 = vunpack.c.l.b16 %v2103
        %v2440 = vunpack.c.h.b16 %v2103
        %v2441 = vunpack.c.l.b16 %v2104
        %v2442 = vunpack.c.h.b16 %v2104
        %v2443 = vunpack.c.l.b16 %v2105
        %v2444 = vunpack.c.h.b16 %v2105
        %v2445 = vunpack.c.l.b16 %v2106
        %v2446 = vunpack.c.h.b16 %v2106
        %v2447 = vunpack.c.l.b16 %v2107
        %v2448 = vunpack.c.h.b16 %v2107
        %v2449 = vunpack.c.l.b16 %v2108
        %v2450 = vunpack.c.h.b16 %v2108
        %v2451 = vunpack.c.l.b16 %v2109
        %v2452 = vunpack.c.h.b16 %v2109
        %v2453 = vunpack.c.l.b16 %v2110
        %v2454 = vunpack.c.h.b16 %v2110
        %v2455 = vunpack.c.l.b16 %v2111
        %v2456 = vunpack.c.h.b16 %v2111
        %v2457 = vunpack.c.l.b16 %v2112
        %v2458 = vunpack.c.h.b16 %v2112
        %v2459 = vunpack.c.l.b16 %v2113
        %v2460 = vunpack.c.h.b16 %v2113
        %v2461 = vunpack.c.l.b16 %v2114
        %v2462 = vunpack.c.h.b16 %v2114
        %v2463 = vunpack.c.l.b16 %v2115
        %v2464 = vunpack.c.h.b16 %v2115
        %v2465 = vunpack.c.l.b16 %v2116
        %v2466 = vunpack.c.h.b16 %v2116
        %v2467 = vunpack.c.l.b16 %v2117
        %v2468 = vunpack.c.h.b16 %v2117
        %v2469 = vunpack.c.l.b16 %v2118
        %v2470 = vunpack.c.h.b16 %v2118
        %v2471 = vunpack.c.l.b16 %v2119
        %v2472 = vunpack.c.h.b16 %v2119
        %v2473 = vunpack.c.l.b16 %v2120
        %v2474 = vunpack.c.h.b16 %v2120
        %v2475 = vunpack.c.l.b16 %v2121
        %v2476 = vunpack.c.h.b16 %v2121
        %v2477 = vunpack.c.l.b16 %v2122
        %v2478 = vunpack.c.h.b16 %v2122
        %v2479 = vunpack.c.l.b16 %v2123
        %v2480 = vunpack.c.h.b16 %v2123
        %v2481 = vunpack.c.l.b16 %v2124
        %v2482 = vunpack.c.h.b16 %v2124
        %v2483 = vunpack.c.l.b16 %v2125
        %v2484 = vunpack.c.h.b16 %v2125
        %v2485 = vunpack.c.l.b16 %v2126
        %v2486 = vunpack.c.h.b16 %v2126
        %v2487 = vunpack.c.l.b16 %v2127
        %v2488 = vunpack.c.h.b16 %v2127
        %v2489 = vunpack.c.l.b16 %v2128
        %v2490 = vunpack.c.h.b16 %v2128
        %v2491 = vunpack.c.l.b16 %v2129
        %v2492 = vunpack.c.h.b16 %v2129
        %v2493 = vunpack.c.l.b16 %v2130
        %v2494 = vunpack.c.h.b16 %v2130
        %v2495 = vunpack.c.l.b16 %v2131
        %v2496 = vunpack.c.h.b16 %v2131
        %v2497 = vunpack.c.l.b16 %v2132
        %v2498 = vunpack.c.h.b16 %v2132
        %v2499 = vunpack.c.l.b16 %v2133
        %v2500 = vunpack.c.h.b16 %v2133
        %v2501 = vunpack.c.l.b16 %v2134
        %v2502 = vunpack.c.h.b16 %v2134
        %v2503 = vunpack.c.l.b16 %v2135
        %v2504 = vunpack.c.h.b16 %v2135
        %v2505 = vunpack.c.l.b16 %v2136
        %v2506 = vunpack.c.h.b16 %v2136
        %v2507 = vunpack.c.l.b16 %v2137
        %v2508 = vunpack.c.h.b16 %v2137
        %v2509 = vunpack.c.l.b16 %v2138
        %v2510 = vunpack.c.h.b16 %v2138
        %v2511 = vunpack.c.l.b16 %v2139
        %v2512 = vunpack.c.h.b16 %v2139
        %v2513 = vunpack.c.l.b16 %v2140
        %v2514 = vunpack.c.h.b16 %v2140
        %v2515 = vunpack.c.l.b16 %v2141
        %v2516 = vunpack.c.h.b16 %v2141
        %v2517 = vunpack.c.l.b16 %v2142
        %v2518 = vunpack.c.h.b16 %v2142
        %v2519 = vunpack.c.l.b16 %v2143
        %v2520 = vunpack.c.h.b16 %v2143
        %v2521 = vunpack.c.l.b16 %v2144
        %v2522 = vunpack.c.h.b16 %v2144
        %v2523 = vunpack.c.l.b16 %v2145
        %v2524 = vunpack.c.h.b16 %v2145
        %v2525 = vunpack.c.l.b16 %v2146
        %v2526 = vunpack.c.h.b16 %v2146
        %v2527 = vunpack.c.l.b16 %v2147
        %v2528 = vunpack.c.h.b16 %v2147
        %v2529 = vunpack.c.l.b16 %v2148
        %v2530 = vunpack.c.h.b16 %v2148
        %v2531 = vunpack.c.l.b16 %v2149
        %v2532 = vunpack.c.h.b16 %v2149
        %v2533 = vunpack.c.l.b16 %v2150
        %v2534 = vunpack.c.h.b16 %v2150
        %v2535 = vpack.c.b16 %v2287, %v2279
        %v2536 = vpack.c.b16 %v2288, %v2280
        %v2537 = vpack.c.b16 %v2289, %v2281
        %v2538 = vpack.c.b16 %v2290, %v2282
        %v2539 = vpack.c.b16 %v2291, %v2283
        %v2540 = vpack.c.b16 %v2292, %v2284
        %v2541 = vpack.c.b16 %v2293, %v2285
        %v2542 = vpack.c.b16 %v2294, %v2286
        %v2543 = vpack.c.b16 %v2303, %v2295
        %v2544 = vpack.c.b16 %v2304, %v2296
        %v2545 = vpack.c.b16 %v2305, %v2297
        %v2546 = vpack.c.b16 %v2306, %v2298
        %v2547 = vpack.c.b16 %v2307, %v2299
        %v2548 = vpack.c.b16 %v2308, %v2300
        %v2549 = vpack.c.b16 %v2309, %v2301
        %v2550 = vpack.c.b16 %v2310, %v2302
        %v2551 = vpack.c.b16 %v2319, %v2311
        %v2552 = vpack.c.b16 %v2320, %v2312
        %v2553 = vpack.c.b16 %v2321, %v2313
        %v2554 = vpack.c.b16 %v2322, %v2314
        %v2555 = vpack.c.b16 %v2323, %v2315
        %v2556 = vpack.c.b16 %v2324, %v2316
        %v2557 = vpack.c.b16 %v2325, %v2317
        %v2558 = vpack.c.b16 %v2326, %v2318
        %v2559 = vpack.c.b16 %v2335, %v2327
        %v2560 = vpack.c.b16 %v2336, %v2328
        %v2561 = vpack.c.b16 %v2337, %v2329
        %v2562 = vpack.c.b16 %v2338, %v2330
        %v2563 = vpack.c.b16 %v2339, %v2331
        %v2564 = vpack.c.b16 %v2340, %v2332
        %v2565 = vpack.c.b16 %v2341, %v2333
        %v2566 = vpack.c.b16 %v2342, %v2334
        %v2567 = vpack.c.b16 %v2351, %v2343
        %v2568 = vpack.c.b16 %v2352, %v2344
        %v2569 = vpack.c.b16 %v2353, %v2345
        %v2570 = vpack.c.b16 %v2354, %v2346
        %v2571 = vpack.c.b16 %v2355, %v2347
        %v2572 = vpack.c.b16 %v2356, %v2348
        %v2573 = vpack.c.b16 %v2357, %v2349
        %v2574 = vpack.c.b16 %v2358, %v2350
        %v2575 = vpack.c.b16 %v2367, %v2359
        %v2576 = vpack.c.b16 %v2368, %v2360
        %v2577 = vpack.c.b16 %v2369, %v2361
        %v2578 = vpack.c.b16 %v2370, %v2362
        %v2579 = vpack.c.b16 %v2371, %v2363
        %v2580 = vpack.c.b16 %v2372, %v2364
        %v2581 = vpack.c.b16 %v2373, %v2365
        %v2582 = vpack.c.b16 %v2374, %v2366
        %v2583 = vpack.c.b16 %v2383, %v2375
        %v2584 = vpack.c.b16 %v2384, %v2376
        %v2585 = vpack.c.b16 %v2385, %v2377
        %v2586 = vpack.c.b16 %v2386, %v2378
        %v2587 = vpack.c.b16 %v2387, %v2379
        %v2588 = vpack.c.b16 %v2388, %v2380
        %v2589 = vpack.c.b16 %v2389, %v2381
        %v2590 = vpack.c.b16 %v2390, %v2382
        %v2591 = vpack.c.b16 %v2399, %v2391
        %v2592 = vpack.c.b16 %v2400, %v2392
        %v2593 = vpack.c.b16 %v2401, %v2393
        %v2594 = vpack.c.b16 %v2402, %v2394
        %v2595 = vpack.c.b16 %v2403, %v2395
        %v2596 = vpack.c.b16 %v2404, %v2396
        %v2597 = vpack.c.b16 %v2405, %v2397
        %v2598 = vpack.c.b16 %v2406, %v2398
        %v2599 = vpack.c.b16 %v2415, %v2407
        %v2600 = vpack.c.b16 %v2416, %v2408
        %v2601 = vpack.c.b16 %v2417, %v2409
        %v2602 = vpack.c.b16 %v2418, %v2410
        %v2603 = vpack.c.b16 %v2419, %v2411
        %v2604 = vpack.c.b16 %v2420, %v2412
        %v2605 = vpack.c.b16 %v2421, %v2413
        %v2606 = vpack.c.b16 %v2422, %v2414
        %v2607 = vpack.c.b16 %v2431, %v2423
        %v2608 = vpack.c.b16 %v2432, %v2424
        %v2609 = vpack.c.b16 %v2433, %v2425
        %v2610 = vpack.c.b16 %v2434, %v2426
        %v2611 = vpack.c.b16 %v2435, %v2427
        %v2612 = vpack.c.b16 %v2436, %v2428
        %v2613 = vpack.c.b16 %v2437, %v2429
        %v2614 = vpack.c.b16 %v2438, %v2430
        %v2615 = vpack.c.b16 %v2447, %v2439
        %v2616 = vpack.c.b16 %v2448, %v2440
        %v2617 = vpack.c.b16 %v2449, %v2441
        %v2618 = vpack.c.b16 %v2450, %v2442
        %v2619 = vpack.c.b16 %v2451, %v2443
        %v2620 = vpack.c.b16 %v2452, %v2444
        %v2621 = vpack.c.b16 %v2453, %v2445
        %v2622 = vpack.c.b16 %v2454, %v2446
        %v2623 = vpack.c.b16 %v2463, %v2455
        %v2624 = vpack.c.b16 %v2464, %v2456
        %v2625 = vpack.c.b16 %v2465, %v2457
        %v2626 = vpack.c.b16 %v2466, %v2458
        %v2627 = vpack.c.b16 %v2467, %v2459
        %v2628 = vpack.c.b16 %v2468, %v2460
        %v2629 = vpack.c.b16 %v2469, %v2461
        %v2630 = vpack.c.b16 %v2470, %v2462
        %v2631 = vpack.c.b16 %v2479, %v2471
        %v2632 = vpack.c.b16 %v2480, %v2472
        %v2633 = vpack.c.b16 %v2481, %v2473
        %v2634 = vpack.c.b16 %v2482, %v2474
        %v2635 = vpack.c.b16 %v2483, %v2475
        %v2636 = vpack.c.b16 %v2484, %v2476
        %v2637 = vpack.c.b16 %v2485, %v2477
        %v2638 = vpack.c.b16 %v2486, %v2478
        %v2639 = vpack.c.b16 %v2495, %v2487
        %v2640 = vpack.c.b16 %v2496, %v2488
        %v2641 = vpack.c.b16 %v2497, %v2489
        %v2642 = vpack.c.b16 %v2498, %v2490
        %v2643 = vpack.c.b16 %v2499, %v2491
        %v2644 = vpack.c.b16 %v2500, %v2492
        %v2645 = vpack.c.b16 %v2501, %v2493
        %v2646 = vpack.c.b16 %v2502, %v2494
        %v2647 = vpack.c.b16 %v2511, %v2503
        %v2648 = vpack.c.b16 %v2512, %v2504
        %v2649 = vpack.c.b16 %v2513, %v2505
        %v2650 = vpack.c.b16 %v2514, %v2506
        %v2651 = vpack.c.b16 %v2515, %v2507
        %v2652 = vpack.c.b16 %v2516, %v2508
        %v2653 = vpack.c.b16 %v2517, %v2509
        %v2654 = vpack.c.b16 %v2518, %v2510
        %v2655 = vpack.c.b16 %v2527, %v2519
        %v2656 = vpack.c.b16 %v2528, %v2520
        %v2657 = vpack.c.b16 %v2529, %v2521
        %v2658 = vpack.c.b16 %v2530, %v2522
        %v2659 = vpack.c.b16 %v2531, %v2523
        %v2660 = vpack.c.b16 %v2532, %v2524
        %v2661 = vpack.c.b16 %v2533, %v2525
        %v2662 = vpack.c.b16 %v2534, %v2526
        %2791 = vmatprep.subr.bf16.mxu0 %v2592
        %2792 = vmatpush1.bf16.msra.mxu0 %v2591
        %2793 = vmatprep.subr.bf16.mxu0 %v2584
        %2794 = vmatpush1.bf16.msra.mxu0 %v2583
        %2795 = vmatprep.subr.bf16.mxu0 %v2576
        %2796 = vmatpush1.bf16.msra.mxu0 %v2575
        %2797 = vmatprep.subr.bf16.mxu0 %v2568
        %2798 = vmatpush1.bf16.msra.mxu0 %v2567
        %2799 = vmatprep.subr.bf16.mxu0 %v2560
        %2800 = vmatpush1.bf16.msra.mxu0 %v2559
        %2801 = vmatprep.subr.bf16.mxu0 %v2552
        %2802 = vmatpush1.bf16.msra.mxu0 %v2551
        %2803 = vmatprep.subr.bf16.mxu0 %v2544
        %2804 = vmatpush1.bf16.msra.mxu0 %v2543
        %2805 = vmatprep.subr.bf16.mxu0 %v2536
        %2806 = vmatpush1.bf16.msra.mxu0 %v2535
        %2807 = vmatprep.subr.bf16.mxu0 %v2656
        %2808 = vmatpush2.bf16.msra.mxu0 %v2655
        %2809 = vmatprep.subr.bf16.mxu0 %v2648
        %2810 = vmatpush2.bf16.msra.mxu0 %v2647
        %2811 = vmatprep.subr.bf16.mxu0 %v2640
        %2812 = vmatpush2.bf16.msra.mxu0 %v2639
        %2813 = vmatprep.subr.bf16.mxu0 %v2632
        %2814 = vmatpush2.bf16.msra.mxu0 %v2631
        %2815 = vmatprep.subr.bf16.mxu0 %v2624
        %2816 = vmatpush2.bf16.msra.mxu0 %v2623
        %2817 = vmatprep.subr.bf16.mxu0 %v2616
        %2818 = vmatpush2.bf16.msra.mxu0 %v2615
        %2819 = vmatprep.subr.bf16.mxu0 %v2608
        %2820 = vmatpush2.bf16.msra.mxu0 %v2607
        %2821 = vmatprep.subr.bf16.mxu0 %v2600
        %2822 = vmatpush2.bf16.msra.mxu0 %v2599
        %2823 = vmatprep.mubr.bf16.mxu0 %v2022
        %2824 = vmatmul.mubr.bf16.gmra.mxu0 %v2021
        %v2825 = vpop.f32.mrf.mxu0
        %v2826 = vadd.f32 0.0, %v2825
        %v2827 = vpop.f32.mrf.mxu0
        %v2828 = vadd.f32 0.0, %v2827
        %v2829 = vpop.f32.mrf.mxu0
        %v2830 = vadd.f32 0.0, %v2829
        %v2831 = vpop.f32.mrf.mxu0
        %v2832 = vadd.f32 0.0, %v2831
        %2833 = vdwg.mxu0
        %2834 = vmatprep.subr.bf16.mxu0 %v2594
        %2835 = vmatpush1.bf16.msra.mxu0 %v2593
        %2836 = vmatprep.subr.bf16.mxu0 %v2586
        %2837 = vmatpush1.bf16.msra.mxu0 %v2585
        %2838 = vmatprep.subr.bf16.mxu0 %v2578
        %2839 = vmatpush1.bf16.msra.mxu0 %v2577
        %2840 = vmatprep.subr.bf16.mxu0 %v2570
        %2841 = vmatpush1.bf16.msra.mxu0 %v2569
        %2842 = vmatprep.subr.bf16.mxu0 %v2562
        %2843 = vmatpush1.bf16.msra.mxu0 %v2561
        %2844 = vmatprep.subr.bf16.mxu0 %v2554
        %2845 = vmatpush1.bf16.msra.mxu0 %v2553
        %2846 = vmatprep.subr.bf16.mxu0 %v2546
        %2847 = vmatpush1.bf16.msra.mxu0 %v2545
        %2848 = vmatprep.subr.bf16.mxu0 %v2538
        %2849 = vmatpush1.bf16.msra.mxu0 %v2537
        %2850 = vmatprep.subr.bf16.mxu0 %v2658
        %2851 = vmatpush2.bf16.msra.mxu0 %v2657
        %2852 = vmatprep.subr.bf16.mxu0 %v2650
        %2853 = vmatpush2.bf16.msra.mxu0 %v2649
        %2854 = vmatprep.subr.bf16.mxu0 %v2642
        %2855 = vmatpush2.bf16.msra.mxu0 %v2641
        %2856 = vmatprep.subr.bf16.mxu0 %v2634
        %2857 = vmatpush2.bf16.msra.mxu0 %v2633
        %2858 = vmatprep.subr.bf16.mxu0 %v2626
        %2859 = vmatpush2.bf16.msra.mxu0 %v2625
        %2860 = vmatprep.subr.bf16.mxu0 %v2618
        %2861 = vmatpush2.bf16.msra.mxu0 %v2617
        %2862 = vmatprep.subr.bf16.mxu0 %v2610
        %2863 = vmatpush2.bf16.msra.mxu0 %v2609
        %2864 = vmatprep.subr.bf16.mxu0 %v2602
        %2865 = vmatpush2.bf16.msra.mxu0 %v2601
        %2866 = vmatprep.mubr.bf16.mxu0 %v2022
        %2867 = vmatmul.mubr.bf16.gmra.mxu0 %v2021
        %v2868 = vpop.f32.mrf.mxu0
        %v2869 = vadd.f32 0.0, %v2868
        %v2870 = vpop.f32.mrf.mxu0
        %v2871 = vadd.f32 0.0, %v2870
        %v2872 = vpop.f32.mrf.mxu0
        %v2873 = vadd.f32 0.0, %v2872
        %v2874 = vpop.f32.mrf.mxu0
        %v2875 = vadd.f32 0.0, %v2874
        %2876 = vdwg.mxu0
        %2877 = vmatprep.subr.bf16.mxu0 %v2596
        %2878 = vmatpush1.bf16.msra.mxu0 %v2595
        %2879 = vmatprep.subr.bf16.mxu0 %v2588
        %2880 = vmatpush1.bf16.msra.mxu0 %v2587
        %2881 = vmatprep.subr.bf16.mxu0 %v2580
        %2882 = vmatpush1.bf16.msra.mxu0 %v2579
        %2883 = vmatprep.subr.bf16.mxu0 %v2572
        %2884 = vmatpush1.bf16.msra.mxu0 %v2571
        %2885 = vmatprep.subr.bf16.mxu0 %v2564
        %2886 = vmatpush1.bf16.msra.mxu0 %v2563
        %2887 = vmatprep.subr.bf16.mxu0 %v2556
        %2888 = vmatpush1.bf16.msra.mxu0 %v2555
        %2889 = vmatprep.subr.bf16.mxu0 %v2548
        %2890 = vmatpush1.bf16.msra.mxu0 %v2547
        %2891 = vmatprep.subr.bf16.mxu0 %v2540
        %2892 = vmatpush1.bf16.msra.mxu0 %v2539
        %2893 = vmatprep.subr.bf16.mxu0 %v2660
        %2894 = vmatpush2.bf16.msra.mxu0 %v2659
        %2895 = vmatprep.subr.bf16.mxu0 %v2652
        %2896 = vmatpush2.bf16.msra.mxu0 %v2651
        %2897 = vmatprep.subr.bf16.mxu0 %v2644
        %2898 = vmatpush2.bf16.msra.mxu0 %v2643
        %2899 = vmatprep.subr.bf16.mxu0 %v2636
        %2900 = vmatpush2.bf16.msra.mxu0 %v2635
        %2901 = vmatprep.subr.bf16.mxu0 %v2628
        %2902 = vmatpush2.bf16.msra.mxu0 %v2627
        %2903 = vmatprep.subr.bf16.mxu0 %v2620
        %2904 = vmatpush2.bf16.msra.mxu0 %v2619
        %2905 = vmatprep.subr.bf16.mxu0 %v2612
        %2906 = vmatpush2.bf16.msra.mxu0 %v2611
        %2907 = vmatprep.subr.bf16.mxu0 %v2604
        %2908 = vmatpush2.bf16.msra.mxu0 %v2603
        %2909 = vmatprep.mubr.bf16.mxu0 %v2022
        %2910 = vmatmul.mubr.bf16.gmra.mxu0 %v2021
        %v2911 = vpop.f32.mrf.mxu0
        %v2912 = vadd.f32 0.0, %v2911
        %v2913 = vpop.f32.mrf.mxu0
        %v2914 = vadd.f32 0.0, %v2913
        %v2915 = vpop.f32.mrf.mxu0
        %v2916 = vadd.f32 0.0, %v2915
        %v2917 = vpop.f32.mrf.mxu0
        %v2918 = vadd.f32 0.0, %v2917
        %2919 = vdwg.mxu0
        %2920 = vmatprep.subr.bf16.mxu0 %v2598
        %2921 = vmatpush1.bf16.msra.mxu0 %v2597
        %2922 = vmatprep.subr.bf16.mxu0 %v2590
        %2923 = vmatpush1.bf16.msra.mxu0 %v2589
        %2924 = vmatprep.subr.bf16.mxu0 %v2582
        %2925 = vmatpush1.bf16.msra.mxu0 %v2581
        %2926 = vmatprep.subr.bf16.mxu0 %v2574
        %2927 = vmatpush1.bf16.msra.mxu0 %v2573
        %2928 = vmatprep.subr.bf16.mxu0 %v2566
        %2929 = vmatpush1.bf16.msra.mxu0 %v2565
        %2930 = vmatprep.subr.bf16.mxu0 %v2558
        %2931 = vmatpush1.bf16.msra.mxu0 %v2557
        %2932 = vmatprep.subr.bf16.mxu0 %v2550
        %2933 = vmatpush1.bf16.msra.mxu0 %v2549
        %2934 = vmatprep.subr.bf16.mxu0 %v2542
        %2935 = vmatpush1.bf16.msra.mxu0 %v2541
        %2936 = vmatprep.subr.bf16.mxu0 %v2662
        %2937 = vmatpush2.bf16.msra.mxu0 %v2661
        %2938 = vmatprep.subr.bf16.mxu0 %v2654
        %2939 = vmatpush2.bf16.msra.mxu0 %v2653
        %2940 = vmatprep.subr.bf16.mxu0 %v2646
        %2941 = vmatpush2.bf16.msra.mxu0 %v2645
        %2942 = vmatprep.subr.bf16.mxu0 %v2638
        %2943 = vmatpush2.bf16.msra.mxu0 %v2637
        %2944 = vmatprep.subr.bf16.mxu0 %v2630
        %2945 = vmatpush2.bf16.msra.mxu0 %v2629
        %2946 = vmatprep.subr.bf16.mxu0 %v2622
        %2947 = vmatpush2.bf16.msra.mxu0 %v2621
        %2948 = vmatprep.subr.bf16.mxu0 %v2614
        %2949 = vmatpush2.bf16.msra.mxu0 %v2613
        %2950 = vmatprep.subr.bf16.mxu0 %v2606
        %2951 = vmatpush2.bf16.msra.mxu0 %v2605
        %2952 = vmatprep.mubr.bf16.mxu0 %v2022
        %2953 = vmatmul.mubr.bf16.gmra.mxu0 %v2021
        %v2954 = vpop.f32.mrf.mxu0
        %v2955 = vadd.f32 0.0, %v2954
        %v2956 = vpop.f32.mrf.mxu0
        %v2957 = vadd.f32 0.0, %v2956
        %v2958 = vpop.f32.mrf.mxu0
        %v2959 = vadd.f32 0.0, %v2958
        %v2960 = vpop.f32.mrf.mxu0
        %v2961 = vadd.f32 0.0, %v2960
        %2962 = vdwg.mxu0
        %v2963 = vxor.u32 %v2826, 2147483648
        %v2964 = vxor.u32 %v2828, 2147483648
        %v2965 = vxor.u32 %v2869, 2147483648
        %v2966 = vxor.u32 %v2871, 2147483648
        %v2967 = vxor.u32 %v2830, 2147483648
        %v2968 = vxor.u32 %v2832, 2147483648
        %v2969 = vxor.u32 %v2873, 2147483648
        %v2970 = vxor.u32 %v2875, 2147483648
        %v2971 = vmul.f32 %v2963, 1.442695
        %v2972 = vpow.pop %v2971
        %v2973 = vmul.f32 %v2964, 1.442695
        %v2974 = vpow.pop %v2973
        %v2975 = vmul.f32 %v2965, 1.442695
        %v2976 = vpow.pop %v2975
        %v2977 = vmul.f32 %v2966, 1.442695
        %v2978 = vpow.pop %v2977
        %v2979 = vmul.f32 %v2967, 1.442695
        %v2980 = vpow.pop %v2979
        %v2981 = vmul.f32 %v2968, 1.442695
        %v2982 = vpow.pop %v2981
        %v2983 = vmul.f32 %v2969, 1.442695
        %v2984 = vpow.pop %v2983
        %v2985 = vmul.f32 %v2970, 1.442695
        %v2986 = vpow.pop %v2985
        %v2987 = vadd.f32 %v2972, 1.0
        %v2988 = vadd.f32 %v2974, 1.0
        %v2989 = vadd.f32 %v2976, 1.0
        %v2990 = vadd.f32 %v2978, 1.0
        %v2991 = vadd.f32 %v2980, 1.0
        %v2992 = vadd.f32 %v2982, 1.0
        %v2993 = vadd.f32 %v2984, 1.0
        %v2994 = vadd.f32 %v2986, 1.0
        %v2995 = vrcp.pop %v2987
        %v2996 = vmul.f32 1.0, %v2995
        %v2997 = vrcp.pop %v2988
        %v2998 = vmul.f32 1.0, %v2997
        %v2999 = vrcp.pop %v2989
        %v3000 = vmul.f32 1.0, %v2999
        %v3001 = vrcp.pop %v2990
        %v3002 = vmul.f32 1.0, %v3001
        %v3003 = vrcp.pop %v2991
        %v3004 = vmul.f32 1.0, %v3003
        %v3005 = vrcp.pop %v2992
        %v3006 = vmul.f32 1.0, %v3005
        %v3007 = vrcp.pop %v2993
        %v3008 = vmul.f32 1.0, %v3007
        %v3009 = vrcp.pop %v2994
        %v3010 = vmul.f32 1.0, %v3009
        %v3011 = vmul.f32 %v2826, %v2996
        %v3012 = vmul.f32 %v2828, %v2998
        %v3013 = vmul.f32 %v2869, %v3000
        %v3014 = vmul.f32 %v2871, %v3002
        %v3015 = vmul.f32 %v2830, %v3004
        %v3016 = vmul.f32 %v2832, %v3006
        %v3017 = vmul.f32 %v2873, %v3008
        %v3018 = vmul.f32 %v2875, %v3010
        %v3019 = vmul.f32 %v3011, %v2912
        %v3020 = vmul.f32 %v3012, %v2914
        %v3021 = vmul.f32 %v3013, %v2955
        %v3022 = vmul.f32 %v3014, %v2957
        %v3023 = vmul.f32 %v3015, %v2916
        %v3024 = vmul.f32 %v3016, %v2918
        %v3025 = vmul.f32 %v3017, %v2959
        %v3026 = vmul.f32 %v3018, %v2961
        %v3027 = vpack.c.bf16 %v3023, %v3019
        %v3028 = vpack.c.bf16 %v3024, %v3020
        %v3029 = vpack.c.bf16 %v3025, %v3021
        %v3030 = vpack.c.bf16 %v3026, %v3022
        %v3031 = vld [vmem:[%s474] sm:$0xff]
        %v3032 = vld [vmem:[%s474 + $0x8] sm:$0xff]
        %v3033 = vld [vmem:[%s474 + $0x10] sm:$0xff]
        %v3034 = vld [vmem:[%s474 + $0x18] sm:$0xff]
        %v3035 = vld [vmem:[%s474 + $0x20] sm:$0xff]
        %v3036 = vld [vmem:[%s474 + $0x28] sm:$0xff]
        %v3037 = vld [vmem:[%s474 + $0x30] sm:$0xff]
        %v3038 = vld [vmem:[%s474 + $0x38] sm:$0xff]
        %v3039 = vld [vmem:[%s474 + $0x40] sm:$0xff]
        %v3040 = vld [vmem:[%s474 + $0x48] sm:$0xff]
        %v3041 = vld [vmem:[%s474 + $0x50] sm:$0xff]
        %v3042 = vld [vmem:[%s474 + $0x58] sm:$0xff]
        %v3043 = vld [vmem:[%s474 + $0x60] sm:$0xff]
        %v3044 = vld [vmem:[%s474 + $0x68] sm:$0xff]
        %v3045 = vld [vmem:[%s474 + $0x70] sm:$0xff]
        %v3046 = vld [vmem:[%s474 + $0x78] sm:$0xff]
        %v3047 = vld [vmem:[%s474 + $0x80] sm:$0xff]
        %v3048 = vld [vmem:[%s474 + $0x88] sm:$0xff]
        %v3049 = vld [vmem:[%s474 + $0x90] sm:$0xff]
        %v3050 = vld [vmem:[%s474 + $0x98] sm:$0xff]
        %v3051 = vld [vmem:[%s474 + $0xa0] sm:$0xff]
        %v3052 = vld [vmem:[%s474 + $0xa8] sm:$0xff]
        %v3053 = vld [vmem:[%s474 + $0xb0] sm:$0xff]
        %v3054 = vld [vmem:[%s474 + $0xb8] sm:$0xff]
        %v3055 = vld [vmem:[%s474 + $0xc0] sm:$0xff]
        %v3056 = vld [vmem:[%s474 + $0xc8] sm:$0xff]
        %v3057 = vld [vmem:[%s474 + $0xd0] sm:$0xff]
        %v3058 = vld [vmem:[%s474 + $0xd8] sm:$0xff]
        %v3059 = vld [vmem:[%s474 + $0xe0] sm:$0xff]
        %v3060 = vld [vmem:[%s474 + $0xe8] sm:$0xff]
        %v3061 = vld [vmem:[%s474 + $0xf0] sm:$0xff]
        %v3062 = vld [vmem:[%s474 + $0xf8] sm:$0xff]
        %v3063 = vld [vmem:[%s474 + $0x100] sm:$0xff]
        %v3064 = vld [vmem:[%s474 + $0x108] sm:$0xff]
        %v3065 = vld [vmem:[%s474 + $0x110] sm:$0xff]
        %v3066 = vld [vmem:[%s474 + $0x118] sm:$0xff]
        %v3067 = vld [vmem:[%s474 + $0x120] sm:$0xff]
        %v3068 = vld [vmem:[%s474 + $0x128] sm:$0xff]
        %v3069 = vld [vmem:[%s474 + $0x130] sm:$0xff]
        %v3070 = vld [vmem:[%s474 + $0x138] sm:$0xff]
        %v3071 = vld [vmem:[%s474 + $0x140] sm:$0xff]
        %v3072 = vld [vmem:[%s474 + $0x148] sm:$0xff]
        %v3073 = vld [vmem:[%s474 + $0x150] sm:$0xff]
        %v3074 = vld [vmem:[%s474 + $0x158] sm:$0xff]
        %v3075 = vld [vmem:[%s474 + $0x160] sm:$0xff]
        %v3076 = vld [vmem:[%s474 + $0x168] sm:$0xff]
        %v3077 = vld [vmem:[%s474 + $0x170] sm:$0xff]
        %v3078 = vld [vmem:[%s474 + $0x178] sm:$0xff]
        %v3079 = vld [vmem:[%s474 + $0x180] sm:$0xff]
        %v3080 = vld [vmem:[%s474 + $0x188] sm:$0xff]
        %v3081 = vld [vmem:[%s474 + $0x190] sm:$0xff]
        %v3082 = vld [vmem:[%s474 + $0x198] sm:$0xff]
        %v3083 = vld [vmem:[%s474 + $0x1a0] sm:$0xff]
        %v3084 = vld [vmem:[%s474 + $0x1a8] sm:$0xff]
        %v3085 = vld [vmem:[%s474 + $0x1b0] sm:$0xff]
        %v3086 = vld [vmem:[%s474 + $0x1b8] sm:$0xff]
        %v3087 = vld [vmem:[%s474 + $0x1c0] sm:$0xff]
        %v3088 = vld [vmem:[%s474 + $0x1c8] sm:$0xff]
        %v3089 = vld [vmem:[%s474 + $0x1d0] sm:$0xff]
        %v3090 = vld [vmem:[%s474 + $0x1d8] sm:$0xff]
        %v3091 = vld [vmem:[%s474 + $0x1e0] sm:$0xff]
        %v3092 = vld [vmem:[%s474 + $0x1e8] sm:$0xff]
        %v3093 = vld [vmem:[%s474 + $0x1f0] sm:$0xff]
        %v3094 = vld [vmem:[%s474 + $0x1f8] sm:$0xff]
        %v3159 = vunpack.c.l.b16 %v3031
        %v3160 = vunpack.c.h.b16 %v3031
        %v3161 = vunpack.c.l.b16 %v3032
        %v3162 = vunpack.c.h.b16 %v3032
        %v3163 = vunpack.c.l.b16 %v3033
        %v3164 = vunpack.c.h.b16 %v3033
        %v3165 = vunpack.c.l.b16 %v3034
        %v3166 = vunpack.c.h.b16 %v3034
        %v3167 = vunpack.c.l.b16 %v3035
        %v3168 = vunpack.c.h.b16 %v3035
        %v3169 = vunpack.c.l.b16 %v3036
        %v3170 = vunpack.c.h.b16 %v3036
        %v3171 = vunpack.c.l.b16 %v3037
        %v3172 = vunpack.c.h.b16 %v3037
        %v3173 = vunpack.c.l.b16 %v3038
        %v3174 = vunpack.c.h.b16 %v3038
        %v3175 = vunpack.c.l.b16 %v3039
        %v3176 = vunpack.c.h.b16 %v3039
        %v3177 = vunpack.c.l.b16 %v3040
        %v3178 = vunpack.c.h.b16 %v3040
        %v3179 = vunpack.c.l.b16 %v3041
        %v3180 = vunpack.c.h.b16 %v3041
        %v3181 = vunpack.c.l.b16 %v3042
        %v3182 = vunpack.c.h.b16 %v3042
        %v3183 = vunpack.c.l.b16 %v3043
        %v3184 = vunpack.c.h.b16 %v3043
        %v3185 = vunpack.c.l.b16 %v3044
        %v3186 = vunpack.c.h.b16 %v3044
        %v3187 = vunpack.c.l.b16 %v3045
        %v3188 = vunpack.c.h.b16 %v3045
        %v3189 = vunpack.c.l.b16 %v3046
        %v3190 = vunpack.c.h.b16 %v3046
        %v3191 = vunpack.c.l.b16 %v3047
        %v3192 = vunpack.c.h.b16 %v3047
        %v3193 = vunpack.c.l.b16 %v3048
        %v3194 = vunpack.c.h.b16 %v3048
        %v3195 = vunpack.c.l.b16 %v3049
        %v3196 = vunpack.c.h.b16 %v3049
        %v3197 = vunpack.c.l.b16 %v3050
        %v3198 = vunpack.c.h.b16 %v3050
        %v3199 = vunpack.c.l.b16 %v3051
        %v3200 = vunpack.c.h.b16 %v3051
        %v3201 = vunpack.c.l.b16 %v3052
        %v3202 = vunpack.c.h.b16 %v3052
        %v3203 = vunpack.c.l.b16 %v3053
        %v3204 = vunpack.c.h.b16 %v3053
        %v3205 = vunpack.c.l.b16 %v3054
        %v3206 = vunpack.c.h.b16 %v3054
        %v3207 = vunpack.c.l.b16 %v3055
        %v3208 = vunpack.c.h.b16 %v3055
        %v3209 = vunpack.c.l.b16 %v3056
        %v3210 = vunpack.c.h.b16 %v3056
        %v3211 = vunpack.c.l.b16 %v3057
        %v3212 = vunpack.c.h.b16 %v3057
        %v3213 = vunpack.c.l.b16 %v3058
        %v3214 = vunpack.c.h.b16 %v3058
        %v3215 = vunpack.c.l.b16 %v3059
        %v3216 = vunpack.c.h.b16 %v3059
        %v3217 = vunpack.c.l.b16 %v3060
        %v3218 = vunpack.c.h.b16 %v3060
        %v3219 = vunpack.c.l.b16 %v3061
        %v3220 = vunpack.c.h.b16 %v3061
        %v3221 = vunpack.c.l.b16 %v3062
        %v3222 = vunpack.c.h.b16 %v3062
        %v3223 = vunpack.c.l.b16 %v3063
        %v3224 = vunpack.c.h.b16 %v3063
        %v3225 = vunpack.c.l.b16 %v3064
        %v3226 = vunpack.c.h.b16 %v3064
        %v3227 = vunpack.c.l.b16 %v3065
        %v3228 = vunpack.c.h.b16 %v3065
        %v3229 = vunpack.c.l.b16 %v3066
        %v3230 = vunpack.c.h.b16 %v3066
        %v3231 = vunpack.c.l.b16 %v3067
        %v3232 = vunpack.c.h.b16 %v3067
        %v3233 = vunpack.c.l.b16 %v3068
        %v3234 = vunpack.c.h.b16 %v3068
        %v3235 = vunpack.c.l.b16 %v3069
        %v3236 = vunpack.c.h.b16 %v3069
        %v3237 = vunpack.c.l.b16 %v3070
        %v3238 = vunpack.c.h.b16 %v3070
        %v3239 = vunpack.c.l.b16 %v3071
        %v3240 = vunpack.c.h.b16 %v3071
        %v3241 = vunpack.c.l.b16 %v3072
        %v3242 = vunpack.c.h.b16 %v3072
        %v3243 = vunpack.c.l.b16 %v3073
        %v3244 = vunpack.c.h.b16 %v3073
        %v3245 = vunpack.c.l.b16 %v3074
        %v3246 = vunpack.c.h.b16 %v3074
        %v3247 = vunpack.c.l.b16 %v3075
        %v3248 = vunpack.c.h.b16 %v3075
        %v3249 = vunpack.c.l.b16 %v3076
        %v3250 = vunpack.c.h.b16 %v3076
        %v3251 = vunpack.c.l.b16 %v3077
        %v3252 = vunpack.c.h.b16 %v3077
        %v3253 = vunpack.c.l.b16 %v3078
        %v3254 = vunpack.c.h.b16 %v3078
        %v3255 = vunpack.c.l.b16 %v3079
        %v3256 = vunpack.c.h.b16 %v3079
        %v3257 = vunpack.c.l.b16 %v3080
        %v3258 = vunpack.c.h.b16 %v3080
        %v3259 = vunpack.c.l.b16 %v3081
        %v3260 = vunpack.c.h.b16 %v3081
        %v3261 = vunpack.c.l.b16 %v3082
        %v3262 = vunpack.c.h.b16 %v3082
        %v3263 = vunpack.c.l.b16 %v3083
        %v3264 = vunpack.c.h.b16 %v3083
        %v3265 = vunpack.c.l.b16 %v3084
        %v3266 = vunpack.c.h.b16 %v3084
        %v3267 = vunpack.c.l.b16 %v3085
        %v3268 = vunpack.c.h.b16 %v3085
        %v3269 = vunpack.c.l.b16 %v3086
        %v3270 = vunpack.c.h.b16 %v3086
        %v3271 = vunpack.c.l.b16 %v3087
        %v3272 = vunpack.c.h.b16 %v3087
        %v3273 = vunpack.c.l.b16 %v3088
        %v3274 = vunpack.c.h.b16 %v3088
        %v3275 = vunpack.c.l.b16 %v3089
        %v3276 = vunpack.c.h.b16 %v3089
        %v3277 = vunpack.c.l.b16 %v3090
        %v3278 = vunpack.c.h.b16 %v3090
        %v3279 = vunpack.c.l.b16 %v3091
        %v3280 = vunpack.c.h.b16 %v3091
        %v3281 = vunpack.c.l.b16 %v3092
        %v3282 = vunpack.c.h.b16 %v3092
        %v3283 = vunpack.c.l.b16 %v3093
        %v3284 = vunpack.c.h.b16 %v3093
        %v3285 = vunpack.c.l.b16 %v3094
        %v3286 = vunpack.c.h.b16 %v3094
        %v3287 = vpack.c.b16 %v3161, %v3159
        %v3288 = vpack.c.b16 %v3162, %v3160
        %v3289 = vpack.c.b16 %v3165, %v3163
        %v3290 = vpack.c.b16 %v3166, %v3164
        %v3291 = vpack.c.b16 %v3169, %v3167
        %v3292 = vpack.c.b16 %v3170, %v3168
        %v3293 = vpack.c.b16 %v3173, %v3171
        %v3294 = vpack.c.b16 %v3174, %v3172
        %v3295 = vpack.c.b16 %v3177, %v3175
        %v3296 = vpack.c.b16 %v3178, %v3176
        %v3297 = vpack.c.b16 %v3181, %v3179
        %v3298 = vpack.c.b16 %v3182, %v3180
        %v3299 = vpack.c.b16 %v3185, %v3183
        %v3300 = vpack.c.b16 %v3186, %v3184
        %v3301 = vpack.c.b16 %v3189, %v3187
        %v3302 = vpack.c.b16 %v3190, %v3188
        %v3303 = vpack.c.b16 %v3193, %v3191
        %v3304 = vpack.c.b16 %v3194, %v3192
        %v3305 = vpack.c.b16 %v3197, %v3195
        %v3306 = vpack.c.b16 %v3198, %v3196
        %v3307 = vpack.c.b16 %v3201, %v3199
        %v3308 = vpack.c.b16 %v3202, %v3200
        %v3309 = vpack.c.b16 %v3205, %v3203
        %v3310 = vpack.c.b16 %v3206, %v3204
        %v3311 = vpack.c.b16 %v3209, %v3207
        %v3312 = vpack.c.b16 %v3210, %v3208
        %v3313 = vpack.c.b16 %v3213, %v3211
        %v3314 = vpack.c.b16 %v3214, %v3212
        %v3315 = vpack.c.b16 %v3217, %v3215
        %v3316 = vpack.c.b16 %v3218, %v3216
        %v3317 = vpack.c.b16 %v3221, %v3219
        %v3318 = vpack.c.b16 %v3222, %v3220
        %v3319 = vpack.c.b16 %v3225, %v3223
        %v3320 = vpack.c.b16 %v3226, %v3224
        %v3321 = vpack.c.b16 %v3229, %v3227
        %v3322 = vpack.c.b16 %v3230, %v3228
        %v3323 = vpack.c.b16 %v3233, %v3231
        %v3324 = vpack.c.b16 %v3234, %v3232
        %v3325 = vpack.c.b16 %v3237, %v3235
        %v3326 = vpack.c.b16 %v3238, %v3236
        %v3327 = vpack.c.b16 %v3241, %v3239
        %v3328 = vpack.c.b16 %v3242, %v3240
        %v3329 = vpack.c.b16 %v3245, %v3243
        %v3330 = vpack.c.b16 %v3246, %v3244
        %v3331 = vpack.c.b16 %v3249, %v3247
        %v3332 = vpack.c.b16 %v3250, %v3248
        %v3333 = vpack.c.b16 %v3253, %v3251
        %v3334 = vpack.c.b16 %v3254, %v3252
        %v3335 = vpack.c.b16 %v3257, %v3255
        %v3336 = vpack.c.b16 %v3258, %v3256
        %v3337 = vpack.c.b16 %v3261, %v3259
        %v3338 = vpack.c.b16 %v3262, %v3260
        %v3339 = vpack.c.b16 %v3265, %v3263
        %v3340 = vpack.c.b16 %v3266, %v3264
        %v3341 = vpack.c.b16 %v3269, %v3267
        %v3342 = vpack.c.b16 %v3270, %v3268
        %v3343 = vpack.c.b16 %v3273, %v3271
        %v3344 = vpack.c.b16 %v3274, %v3272
        %v3345 = vpack.c.b16 %v3277, %v3275
        %v3346 = vpack.c.b16 %v3278, %v3276
        %v3347 = vpack.c.b16 %v3281, %v3279
        %v3348 = vpack.c.b16 %v3282, %v3280
        %v3349 = vpack.c.b16 %v3285, %v3283
        %v3350 = vpack.c.b16 %v3286, %v3284
        %3415 = vmatprep.subr.bf16.mxu0 %v3302
        %3416 = vmatpush1.bf16.msra.mxu0 %v3301
        %3417 = vmatprep.subr.bf16.mxu0 %v3300
        %3418 = vmatpush1.bf16.msra.mxu0 %v3299
        %3419 = vmatprep.subr.bf16.mxu0 %v3298
        %3420 = vmatpush1.bf16.msra.mxu0 %v3297
        %3421 = vmatprep.subr.bf16.mxu0 %v3296
        %3422 = vmatpush1.bf16.msra.mxu0 %v3295
        %3423 = vmatprep.subr.bf16.mxu0 %v3294
        %3424 = vmatpush1.bf16.msra.mxu0 %v3293
        %3425 = vmatprep.subr.bf16.mxu0 %v3292
        %3426 = vmatpush1.bf16.msra.mxu0 %v3291
        %3427 = vmatprep.subr.bf16.mxu0 %v3290
        %3428 = vmatpush1.bf16.msra.mxu0 %v3289
        %3429 = vmatprep.subr.bf16.mxu0 %v3288
        %3430 = vmatpush1.bf16.msra.mxu0 %v3287
        %3431 = vmatprep.subr.bf16.mxu0 %v3318
        %3432 = vmatpush2.bf16.msra.mxu0 %v3317
        %3433 = vmatprep.subr.bf16.mxu0 %v3316
        %3434 = vmatpush2.bf16.msra.mxu0 %v3315
        %3435 = vmatprep.subr.bf16.mxu0 %v3314
        %3436 = vmatpush2.bf16.msra.mxu0 %v3313
        %3437 = vmatprep.subr.bf16.mxu0 %v3312
        %3438 = vmatpush2.bf16.msra.mxu0 %v3311
        %3439 = vmatprep.subr.bf16.mxu0 %v3310
        %3440 = vmatpush2.bf16.msra.mxu0 %v3309
        %3441 = vmatprep.subr.bf16.mxu0 %v3308
        %3442 = vmatpush2.bf16.msra.mxu0 %v3307
        %3443 = vmatprep.subr.bf16.mxu0 %v3306
        %3444 = vmatpush2.bf16.msra.mxu0 %v3305
        %3445 = vmatprep.subr.bf16.mxu0 %v3304
        %3446 = vmatpush2.bf16.msra.mxu0 %v3303
        %3447 = vmatprep.mubr.bf16.mxu0 %v3028
        %3448 = vmatmul.mubr.bf16.gmra.mxu0 %v3027
        %v3449 = vpop.f32.mrf.mxu0
        %v3450 = vadd.f32 0.0, %v3449
        %v3451 = vpop.f32.mrf.mxu0
        %v3452 = vadd.f32 0.0, %v3451
        %v3453 = vpop.f32.mrf.mxu0
        %v3454 = vadd.f32 0.0, %v3453
        %v3455 = vpop.f32.mrf.mxu0
        %v3456 = vadd.f32 0.0, %v3455
        %3457 = vdwg.mxu0
        %3458 = vmatprep.subr.bf16.mxu0 %v3334
        %3459 = vmatpush1.bf16.msra.mxu0 %v3333
        %3460 = vmatprep.subr.bf16.mxu0 %v3332
        %3461 = vmatpush1.bf16.msra.mxu0 %v3331
        %3462 = vmatprep.subr.bf16.mxu0 %v3330
        %3463 = vmatpush1.bf16.msra.mxu0 %v3329
        %3464 = vmatprep.subr.bf16.mxu0 %v3328
        %3465 = vmatpush1.bf16.msra.mxu0 %v3327
        %3466 = vmatprep.subr.bf16.mxu0 %v3326
        %3467 = vmatpush1.bf16.msra.mxu0 %v3325
        %3468 = vmatprep.subr.bf16.mxu0 %v3324
        %3469 = vmatpush1.bf16.msra.mxu0 %v3323
        %3470 = vmatprep.subr.bf16.mxu0 %v3322
        %3471 = vmatpush1.bf16.msra.mxu0 %v3321
        %3472 = vmatprep.subr.bf16.mxu0 %v3320
        %3473 = vmatpush1.bf16.msra.mxu0 %v3319
        %3474 = vmatprep.subr.bf16.mxu0 %v3350
        %3475 = vmatpush2.bf16.msra.mxu0 %v3349
        %3476 = vmatprep.subr.bf16.mxu0 %v3348
        %3477 = vmatpush2.bf16.msra.mxu0 %v3347
        %3478 = vmatprep.subr.bf16.mxu0 %v3346
        %3479 = vmatpush2.bf16.msra.mxu0 %v3345
        %3480 = vmatprep.subr.bf16.mxu0 %v3344
        %3481 = vmatpush2.bf16.msra.mxu0 %v3343
        %3482 = vmatprep.subr.bf16.mxu0 %v3342
        %3483 = vmatpush2.bf16.msra.mxu0 %v3341
        %3484 = vmatprep.subr.bf16.mxu0 %v3340
        %3485 = vmatpush2.bf16.msra.mxu0 %v3339
        %3486 = vmatprep.subr.bf16.mxu0 %v3338
        %3487 = vmatpush2.bf16.msra.mxu0 %v3337
        %3488 = vmatprep.subr.bf16.mxu0 %v3336
        %3489 = vmatpush2.bf16.msra.mxu0 %v3335
        %3490 = vmatprep.mubr.bf16.mxu0 %v3030
        %3491 = vmatmul.mubr.bf16.gmra.mxu0 %v3029
        %v3492 = vpop.f32.mrf.mxu0
        %v3493 = vadd.f32 %v3450, %v3492
        %v3494 = vpop.f32.mrf.mxu0
        %v3495 = vadd.f32 %v3452, %v3494
        %v3496 = vpop.f32.mrf.mxu0
        %v3497 = vadd.f32 %v3454, %v3496
        %v3498 = vpop.f32.mrf.mxu0
        %v3499 = vadd.f32 %v3456, %v3498
        %3500 = vdwg.mxu0
        %v3501 = vadd.f32 %v1981, %v3493
        %v3502 = vadd.f32 %v1982, %v3495
        %v3503 = vadd.f32 %v1983, %v3497
        %v3504 = vadd.f32 %v1984, %v3499
        %3505 = vst [vmem:[#allocation13] sm:$0xff] %v3501
        %3506 = vst [vmem:[#allocation13 + $0x8] sm:$0xff] %v3502
        %3507 = vst [vmem:[#allocation13 + $0x10] sm:$0xff] %v3503
        %3508 = vst [vmem:[#allocation13 + $0x18] sm:$0xff] %v3504
        // Predicated region
        $region85: #{part1_forward.1} parent=55 // pred_check
          %p3509 = pneg %p265
        $region86: #{part1_forward.1} parent=55 // pred_check_branch
          %3511 = sbr.rel (%p3509) target = $region88
        $region87: #{part1_forward.1} parent=55 // pred_region
          %s3513 = ssub.s32 512, 512
          %3514 = vsyncadd [#allocation4], %s3513
          %s3515 = sshll.u32 [#allocation13], 4
          %s3516 = int_to_ptr.vmem [resolvable:$true] %s3515
          %3521 = dma.vmem_to_hbm [thread:$0]  %s3516, 512, %s9, [#allocation4], 256, 256, 16
        $region88: #{part1_forward.1} parent=55 // pred_fallthru
          _
        // Predicated region
        $region89: #{part1_forward.1} parent=55 // pred_check
          %p3522 = pneg %p265
        $region90: #{part1_forward.1} parent=55 // pred_check_branch
          %3524 = sbr.rel (%p3522) target = $region92
        $region91: #{part1_forward.1} parent=55 // pred_region
          %3525 = dma.done [#allocation4], 512
        $region92: #{part1_forward.1} parent=55 // pred_fallthru
          _
      $region56: #{part1_forward.1} parent=5 // pred_fallthru
        _
      %p3526 = scmp.le.s32.totalorder 2, %s28
      // Predicated region
      $region93: #{part1_forward.1} parent=5 // pred_check
        %p3527 = pneg %p3526
      $region94: #{part1_forward.1} parent=5 // pred_check_branch
        %3529 = sbr.rel (%p3527) target = $region96
      $region95: #{part1_forward.1} parent=5 // pred_region
        %s3530 = ssub.s32 %s28, 2
      $region96: #{part1_forward.1} parent=5 // pred_fallthru
        _
    $region6: #{part1_forward.1} parent=1 // loop_footer
      %s32 = sadd.s32 1, %s28
    $region7: #{part1_forward.1} parent=1 // loop_footer_branch
      %27 = sbr.rel target = $region3
    $region8: #{part1_forward.1} parent=1 // loop_exit
      _
    %3531 = vsyncpa [#allocation3], 1
    %s3532 = scalar_lea.sflag [#allocation3], 1
    %3533 = vsyncpa %s3532, 1
    %3534 = vsyncpa [#allocation6], 1
    %s3535 = scalar_lea.sflag [#allocation6], 1
    %3536 = vsyncpa %s3535, 1
    %3537 = vsyncpa [#allocation9], 1
    %s3538 = scalar_lea.sflag [#allocation9], 1
    %3539 = vsyncpa %s3538, 1
    %3540 = vsyncpa [#allocation12], 1
    %s3541 = scalar_lea.sflag [#allocation12], 1
    %3542 = vsyncpa %s3541, 1
    %3543 = vsyncpa [#allocation4], 1
    %s3544 = scalar_lea.sflag [#allocation4], 1
    %3545 = vsyncpa %s3544, 1

</llo_original>
